<compile_context>
chip_gen: v7x
topology: tpu7x:2x2x1
jax: 0.10.0
libtpu: 0.0.40
codegen_flags: <defaults>
</compile_context>

<pallas_src>
import functools

import jax
import jax.numpy as jnp
import numpy as np
from jax.experimental import pallas as pl
from jax.experimental.pallas import tpu as pltpu


# -----------------------------------------------------------------------------
# Fused kernel: bn1+relu1 -> 1x1 conv -> (folded) bn2+relu2 -> 3x3 conv (pad=1)
# -----------------------------------------------------------------------------
def _dense_layer_kernel(x_ref, s1_ref, b1_ref, w1_ref, b2_ref, w2_ref,
                        o_ref, pbuf_ref, *, H, W, Cmid, G):
    HW = H * W
    PAD = W + 1

    # ---- stage 1: bn1 + relu1 + 1x1 conv (channel matmul) + bn2 + relu2 ------
    # x_ref: (Cin, HW), s1/b1: (Cin, 1), w1_ref: (Cmid, Cin) with bn2 scale folded in.
    h = jnp.maximum(x_ref[...] * s1_ref[...] + b1_ref[...], 0.0)        # (Cin, HW)
    y = jnp.dot(w1_ref[...], h, preferred_element_type=jnp.float32)     # (Cmid, HW)
    a = jnp.maximum(y + b2_ref[...], 0.0)                               # (Cmid, HW)

    # ---- stage 2: 3x3 conv (stride 1, pad 1) on the flattened activation -----
    # Write `a` into the middle of a flat VMEM buffer with W+1 zeros on each side;
    # a shift of (dh, dw) in image space becomes a lane offset dh*W + dw in flat space.
    pbuf_ref[:, :PAD] = jnp.zeros((Cmid, PAD), jnp.float32)
    pbuf_ref[:, PAD + HW:PAD + HW + PAD] = jnp.zeros((Cmid, PAD), jnp.float32)
    pbuf_ref[:, PAD:PAD + HW] = a

    # Lane masks that zero the row-wraparound reads of the horizontal taps.
    lane = jax.lax.broadcasted_iota(jnp.int32, (1, HW), 1)
    w_idx = lane % W
    mask_l = w_idx != 0          # outputs at w == 0 must ignore the dw = -1 tap
    mask_r = w_idx != (W - 1)    # outputs at w == W-1 must ignore the dw = +1 tap

    acc = jnp.zeros((G, HW), jnp.float32)
    for kh in range(3):
        for kw in range(3):
            off = PAD + (kh - 1) * W + (kw - 1)          # static lane offset
            patch = pbuf_ref[:, off:off + HW]            # (Cmid, HW), no retile
            if kw == 0:
                patch = jnp.where(mask_l, patch, 0.0)
            elif kw == 2:
                patch = jnp.where(mask_r, patch, 0.0)
            acc = acc + jnp.dot(w2_ref[kh * 3 + kw], patch,
                                preferred_element_type=jnp.float32)     # (G, HW)

    o_ref[...] = acc.astype(o_ref.dtype)                 # lane-dense, already NCHW


# -----------------------------------------------------------------------------
# Wrapper
# -----------------------------------------------------------------------------
def dense_layer_forward(x_nchw, params, *, eps=1e-5):
    N, Cin, H, W = x_nchw.shape
    Cmid = params["w1"].shape[0]          # bn_size * growth_rate
    G = params["w2"].shape[0]             # growth_rate
    HW = H * W
    PAD = W + 1

    # Fold BatchNorm (inference) into per-channel scale/shift.
    s1 = params["g1"] / jnp.sqrt(params["v1"] + eps)
    b1 = params["b1"] - params["m1"] * s1
    s2 = params["g2"] / jnp.sqrt(params["v2"] + eps)
    b2 = params["b2"] - params["m2"] * s2

    # 1x1 conv weight (Cmid, Cin, 1, 1) -> (Cmid, Cin); bn2 scale folded into rows.
    w1s = params["w1"].reshape(Cmid, Cin) * s2[:, None]
    # 3x3 conv weight (G, Cmid, 3, 3) -> (9, G, Cmid), taps major.
    w2m = jnp.transpose(params["w2"], (2, 3, 0, 1)).reshape(9, G, Cmid)

    # NCHW stays NCHW: only a free reshape (channels -> sublanes, pixels -> lanes).
    x3 = x_nchw.reshape(N, Cin, HW).astype(jnp.float32)

    out = pl.pallas_call(
        functools.partial(_dense_layer_kernel, H=H, W=W, Cmid=Cmid, G=G),
        out_shape=jax.ShapeDtypeStruct((N, G, HW), jnp.float32),
        grid=(N,),
        in_specs=[
            pl.BlockSpec((None, Cin, HW), lambda n: (n, 0, 0)),   # x (per image)
            pl.BlockSpec((Cin, 1), lambda n: (0, 0)),             # bn1 scale
            pl.BlockSpec((Cin, 1), lambda n: (0, 0)),             # bn1 shift
            pl.BlockSpec((Cmid, Cin), lambda n: (0, 0)),          # 1x1 weight (bn2-scaled)
            pl.BlockSpec((Cmid, 1), lambda n: (0, 0)),            # bn2 shift
            pl.BlockSpec((9, G, Cmid), lambda n: (0, 0, 0)),      # 3x3 weight taps
        ],
        out_specs=pl.BlockSpec((None, G, HW), lambda n: (n, 0, 0)),
        scratch_shapes=[pltpu.VMEM((Cmid, HW + 2 * PAD), jnp.float32)],
        compiler_params=pltpu.CompilerParams(
            dimension_semantics=("parallel",)),                   # megacore over batch
    )(x3, s1.reshape(Cin, 1), b1.reshape(Cin, 1), w1s,
      b2.reshape(Cmid, 1), w2m)

    # drop_rate = 0 (eval) -> dropout is identity. Output is already NCHW.
    return out.reshape(N, G, H, W)


# -----------------------------------------------------------------------------
# Pure-JAX reference (for correctness check)
# -----------------------------------------------------------------------------
def ref_forward(x_nchw, p, eps=1e-5):
    def bn(x, g, b, m, v):
        return ((x - m[None, :, None, None]) / jnp.sqrt(v[None, :, None, None] + eps)
                * g[None, :, None, None] + b[None, :, None, None])

    h = jax.nn.relu(bn(x_nchw, p["g1"], p["b1"], p["m1"], p["v1"]))
    h = jax.lax.conv_general_dilated(h, p["w1"], (1, 1), "VALID",
                                     dimension_numbers=("NCHW", "OIHW", "NCHW"))
    h = jax.nn.relu(bn(h, p["g2"], p["b2"], p["m2"], p["v2"]))
    h = jax.lax.conv_general_dilated(h, p["w2"], (1, 1), ((1, 1), (1, 1)),
                                     dimension_numbers=("NCHW", "OIHW", "NCHW"))
    return h


if __name__ == "__main__":
    # _DenseLayer(input_c=64, growth_rate=32, bn_size=4, drop_rate=0.0), eval mode.
    N, Cin, H, W = 2, 64, 16, 16
    growth_rate, bn_size = 32, 4
    Cmid = bn_size * growth_rate          # 128
    G = growth_rate                       # 32

    key = jax.random.PRNGKey(0)
    ks = jax.random.split(key, 11)
    params = {
        "g1": jax.random.uniform(ks[0], (Cin,), minval=0.5, maxval=1.5),
        "b1": jax.random.normal(ks[1], (Cin,)) * 0.1,
        "m1": jax.random.normal(ks[2], (Cin,)) * 0.1,
        "v1": jax.random.uniform(ks[3], (Cin,), minval=0.5, maxval=1.5),
        "w1": jax.random.normal(ks[4], (Cmid, Cin, 1, 1)) * (Cin ** -0.5),
        "g2": jax.random.uniform(ks[5], (Cmid,), minval=0.5, maxval=1.5),
        "b2": jax.random.normal(ks[6], (Cmid,)) * 0.1,
        "m2": jax.random.normal(ks[7], (Cmid,)) * 0.1,
        "v2": jax.random.uniform(ks[8], (Cmid,), minval=0.5, maxval=1.5),
        "w2": jax.random.normal(ks[9], (G, Cmid, 3, 3)) * ((Cmid * 9) ** -0.5),
    }
    x = jax.random.normal(ks[10], (N, Cin, H, W), dtype=jnp.float32)

    out = jax.block_until_ready(dense_layer_forward(x, params))
    ref = jax.block_until_ready(ref_forward(x, params))

    assert out.shape == (N, G, H, W), out.shape
    np.testing.assert_allclose(np.asarray(out), np.asarray(ref), rtol=5e-2, atol=5e-2)
    print("KERNEL_OK")
</pallas_src>

<mosaic_0001>
module attributes {stable_mosaic.version = 11 : i64} {
  func.func @_dense_layer_kernel(%arg0: i32, %arg1: memref<1x64x256xf32, #tpu.memory_space<vmem>>, %arg2: memref<64x1xf32, #tpu.memory_space<vmem>>, %arg3: memref<64x1xf32, #tpu.memory_space<vmem>>, %arg4: memref<128x64xf32, #tpu.memory_space<vmem>>, %arg5: memref<128x1xf32, #tpu.memory_space<vmem>>, %arg6: memref<9x32x128xf32, #tpu.memory_space<vmem>>, %arg7: memref<1x32x256xf32, #tpu.memory_space<vmem>>, %arg8: memref<128x290xf32, #tpu.memory_space<vmem>>) attributes {dimension_semantics = [#tpu.dimension_semantics<parallel>], iteration_bounds = array<i64: 2>, scalar_prefetch = 0 : i64, scratch_operands = 1 : i64, tpu.core_type = #tpu.core_type<tc>, window_params = [{transform_indices = @transform_0, window_bounds = array<i64: 1, 64, 256>}, {pipeline_mode = #tpu.pipeline_mode<synchronous>, transform_indices = @transform_1, window_bounds = array<i64: 64, 1>}, {pipeline_mode = #tpu.pipeline_mode<synchronous>, transform_indices = @transform_2, window_bounds = array<i64: 64, 1>}, {pipeline_mode = #tpu.pipeline_mode<synchronous>, transform_indices = @transform_3, window_bounds = array<i64: 128, 64>}, {pipeline_mode = #tpu.pipeline_mode<synchronous>, transform_indices = @transform_4, window_bounds = array<i64: 128, 1>}, {pipeline_mode = #tpu.pipeline_mode<synchronous>, transform_indices = @transform_5, window_bounds = array<i64: 9, 32, 128>}, {transform_indices = @transform_6, window_bounds = array<i64: 1, 32, 256>}]} {
    %c0 = arith.constant 0 : index
    %c0_0 = arith.constant 0 : index
    %c0_1 = arith.constant 0 : index
    %0 = vector.load %arg1[%c0, %c0_0, %c0_1] : memref<1x64x256xf32, #tpu.memory_space<vmem>>, vector<1x64x256xf32>
    %1 = vector.shape_cast %0 : vector<1x64x256xf32> to vector<64x256xf32>
    %c0_2 = arith.constant 0 : index
    %c0_3 = arith.constant 0 : index
    %2 = vector.load %arg2[%c0_2, %c0_3] : memref<64x1xf32, #tpu.memory_space<vmem>>, vector<64x1xf32>
    %3 = vector.broadcast %2 : vector<64x1xf32> to vector<64x256xf32>
    %4 = arith.mulf %1, %3 : vector<64x256xf32>
    %c0_4 = arith.constant 0 : index
    %c0_5 = arith.constant 0 : index
    %5 = vector.load %arg3[%c0_4, %c0_5] : memref<64x1xf32, #tpu.memory_space<vmem>>, vector<64x1xf32>
    %6 = vector.broadcast %5 : vector<64x1xf32> to vector<64x256xf32>
    %7 = arith.addf %4, %6 : vector<64x256xf32>
    %cst = arith.constant 0.000000e+00 : f32
    %8 = vector.broadcast %cst : f32 to vector<64x256xf32>
    %9 = arith.maximumf %7, %8 : vector<64x256xf32>
    %c0_6 = arith.constant 0 : index
    %c0_7 = arith.constant 0 : index
    %10 = vector.load %arg4[%c0_6, %c0_7] : memref<128x64xf32, #tpu.memory_space<vmem>>, vector<128x64xf32>
    %cst_8 = arith.constant dense<0.000000e+00> : vector<128x256xf32>
    %11 = tpu.matmul %10, %9, %cst_8 {dimension_numbers = #tpu.dot_dimension_numbers<[1], [0], [0], [1], [0, 0, 1, 1], [], []>} : vector<128x64xf32>, vector<64x256xf32>, vector<128x256xf32> -> vector<128x256xf32>
    %c0_9 = arith.constant 0 : index
    %c0_10 = arith.constant 0 : index
    %12 = vector.load %arg5[%c0_9, %c0_10] : memref<128x1xf32, #tpu.memory_space<vmem>>, vector<128x1xf32>
    %13 = vector.broadcast %12 : vector<128x1xf32> to vector<128x256xf32>
    %14 = arith.addf %11, %13 : vector<128x256xf32>
    %cst_11 = arith.constant 0.000000e+00 : f32
    %15 = vector.broadcast %cst_11 : f32 to vector<128x256xf32>
    %16 = arith.maximumf %14, %15 : vector<128x256xf32>
    %cst_12 = arith.constant 0.000000e+00 : f32
    %17 = vector.broadcast %cst_12 : f32 to vector<128x17xf32>
    %c0_13 = arith.constant 0 : index
    %c0_14 = arith.constant 0 : index
    %18 = vector.load %arg8[%c0_13, %c0_14] : memref<128x290xf32, #tpu.memory_space<vmem>>, vector<128x17xf32>
    tpu.vector_store %arg8[%c0_13, %c0_14], %17 {strides = array<i32>} : memref<128x290xf32, #tpu.memory_space<vmem>>, vector<128x17xf32>,
    %cst_15 = arith.constant 0.000000e+00 : f32
    %19 = vector.broadcast %cst_15 : f32 to vector<128x17xf32>
    %c0_16 = arith.constant 0 : index
    %c273 = arith.constant 273 : index
    %20 = vector.load %arg8[%c0_16, %c273] : memref<128x290xf32, #tpu.memory_space<vmem>>, vector<128x17xf32>
    tpu.vector_store %arg8[%c0_16, %c273], %19 {strides = array<i32>} : memref<128x290xf32, #tpu.memory_space<vmem>>, vector<128x17xf32>,
    %c0_17 = arith.constant 0 : index
    %c17 = arith.constant 17 : index
    %21 = vector.load %arg8[%c0_17, %c17] : memref<128x290xf32, #tpu.memory_space<vmem>>, vector<128x256xf32>
    tpu.vector_store %arg8[%c0_17, %c17], %16 {strides = array<i32>} : memref<128x290xf32, #tpu.memory_space<vmem>>, vector<128x256xf32>,
    %22 = tpu.iota {dimensions = array<i32: 1>} : vector<1x256xi32>
    %c16_i32 = arith.constant 16 : i32
    %c0_i32 = arith.constant 0 : i32
    %23 = arith.cmpi eq, %c16_i32, %c0_i32 : i32
    %c1_i32 = arith.constant 1 : i32
    %24 = arith.select %23, %c1_i32, %c16_i32 : i32
    %25 = vector.broadcast %24 : i32 to vector<1x256xi32>
    %26 = arith.remsi %22, %25 : vector<1x256xi32>
    %c0_i32_18 = arith.constant 0 : i32
    %27 = vector.broadcast %c0_i32_18 : i32 to vector<1x256xi32>
    %28 = arith.cmpi ne, %26, %27 : vector<1x256xi32>
    %c0_i32_19 = arith.constant 0 : i32
    %29 = vector.broadcast %c0_i32_19 : i32 to vector<1x256xi32>
    %30 = arith.cmpi slt, %26, %29 : vector<1x256xi32>
    %c0_i32_20 = arith.constant 0 : i32
    %31 = arith.cmpi slt, %24, %c0_i32_20 : i32
    %32 = vector.broadcast %31 : i1 to vector<1x256xi1>
    %33 = vector.broadcast %32 : vector<1x256xi1> to vector<1x256xi1>
    %34 = arith.xori %30, %33 : vector<1x256xi1>
    %35 = arith.andi %34, %28 : vector<1x256xi1>
    %36 = vector.broadcast %24 : i32 to vector<1x256xi32>
    %37 = arith.addi %26, %36 : vector<1x256xi32>
    %38 = arith.select %35, %37, %26 : vector<1x256xi1>, vector<1x256xi32>
    %c0_i32_21 = arith.constant 0 : i32
    %39 = vector.broadcast %c0_i32_21 : i32 to vector<1x256xi32>
    %40 = arith.cmpi ne, %38, %39 : vector<1x256xi32>
    %c15_i32 = arith.constant 15 : i32
    %41 = vector.broadcast %c15_i32 : i32 to vector<1x256xi32>
    %42 = arith.cmpi ne, %38, %41 : vector<1x256xi32>
    %cst_22 = arith.constant 0.000000e+00 : f32
    %43 = vector.broadcast %cst_22 : f32 to vector<32x256xf32>
    %c0_23 = arith.constant 0 : index
    %c0_24 = arith.constant 0 : index
    %44 = vector.load %arg8[%c0_23, %c0_24] : memref<128x290xf32, #tpu.memory_space<vmem>>, vector<128x256xf32>
    %cst_25 = arith.constant 0.000000e+00 : f32
    %45 = vector.shape_cast %40 : vector<1x256xi1> to vector<1x256xi1>
    %46 = vector.broadcast %45 : vector<1x256xi1> to vector<128x256xi1>
    %47 = vector.broadcast %cst_25 : f32 to vector<128x256xf32>
    %48 = arith.select %46, %44, %47 : vector<128x256xi1>, vector<128x256xf32>
    %c0_26 = arith.constant 0 : index
    %c0_27 = arith.constant 0 : index
    %c0_28 = arith.constant 0 : index
    %49 = vector.load %arg6[%c0_26, %c0_27, %c0_28] : memref<9x32x128xf32, #tpu.memory_space<vmem>>, vector<1x32x128xf32>
    %50 = vector.shape_cast %49 : vector<1x32x128xf32> to vector<32x128xf32>
    %cst_29 = arith.constant dense<0.000000e+00> : vector<32x256xf32>
    %51 = tpu.matmul %50, %48, %cst_29 {dimension_numbers = #tpu.dot_dimension_numbers<[1], [0], [0], [1], [0, 0, 1, 1], [], []>} : vector<32x128xf32>, vector<128x256xf32>, vector<32x256xf32> -> vector<32x256xf32>
    %52 = arith.addf %43, %51 : vector<32x256xf32>
    %c0_30 = arith.constant 0 : index
    %c1 = arith.constant 1 : index
    %53 = vector.load %arg8[%c0_30, %c1] : memref<128x290xf32, #tpu.memory_space<vmem>>, vector<128x256xf32>
    %c1_31 = arith.constant 1 : index
    %c0_32 = arith.constant 0 : index
    %c0_33 = arith.constant 0 : index
    %54 = vector.load %arg6[%c1_31, %c0_32, %c0_33] : memref<9x32x128xf32, #tpu.memory_space<vmem>>, vector<1x32x128xf32>
    %55 = vector.shape_cast %54 : vector<1x32x128xf32> to vector<32x128xf32>
    %cst_34 = arith.constant dense<0.000000e+00> : vector<32x256xf32>
    %56 = tpu.matmul %55, %53, %cst_34 {dimension_numbers = #tpu.dot_dimension_numbers<[1], [0], [0], [1], [0, 0, 1, 1], [], []>} : vector<32x128xf32>, vector<128x256xf32>, vector<32x256xf32> -> vector<32x256xf32>
    %57 = arith.addf %52, %56 : vector<32x256xf32>
    %c0_35 = arith.constant 0 : index
    %c2 = arith.constant 2 : index
    %58 = vector.load %arg8[%c0_35, %c2] : memref<128x290xf32, #tpu.memory_space<vmem>>, vector<128x256xf32>
    %cst_36 = arith.constant 0.000000e+00 : f32
    %59 = vector.shape_cast %42 : vector<1x256xi1> to vector<1x256xi1>
    %60 = vector.broadcast %59 : vector<1x256xi1> to vector<128x256xi1>
    %61 = vector.broadcast %cst_36 : f32 to vector<128x256xf32>
    %62 = arith.select %60, %58, %61 : vector<128x256xi1>, vector<128x256xf32>
    %c2_37 = arith.constant 2 : index
    %c0_38 = arith.constant 0 : index
    %c0_39 = arith.constant 0 : index
    %63 = vector.load %arg6[%c2_37, %c0_38, %c0_39] : memref<9x32x128xf32, #tpu.memory_space<vmem>>, vector<1x32x128xf32>
    %64 = vector.shape_cast %63 : vector<1x32x128xf32> to vector<32x128xf32>
    %cst_40 = arith.constant dense<0.000000e+00> : vector<32x256xf32>
    %65 = tpu.matmul %64, %62, %cst_40 {dimension_numbers = #tpu.dot_dimension_numbers<[1], [0], [0], [1], [0, 0, 1, 1], [], []>} : vector<32x128xf32>, vector<128x256xf32>, vector<32x256xf32> -> vector<32x256xf32>
    %66 = arith.addf %57, %65 : vector<32x256xf32>
    %c0_41 = arith.constant 0 : index
    %c16 = arith.constant 16 : index
    %67 = vector.load %arg8[%c0_41, %c16] : memref<128x290xf32, #tpu.memory_space<vmem>>, vector<128x256xf32>
    %cst_42 = arith.constant 0.000000e+00 : f32
    %68 = vector.shape_cast %40 : vector<1x256xi1> to vector<1x256xi1>
    %69 = vector.broadcast %68 : vector<1x256xi1> to vector<128x256xi1>
    %70 = vector.broadcast %cst_42 : f32 to vector<128x256xf32>
    %71 = arith.select %69, %67, %70 : vector<128x256xi1>, vector<128x256xf32>
    %c3 = arith.constant 3 : index
    %c0_43 = arith.constant 0 : index
    %c0_44 = arith.constant 0 : index
    %72 = vector.load %arg6[%c3, %c0_43, %c0_44] : memref<9x32x128xf32, #tpu.memory_space<vmem>>, vector<1x32x128xf32>
    %73 = vector.shape_cast %72 : vector<1x32x128xf32> to vector<32x128xf32>
    %cst_45 = arith.constant dense<0.000000e+00> : vector<32x256xf32>
    %74 = tpu.matmul %73, %71, %cst_45 {dimension_numbers = #tpu.dot_dimension_numbers<[1], [0], [0], [1], [0, 0, 1, 1], [], []>} : vector<32x128xf32>, vector<128x256xf32>, vector<32x256xf32> -> vector<32x256xf32>
    %75 = arith.addf %66, %74 : vector<32x256xf32>
    %c0_46 = arith.constant 0 : index
    %c17_47 = arith.constant 17 : index
    %76 = vector.load %arg8[%c0_46, %c17_47] : memref<128x290xf32, #tpu.memory_space<vmem>>, vector<128x256xf32>
    %c4 = arith.constant 4 : index
    %c0_48 = arith.constant 0 : index
    %c0_49 = arith.constant 0 : index
    %77 = vector.load %arg6[%c4, %c0_48, %c0_49] : memref<9x32x128xf32, #tpu.memory_space<vmem>>, vector<1x32x128xf32>
    %78 = vector.shape_cast %77 : vector<1x32x128xf32> to vector<32x128xf32>
    %cst_50 = arith.constant dense<0.000000e+00> : vector<32x256xf32>
    %79 = tpu.matmul %78, %76, %cst_50 {dimension_numbers = #tpu.dot_dimension_numbers<[1], [0], [0], [1], [0, 0, 1, 1], [], []>} : vector<32x128xf32>, vector<128x256xf32>, vector<32x256xf32> -> vector<32x256xf32>
    %80 = arith.addf %75, %79 : vector<32x256xf32>
    %c0_51 = arith.constant 0 : index
    %c18 = arith.constant 18 : index
    %81 = vector.load %arg8[%c0_51, %c18] : memref<128x290xf32, #tpu.memory_space<vmem>>, vector<128x256xf32>
    %cst_52 = arith.constant 0.000000e+00 : f32
    %82 = vector.shape_cast %42 : vector<1x256xi1> to vector<1x256xi1>
    %83 = vector.broadcast %82 : vector<1x256xi1> to vector<128x256xi1>
    %84 = vector.broadcast %cst_52 : f32 to vector<128x256xf32>
    %85 = arith.select %83, %81, %84 : vector<128x256xi1>, vector<128x256xf32>
    %c5 = arith.constant 5 : index
    %c0_53 = arith.constant 0 : index
    %c0_54 = arith.constant 0 : index
    %86 = vector.load %arg6[%c5, %c0_53, %c0_54] : memref<9x32x128xf32, #tpu.memory_space<vmem>>, vector<1x32x128xf32>
    %87 = vector.shape_cast %86 : vector<1x32x128xf32> to vector<32x128xf32>
    %cst_55 = arith.constant dense<0.000000e+00> : vector<32x256xf32>
    %88 = tpu.matmul %87, %85, %cst_55 {dimension_numbers = #tpu.dot_dimension_numbers<[1], [0], [0], [1], [0, 0, 1, 1], [], []>} : vector<32x128xf32>, vector<128x256xf32>, vector<32x256xf32> -> vector<32x256xf32>
    %89 = arith.addf %80, %88 : vector<32x256xf32>
    %c0_56 = arith.constant 0 : index
    %c32 = arith.constant 32 : index
    %90 = vector.load %arg8[%c0_56, %c32] : memref<128x290xf32, #tpu.memory_space<vmem>>, vector<128x256xf32>
    %cst_57 = arith.constant 0.000000e+00 : f32
    %91 = vector.shape_cast %40 : vector<1x256xi1> to vector<1x256xi1>
    %92 = vector.broadcast %91 : vector<1x256xi1> to vector<128x256xi1>
    %93 = vector.broadcast %cst_57 : f32 to vector<128x256xf32>
    %94 = arith.select %92, %90, %93 : vector<128x256xi1>, vector<128x256xf32>
    %c6 = arith.constant 6 : index
    %c0_58 = arith.constant 0 : index
    %c0_59 = arith.constant 0 : index
    %95 = vector.load %arg6[%c6, %c0_58, %c0_59] : memref<9x32x128xf32, #tpu.memory_space<vmem>>, vector<1x32x128xf32>
    %96 = vector.shape_cast %95 : vector<1x32x128xf32> to vector<32x128xf32>
    %cst_60 = arith.constant dense<0.000000e+00> : vector<32x256xf32>
    %97 = tpu.matmul %96, %94, %cst_60 {dimension_numbers = #tpu.dot_dimension_numbers<[1], [0], [0], [1], [0, 0, 1, 1], [], []>} : vector<32x128xf32>, vector<128x256xf32>, vector<32x256xf32> -> vector<32x256xf32>
    %98 = arith.addf %89, %97 : vector<32x256xf32>
    %c0_61 = arith.constant 0 : index
    %c33 = arith.constant 33 : index
    %99 = vector.load %arg8[%c0_61, %c33] : memref<128x290xf32, #tpu.memory_space<vmem>>, vector<128x256xf32>
    %c7 = arith.constant 7 : index
    %c0_62 = arith.constant 0 : index
    %c0_63 = arith.constant 0 : index
    %100 = vector.load %arg6[%c7, %c0_62, %c0_63] : memref<9x32x128xf32, #tpu.memory_space<vmem>>, vector<1x32x128xf32>
    %101 = vector.shape_cast %100 : vector<1x32x128xf32> to vector<32x128xf32>
    %cst_64 = arith.constant dense<0.000000e+00> : vector<32x256xf32>
    %102 = tpu.matmul %101, %99, %cst_64 {dimension_numbers = #tpu.dot_dimension_numbers<[1], [0], [0], [1], [0, 0, 1, 1], [], []>} : vector<32x128xf32>, vector<128x256xf32>, vector<32x256xf32> -> vector<32x256xf32>
    %103 = arith.addf %98, %102 : vector<32x256xf32>
    %c0_65 = arith.constant 0 : index
    %c34 = arith.constant 34 : index
    %104 = vector.load %arg8[%c0_65, %c34] : memref<128x290xf32, #tpu.memory_space<vmem>>, vector<128x256xf32>
    %cst_66 = arith.constant 0.000000e+00 : f32
    %105 = vector.shape_cast %42 : vector<1x256xi1> to vector<1x256xi1>
    %106 = vector.broadcast %105 : vector<1x256xi1> to vector<128x256xi1>
    %107 = vector.broadcast %cst_66 : f32 to vector<128x256xf32>
    %108 = arith.select %106, %104, %107 : vector<128x256xi1>, vector<128x256xf32>
    %c8 = arith.constant 8 : index
    %c0_67 = arith.constant 0 : index
    %c0_68 = arith.constant 0 : index
    %109 = vector.load %arg6[%c8, %c0_67, %c0_68] : memref<9x32x128xf32, #tpu.memory_space<vmem>>, vector<1x32x128xf32>
    %110 = vector.shape_cast %109 : vector<1x32x128xf32> to vector<32x128xf32>
    %cst_69 = arith.constant dense<0.000000e+00> : vector<32x256xf32>
    %111 = tpu.matmul %110, %108, %cst_69 {dimension_numbers = #tpu.dot_dimension_numbers<[1], [0], [0], [1], [0, 0, 1, 1], [], []>} : vector<32x128xf32>, vector<128x256xf32>, vector<32x256xf32> -> vector<32x256xf32>
    %112 = arith.addf %103, %111 : vector<32x256xf32>
    %c0_70 = arith.constant 0 : index
    %c0_71 = arith.constant 0 : index
    %c0_72 = arith.constant 0 : index
    %113 = vector.load %arg7[%c0_70, %c0_71, %c0_72] : memref<1x32x256xf32, #tpu.memory_space<vmem>>, vector<1x32x256xf32>
    %114 = vector.shape_cast %113 : vector<1x32x256xf32> to vector<32x256xf32>
    %115 = vector.shape_cast %112 : vector<32x256xf32> to vector<1x32x256xf32>
    tpu.vector_store %arg7[%c0_70, %c0_71, %c0_72], %115 {strides = array<i32>} : memref<1x32x256xf32, #tpu.memory_space<vmem>>, vector<1x32x256xf32>,
    return
  }
  func.func @transform_0(%arg0: i32) -> (i32, i32, i32) {
    %c0_i32 = arith.constant 0 : i32
    %c0_i32_0 = arith.constant 0 : i32
    %c0_i32_1 = arith.constant 0 : i32
    return %arg0, %c0_i32, %c0_i32_0 : i32, i32, i32
  }
  func.func @transform_1(%arg0: i32) -> (i32, i32) {
    %c0_i32 = arith.constant 0 : i32
    %c0_i32_0 = arith.constant 0 : i32
    %c0_i32_1 = arith.constant 0 : i32
    return %c0_i32, %c0_i32_0 : i32, i32
  }
  func.func @transform_2(%arg0: i32) -> (i32, i32) {
    %c0_i32 = arith.constant 0 : i32
    %c0_i32_0 = arith.constant 0 : i32
    %c0_i32_1 = arith.constant 0 : i32
    return %c0_i32, %c0_i32_0 : i32, i32
  }
  func.func @transform_3(%arg0: i32) -> (i32, i32) {
    %c0_i32 = arith.constant 0 : i32
    %c0_i32_0 = arith.constant 0 : i32
    %c0_i32_1 = arith.constant 0 : i32
    return %c0_i32, %c0_i32_0 : i32, i32
  }
  func.func @transform_4(%arg0: i32) -> (i32, i32) {
    %c0_i32 = arith.constant 0 : i32
    %c0_i32_0 = arith.constant 0 : i32
    %c0_i32_1 = arith.constant 0 : i32
    return %c0_i32, %c0_i32_0 : i32, i32
  }
  func.func @transform_5(%arg0: i32) -> (i32, i32, i32) {
    %c0_i32 = arith.constant 0 : i32
    %c0_i32_0 = arith.constant 0 : i32
    %c0_i32_1 = arith.constant 0 : i32
    %c0_i32_2 = arith.constant 0 : i32
    return %c0_i32, %c0_i32_0, %c0_i32_1 : i32, i32, i32
  }
  func.func @transform_6(%arg0: i32) -> (i32, i32, i32) {
    %c0_i32 = arith.constant 0 : i32
    %c0_i32_0 = arith.constant 0 : i32
    %c0_i32_1 = arith.constant 0 : i32
    return %arg0, %c0_i32, %c0_i32_0 : i32, i32, i32
  }
}

</mosaic_0001>

<llo_original>
// kernel: tpu_custom_call.1
$region0: #{tpu_custom_call.1}
  #allocation0 [shape = 'u32[]', space=smem, size = 0x4, offset = 0x4, fixed_abs, tag = 'smem constant byte address 0x4 - core index']
  #allocation1 [shape = 'u32[144,128]{1,0:T(1,128)}', space=vmem, size = 0x12000, scoped, tag = 'internal scratch']
  #allocation2 [shape = 'f32[128,290]{1,0:T(8,128)}', space=vmem, size = 0x30000, scoped, tag = 'scratch operand']
  %s0 = inlined_call_operand.hbm [shape: f32[2,64,256], index: 0, kind: input, shape index: {}]
  %s1 = inlined_call_operand.vmem [shape: f32[64,1], index: 1, kind: input, shape index: {}]
  %s2 = inlined_call_operand.vmem [shape: f32[64,1], index: 2, kind: input, shape index: {}]
  %s3 = inlined_call_operand.vmem [shape: f32[128,64], index: 3, kind: input, shape index: {}]
  %s4 = inlined_call_operand.vmem [shape: f32[128,1], index: 4, kind: input, shape index: {}]
  %s5 = inlined_call_operand.vmem [shape: f32[9,32,128], index: 5, kind: input, shape index: {}]
  %s6 = inlined_call_operand.hbm [shape: f32[2,32,256], index: 6, kind: output, shape index: {}]
  %s7 = sld [smem:[#allocation0]]
  $region61: #{tpu_custom_call.1} parent=0
    _
  %s9 = ssub.s32 1, %s7
  %s10 = scalar_select 0, %s9, %s7
  $region1: #{tpu_custom_call.1} parent=0
    #allocation3 [shape = 'u8[131072]{0}', space=vmem, size = 0x20000, scoped, tag = 'input window, operand 0']
    #allocation4 [shape = 's32[2]{0}', space=sflag, size = 0x8, scoped, tag = 'scoped memory for tpu_custom_call.1']
    #allocation5 [shape = 's32[2]{0}', space=sflag, size = 0x8, scoped, tag = 'scoped memory for tpu_custom_call.1']
    #allocation6 [shape = 'u8[65536]{0}', space=vmem, size = 0x10000, scoped, tag = 'output window, operand 0']
    %11 = vsyncpa [#allocation4], 0
    %s12 = scalar_lea.sflag [#allocation4], 1
    %13 = vsyncpa %s12, 0
    %14 = vsyncpa [#allocation5], 0
    %s15 = scalar_lea.sflag [#allocation5], 1
    %16 = vsyncpa %s15, 0
    loop: start=0, step=1, limit=4
    $region2: #{tpu_custom_call.1} parent=1 // loop_pre_header
      _
    $region3: #{tpu_custom_call.1} parent=1 // loop_header
      %s18 = sphi 0, %s22
      %p19 = scmp.ge.s32.totalorder %s18, 4
      %s28 = sphi 0, %s30
      %s31 = sphi 0, %s28
      %s32 = sphi 0, %s31
      %s48 = sphi 0, %s32
      %s52 = sphi 0, %s52
      %s54 = sphi 0, %s52
      %s55 = sphi 0, %s54
      %s69 = sphi 0, %s55
      %s73 = sphi 0, %s73
      %s75 = sphi 0, %s73
      %s76 = sphi 0, %s75
      %s90 = sphi 0, %s76
      %s94 = sphi 0, %s94
      %s96 = sphi 0, %s94
      %s97 = sphi 0, %s96
      %s111 = sphi 0, %s97
      %s115 = sphi 0, %s115
      %s117 = sphi 0, %s115
      %s118 = sphi 0, %s117
      %s132 = sphi 0, %s118
      %s136 = sphi 0, %s136
      %s138 = sphi 0, %s136
      %s139 = sphi 0, %s138
      %s153 = sphi 0, %s139
      %s159 = sphi 0, %s161
      %s162 = sphi 0, %s159
      %s163 = sphi 0, %s162
      %s179 = sphi 0, %s163
    $region4: #{tpu_custom_call.1} parent=1 // loop_header_branch
      %21 = sbr.rel (%p19) target = $region8
    $region5: #{tpu_custom_call.1} parent=1 // loop_body
      %s23 = ssub.s32 %s18, 1
      %s24 = ssub.s32 %s18, 2
      %s25 = sadd.s32 %s18, 1
      %s26 = ssub.s32 %s18, %s25
      %p27 = scmp.eq.s32.totalorder %s26, 0
      %s29 = sadd.s32 %s28, 1
      %s30 = scalar_select %p27, %s28, %s29
      %p33 = pneg %p27
      %p34 = scmp.eq.s32.totalorder %s18, 1
      %p35 = por %p33, %p34
      %p36 = scmp.ne.s32.totalorder %s28, %s31
      %p37 = scmp.eq.s32.totalorder %s18, 0
      %p38 = por %p36, %p37
      %p39 = scmp.ne.s32.totalorder %s28, %s31
      %p40 = scmp.eq.s32.totalorder %s23, 1
      %p41 = por %p39, %p40
      %p42 = scmp.ne.s32.totalorder %s31, %s32
      %p43 = scmp.eq.s32.totalorder %s23, 0
      %p44 = por %p42, %p43
      %p45 = scmp.ne.s32.totalorder %s31, %s32
      %p46 = scmp.eq.s32.totalorder %s24, 1
      %p47 = por %p45, %p46
      %p49 = scmp.ne.s32.totalorder %s32, %s48
      %p50 = scmp.eq.s32.totalorder %s24, 0
      %p51 = por %p49, %p50
      %s53 = sadd.s32 %s52, 1
      %p56 = scmp.eq.s32.totalorder %s18, 1
      %p57 = scmp.ne.s32.totalorder %s52, %s54
      %p58 = scmp.eq.s32.totalorder %s18, 0
      %p59 = por %p57, %p58
      %p60 = scmp.ne.s32.totalorder %s52, %s54
      %p61 = scmp.eq.s32.totalorder %s23, 1
      %p62 = por %p60, %p61
      %p63 = scmp.ne.s32.totalorder %s54, %s55
      %p64 = scmp.eq.s32.totalorder %s23, 0
      %p65 = por %p63, %p64
      %p66 = scmp.ne.s32.totalorder %s54, %s55
      %p67 = scmp.eq.s32.totalorder %s24, 1
      %p68 = por %p66, %p67
      %p70 = scmp.ne.s32.totalorder %s55, %s69
      %p71 = scmp.eq.s32.totalorder %s24, 0
      %p72 = por %p70, %p71
      %s74 = sadd.s32 %s73, 1
      %p77 = scmp.eq.s32.totalorder %s18, 1
      %p78 = scmp.ne.s32.totalorder %s73, %s75
      %p79 = scmp.eq.s32.totalorder %s18, 0
      %p80 = por %p78, %p79
      %p81 = scmp.ne.s32.totalorder %s73, %s75
      %p82 = scmp.eq.s32.totalorder %s23, 1
      %p83 = por %p81, %p82
      %p84 = scmp.ne.s32.totalorder %s75, %s76
      %p85 = scmp.eq.s32.totalorder %s23, 0
      %p86 = por %p84, %p85
      %p87 = scmp.ne.s32.totalorder %s75, %s76
      %p88 = scmp.eq.s32.totalorder %s24, 1
      %p89 = por %p87, %p88
      %p91 = scmp.ne.s32.totalorder %s76, %s90
      %p92 = scmp.eq.s32.totalorder %s24, 0
      %p93 = por %p91, %p92
      %s95 = sadd.s32 %s94, 1
      %p98 = scmp.eq.s32.totalorder %s18, 1
      %p99 = scmp.ne.s32.totalorder %s94, %s96
      %p100 = scmp.eq.s32.totalorder %s18, 0
      %p101 = por %p99, %p100
      %p102 = scmp.ne.s32.totalorder %s94, %s96
      %p103 = scmp.eq.s32.totalorder %s23, 1
      %p104 = por %p102, %p103
      %p105 = scmp.ne.s32.totalorder %s96, %s97
      %p106 = scmp.eq.s32.totalorder %s23, 0
      %p107 = por %p105, %p106
      %p108 = scmp.ne.s32.totalorder %s96, %s97
      %p109 = scmp.eq.s32.totalorder %s24, 1
      %p110 = por %p108, %p109
      %p112 = scmp.ne.s32.totalorder %s97, %s111
      %p113 = scmp.eq.s32.totalorder %s24, 0
      %p114 = por %p112, %p113
      %s116 = sadd.s32 %s115, 1
      %p119 = scmp.eq.s32.totalorder %s18, 1
      %p120 = scmp.ne.s32.totalorder %s115, %s117
      %p121 = scmp.eq.s32.totalorder %s18, 0
      %p122 = por %p120, %p121
      %p123 = scmp.ne.s32.totalorder %s115, %s117
      %p124 = scmp.eq.s32.totalorder %s23, 1
      %p125 = por %p123, %p124
      %p126 = scmp.ne.s32.totalorder %s117, %s118
      %p127 = scmp.eq.s32.totalorder %s23, 0
      %p128 = por %p126, %p127
      %p129 = scmp.ne.s32.totalorder %s117, %s118
      %p130 = scmp.eq.s32.totalorder %s24, 1
      %p131 = por %p129, %p130
      %p133 = scmp.ne.s32.totalorder %s118, %s132
      %p134 = scmp.eq.s32.totalorder %s24, 0
      %p135 = por %p133, %p134
      %s137 = sadd.s32 %s136, 1
      %p140 = scmp.eq.s32.totalorder %s18, 1
      %p141 = scmp.ne.s32.totalorder %s136, %s138
      %p142 = scmp.eq.s32.totalorder %s18, 0
      %p143 = por %p141, %p142
      %p144 = scmp.ne.s32.totalorder %s136, %s138
      %p145 = scmp.eq.s32.totalorder %s23, 1
      %p146 = por %p144, %p145
      %p147 = scmp.ne.s32.totalorder %s138, %s139
      %p148 = scmp.eq.s32.totalorder %s23, 0
      %p149 = por %p147, %p148
      %p150 = scmp.ne.s32.totalorder %s138, %s139
      %p151 = scmp.eq.s32.totalorder %s24, 1
      %p152 = por %p150, %p151
      %p154 = scmp.ne.s32.totalorder %s139, %s153
      %p155 = scmp.eq.s32.totalorder %s24, 0
      %p156 = por %p154, %p155
      %s157 = ssub.s32 %s18, %s25
      %p158 = scmp.eq.s32.totalorder %s157, 0
      %s160 = sadd.s32 %s159, 1
      %s161 = scalar_select %p158, %s159, %s160
      %p164 = pneg %p158
      %p165 = scmp.eq.s32.totalorder %s18, 1
      %p166 = por %p164, %p165
      %p167 = scmp.ne.s32.totalorder %s159, %s162
      %p168 = scmp.eq.s32.totalorder %s18, 0
      %p169 = por %p167, %p168
      %p170 = scmp.ne.s32.totalorder %s159, %s162
      %p171 = scmp.eq.s32.totalorder %s23, 1
      %p172 = por %p170, %p171
      %p173 = scmp.ne.s32.totalorder %s162, %s163
      %p174 = scmp.eq.s32.totalorder %s23, 0
      %p175 = por %p173, %p174
      %p176 = scmp.ne.s32.totalorder %s162, %s163
      %p177 = scmp.eq.s32.totalorder %s24, 1
      %p178 = por %p176, %p177
      %p180 = scmp.ne.s32.totalorder %s163, %s179
      %p181 = scmp.eq.s32.totalorder %s24, 0
      %p182 = por %p180, %p181
      %p183 = scmp.le.s32.totalorder 1, %s18
      %p184 = scmp.lt.s32.totalorder %s18, 3
      %p185 = pnand %p183, %p184
      %p186 = pneg %p185
      // Predicated region
      $region9: #{tpu_custom_call.1} parent=5 // pred_check
        _
      $region10: #{tpu_custom_call.1} parent=5 // pred_check_branch
        %188 = sbr.rel (%p185) target = $region12
      $region11: #{tpu_custom_call.1} parent=5 // pred_region
        %s189 = ssub.s32 %s18, 1
        // Predicated region
        $region13: #{tpu_custom_call.1} parent=11 // pred_check
          %p190 = pneg %p65
        $region14: #{tpu_custom_call.1} parent=11 // pred_check_branch
          %192 = sbr.rel (%p190) target = $region16
        $region15: #{tpu_custom_call.1} parent=11 // pred_region
          _
        $region16: #{tpu_custom_call.1} parent=11 // pred_fallthru
          _
        // Predicated region
        $region17: #{tpu_custom_call.1} parent=11 // pred_check
          %p193 = pneg %p86
        $region18: #{tpu_custom_call.1} parent=11 // pred_check_branch
          %195 = sbr.rel (%p193) target = $region20
        $region19: #{tpu_custom_call.1} parent=11 // pred_region
          _
        $region20: #{tpu_custom_call.1} parent=11 // pred_fallthru
          _
        // Predicated region
        $region21: #{tpu_custom_call.1} parent=11 // pred_check
          %p196 = pneg %p107
        $region22: #{tpu_custom_call.1} parent=11 // pred_check_branch
          %198 = sbr.rel (%p196) target = $region24
        $region23: #{tpu_custom_call.1} parent=11 // pred_region
          _
        $region24: #{tpu_custom_call.1} parent=11 // pred_fallthru
          _
        // Predicated region
        $region25: #{tpu_custom_call.1} parent=11 // pred_check
          %p199 = pneg %p128
        $region26: #{tpu_custom_call.1} parent=11 // pred_check_branch
          %201 = sbr.rel (%p199) target = $region28
        $region27: #{tpu_custom_call.1} parent=11 // pred_region
          _
        $region28: #{tpu_custom_call.1} parent=11 // pred_fallthru
          _
        // Predicated region
        $region29: #{tpu_custom_call.1} parent=11 // pred_check
          %p202 = pneg %p149
        $region30: #{tpu_custom_call.1} parent=11 // pred_check_branch
          %204 = sbr.rel (%p202) target = $region32
        $region31: #{tpu_custom_call.1} parent=11 // pred_region
          _
        $region32: #{tpu_custom_call.1} parent=11 // pred_fallthru
          _
      $region12: #{tpu_custom_call.1} parent=5 // pred_fallthru
        _
      %p205 = scmp.lt.s32.totalorder %s18, 2
      // Predicated region
      $region33: #{tpu_custom_call.1} parent=5 // pred_check
        %p206 = pneg %p205
      $region34: #{tpu_custom_call.1} parent=5 // pred_check_branch
        %208 = sbr.rel (%p206) target = $region36
      $region35: #{tpu_custom_call.1} parent=5 // pred_region
        // Predicated region
        $region37: #{tpu_custom_call.1} parent=35 // pred_check
          %p209 = pneg %p38
        $region38: #{tpu_custom_call.1} parent=35 // pred_check_branch
          %211 = sbr.rel (%p209) target = $region40
        $region39: #{tpu_custom_call.1} parent=35 // pred_region
          %s212 = sand.u32 %s28, 1
          %s213 = scalar_lea.sflag [#allocation4], %s212
          %s214 = sand.u32 %s28, 1
          %s215 = smul.addr %s214, 128
          %s216 = scalar_lea.vmem [#allocation3], %s215
          %s218 = ssub.s32 2048, 2048
          %219 = vsyncadd %s213, %s218
          %s220 = smul.addr %s18, 16
          %s221 = smul.addr %s220, 128
          %s222 = scalar_lea.hbm %s0, %s221
          %s223 = sshll.u32 %s216, 4
          %s224 = int_to_ptr.vmem [resolvable:$true] %s223
          %229 = dma.hbm_to_vmem [thread:$0]  %s222, 2048, %s224, %s213, 256, 256, 16
        $region40: #{tpu_custom_call.1} parent=35 // pred_fallthru
          _
      $region36: #{tpu_custom_call.1} parent=5 // pred_fallthru
        _
      %p230 = scmp.le.s32.totalorder 1, %s18
      %p231 = scmp.lt.s32.totalorder %s18, 3
      %p232 = pnand %p230, %p231
      %p233 = pneg %p232
      // Predicated region
      $region41: #{tpu_custom_call.1} parent=5 // pred_check
        _
      $region42: #{tpu_custom_call.1} parent=5 // pred_check_branch
        %235 = sbr.rel (%p232) target = $region44
      $region43: #{tpu_custom_call.1} parent=5 // pred_region
        %s236 = ssub.s32 %s18, 1
        %s237 = sand.u32 %s31, 1
        %s238 = scalar_lea.sflag [#allocation4], %s237
        %s239 = sand.u32 %s31, 1
        %s240 = smul.addr %s239, 128
        %s241 = scalar_lea.vmem [#allocation3], %s240
        // Predicated region
        $region45: #{tpu_custom_call.1} parent=43 // pred_check
          %p242 = pneg %p44
        $region46: #{tpu_custom_call.1} parent=43 // pred_check_branch
          %244 = sbr.rel (%p242) target = $region48
        $region47: #{tpu_custom_call.1} parent=43 // pred_region
          %245 = dma.done %s238, 2048
        $region48: #{tpu_custom_call.1} parent=43 // pred_fallthru
          _
        %s246 = sand.u32 %s31, 1
        %s247 = scalar_lea.sflag [#allocation4], %s246
        %s248 = sand.u32 %s31, 1
        %s249 = smul.addr %s248, 128
        %s250 = scalar_lea.vmem [#allocation3], %s249
        %p251 = pneg %p44
        %p252 = pneg %p41
        %p253 = pneg %p65
        %p254 = pneg %p62
        %p255 = pneg %p86
        %p256 = pneg %p83
        %p257 = pneg %p107
        %p258 = pneg %p104
        %p259 = pneg %p128
        %p260 = pneg %p125
        %p261 = pneg %p149
        %p262 = pneg %p146
        %p263 = pneg %p175
        %p264 = pneg %p172
        %s265 = sand.u32 %s162, 1
        %s266 = scalar_lea.sflag [#allocation5], %s265
        %s267 = sand.u32 %s162, 1
        %s268 = smul.addr %s267, 64
        %s269 = scalar_lea.vmem [#allocation6], %s268
        %v270 = vld [vmem:[%s241] sm:$0xff]
        %v271 = vld [vmem:[%s241 + $0x8] sm:$0xff]
        %v272 = vld [vmem:[%s241 + $0x10] sm:$0xff]
        %v273 = vld [vmem:[%s241 + $0x18] sm:$0xff]
        %v274 = vld [vmem:[%s241 + $0x20] sm:$0xff]
        %v275 = vld [vmem:[%s241 + $0x28] sm:$0xff]
        %v276 = vld [vmem:[%s241 + $0x30] sm:$0xff]
        %v277 = vld [vmem:[%s241 + $0x38] sm:$0xff]
        %v278 = vld [vmem:[%s241 + $0x40] sm:$0xff]
        %v279 = vld [vmem:[%s241 + $0x48] sm:$0xff]
        %v280 = vld [vmem:[%s241 + $0x50] sm:$0xff]
        %v281 = vld [vmem:[%s241 + $0x58] sm:$0xff]
        %v282 = vld [vmem:[%s241 + $0x60] sm:$0xff]
        %v283 = vld [vmem:[%s241 + $0x68] sm:$0xff]
        %v284 = vld [vmem:[%s241 + $0x70] sm:$0xff]
        %v285 = vld [vmem:[%s241 + $0x78] sm:$0xff]
        %v286 = vld [vmem:[%s1] sm:$0xff]
        %v287 = vld [vmem:[%s1 + $0x8] sm:$0xff]
        %v288 = vld [vmem:[%s1 + $0x10] sm:$0xff]
        %v289 = vld [vmem:[%s1 + $0x18] sm:$0xff]
        %v290 = vld [vmem:[%s1 + $0x20] sm:$0xff]
        %v291 = vld [vmem:[%s1 + $0x28] sm:$0xff]
        %v292 = vld [vmem:[%s1 + $0x30] sm:$0xff]
        %v293 = vld [vmem:[%s1 + $0x38] sm:$0xff]
        %295 = vset.pattern.permute.xlu0 0
        %296 = vperm.xlu0 %295, %v286
        %v297 = vpop.permute.xlu0 %296
        %300 = vset.pattern.permute.xlu0 0
        %301 = vperm.xlu0 %300, %v287
        %v302 = vpop.permute.xlu0 %301
        %305 = vset.pattern.permute.xlu0 0
        %306 = vperm.xlu0 %305, %v288
        %v307 = vpop.permute.xlu0 %306
        %310 = vset.pattern.permute.xlu0 0
        %311 = vperm.xlu0 %310, %v289
        %v312 = vpop.permute.xlu0 %311
        %315 = vset.pattern.permute.xlu0 0
        %316 = vperm.xlu0 %315, %v290
        %v317 = vpop.permute.xlu0 %316
        %320 = vset.pattern.permute.xlu0 0
        %321 = vperm.xlu0 %320, %v291
        %v322 = vpop.permute.xlu0 %321
        %325 = vset.pattern.permute.xlu0 0
        %326 = vperm.xlu0 %325, %v292
        %v327 = vpop.permute.xlu0 %326
        %330 = vset.pattern.permute.xlu0 0
        %331 = vperm.xlu0 %330, %v293
        %v332 = vpop.permute.xlu0 %331
        %v334 = vmul.f32 %v270, %v297
        %v335 = vmul.f32 %v271, %v297
        %v336 = vmul.f32 %v272, %v302
        %v337 = vmul.f32 %v273, %v302
        %v338 = vmul.f32 %v274, %v307
        %v339 = vmul.f32 %v275, %v307
        %v340 = vmul.f32 %v276, %v312
        %v341 = vmul.f32 %v277, %v312
        %v342 = vmul.f32 %v278, %v317
        %v343 = vmul.f32 %v279, %v317
        %v344 = vmul.f32 %v280, %v322
        %v345 = vmul.f32 %v281, %v322
        %v346 = vmul.f32 %v282, %v327
        %v347 = vmul.f32 %v283, %v327
        %v348 = vmul.f32 %v284, %v332
        %v349 = vmul.f32 %v285, %v332
        %v350 = vld [vmem:[%s2] sm:$0xff]
        %v351 = vld [vmem:[%s2 + $0x8] sm:$0xff]
        %v352 = vld [vmem:[%s2 + $0x10] sm:$0xff]
        %v353 = vld [vmem:[%s2 + $0x18] sm:$0xff]
        %v354 = vld [vmem:[%s2 + $0x20] sm:$0xff]
        %v355 = vld [vmem:[%s2 + $0x28] sm:$0xff]
        %v356 = vld [vmem:[%s2 + $0x30] sm:$0xff]
        %v357 = vld [vmem:[%s2 + $0x38] sm:$0xff]
        %359 = vset.pattern.permute.xlu0 0
        %360 = vperm.xlu0 %359, %v350
        %v361 = vpop.permute.xlu0 %360
        %364 = vset.pattern.permute.xlu0 0
        %365 = vperm.xlu0 %364, %v351
        %v366 = vpop.permute.xlu0 %365
        %369 = vset.pattern.permute.xlu0 0
        %370 = vperm.xlu0 %369, %v352
        %v371 = vpop.permute.xlu0 %370
        %374 = vset.pattern.permute.xlu0 0
        %375 = vperm.xlu0 %374, %v353
        %v376 = vpop.permute.xlu0 %375
        %379 = vset.pattern.permute.xlu0 0
        %380 = vperm.xlu0 %379, %v354
        %v381 = vpop.permute.xlu0 %380
        %384 = vset.pattern.permute.xlu0 0
        %385 = vperm.xlu0 %384, %v355
        %v386 = vpop.permute.xlu0 %385
        %389 = vset.pattern.permute.xlu0 0
        %390 = vperm.xlu0 %389, %v356
        %v391 = vpop.permute.xlu0 %390
        %394 = vset.pattern.permute.xlu0 0
        %395 = vperm.xlu0 %394, %v357
        %v396 = vpop.permute.xlu0 %395
        %v398 = vadd.f32 %v334, %v361
        %v399 = vadd.f32 %v335, %v361
        %v400 = vadd.f32 %v336, %v366
        %v401 = vadd.f32 %v337, %v366
        %v402 = vadd.f32 %v338, %v371
        %v403 = vadd.f32 %v339, %v371
        %v404 = vadd.f32 %v340, %v376
        %v405 = vadd.f32 %v341, %v376
        %v406 = vadd.f32 %v342, %v381
        %v407 = vadd.f32 %v343, %v381
        %v408 = vadd.f32 %v344, %v386
        %v409 = vadd.f32 %v345, %v386
        %v410 = vadd.f32 %v346, %v391
        %v411 = vadd.f32 %v347, %v391
        %v412 = vadd.f32 %v348, %v396
        %v413 = vadd.f32 %v349, %v396
        %v414 = vmax.f32 %v398, 0.0
        %v415 = vmax.f32 %v399, 0.0
        %v416 = vmax.f32 %v400, 0.0
        %v417 = vmax.f32 %v401, 0.0
        %v418 = vmax.f32 %v402, 0.0
        %v419 = vmax.f32 %v403, 0.0
        %v420 = vmax.f32 %v404, 0.0
        %v421 = vmax.f32 %v405, 0.0
        %v422 = vmax.f32 %v406, 0.0
        %v423 = vmax.f32 %v407, 0.0
        %v424 = vmax.f32 %v408, 0.0
        %v425 = vmax.f32 %v409, 0.0
        %v426 = vmax.f32 %v410, 0.0
        %v427 = vmax.f32 %v411, 0.0
        %v428 = vmax.f32 %v412, 0.0
        %v429 = vmax.f32 %v413, 0.0
        %v430 = vld [vmem:[%s3] sm:$0xff]
        %v431 = vld [vmem:[%s3 + $0x8] sm:$0xff]
        %v432 = vld [vmem:[%s3 + $0x10] sm:$0xff]
        %v433 = vld [vmem:[%s3 + $0x18] sm:$0xff]
        %v434 = vld [vmem:[%s3 + $0x20] sm:$0xff]
        %v435 = vld [vmem:[%s3 + $0x28] sm:$0xff]
        %v436 = vld [vmem:[%s3 + $0x30] sm:$0xff]
        %v437 = vld [vmem:[%s3 + $0x38] sm:$0xff]
        %v438 = vld [vmem:[%s3 + $0x40] sm:$0xff]
        %v439 = vld [vmem:[%s3 + $0x48] sm:$0xff]
        %v440 = vld [vmem:[%s3 + $0x50] sm:$0xff]
        %v441 = vld [vmem:[%s3 + $0x58] sm:$0xff]
        %v442 = vld [vmem:[%s3 + $0x60] sm:$0xff]
        %v443 = vld [vmem:[%s3 + $0x68] sm:$0xff]
        %v444 = vld [vmem:[%s3 + $0x70] sm:$0xff]
        %v445 = vld [vmem:[%s3 + $0x78] sm:$0xff]
        %v446 = vld [vmem:[%s4] sm:$0xff]
        %v447 = vld [vmem:[%s4 + $0x8] sm:$0xff]
        %v448 = vld [vmem:[%s4 + $0x10] sm:$0xff]
        %v449 = vld [vmem:[%s4 + $0x18] sm:$0xff]
        %v450 = vld [vmem:[%s4 + $0x20] sm:$0xff]
        %v451 = vld [vmem:[%s4 + $0x28] sm:$0xff]
        %v452 = vld [vmem:[%s4 + $0x30] sm:$0xff]
        %v453 = vld [vmem:[%s4 + $0x38] sm:$0xff]
        %v454 = vld [vmem:[%s4 + $0x40] sm:$0xff]
        %v455 = vld [vmem:[%s4 + $0x48] sm:$0xff]
        %v456 = vld [vmem:[%s4 + $0x50] sm:$0xff]
        %v457 = vld [vmem:[%s4 + $0x58] sm:$0xff]
        %v458 = vld [vmem:[%s4 + $0x60] sm:$0xff]
        %v459 = vld [vmem:[%s4 + $0x68] sm:$0xff]
        %v460 = vld [vmem:[%s4 + $0x70] sm:$0xff]
        %v461 = vld [vmem:[%s4 + $0x78] sm:$0xff]
        %463 = vset.pattern.permute.xlu0 0
        %464 = vperm.xlu0 %463, %v446
        %v465 = vpop.permute.xlu0 %464
        %468 = vset.pattern.permute.xlu0 0
        %469 = vperm.xlu0 %468, %v447
        %v470 = vpop.permute.xlu0 %469
        %473 = vset.pattern.permute.xlu0 0
        %474 = vperm.xlu0 %473, %v448
        %v475 = vpop.permute.xlu0 %474
        %478 = vset.pattern.permute.xlu0 0
        %479 = vperm.xlu0 %478, %v449
        %v480 = vpop.permute.xlu0 %479
        %483 = vset.pattern.permute.xlu0 0
        %484 = vperm.xlu0 %483, %v450
        %v485 = vpop.permute.xlu0 %484
        %488 = vset.pattern.permute.xlu0 0
        %489 = vperm.xlu0 %488, %v451
        %v490 = vpop.permute.xlu0 %489
        %493 = vset.pattern.permute.xlu0 0
        %494 = vperm.xlu0 %493, %v452
        %v495 = vpop.permute.xlu0 %494
        %498 = vset.pattern.permute.xlu0 0
        %499 = vperm.xlu0 %498, %v453
        %v500 = vpop.permute.xlu0 %499
        %503 = vset.pattern.permute.xlu0 0
        %504 = vperm.xlu0 %503, %v454
        %v505 = vpop.permute.xlu0 %504
        %508 = vset.pattern.permute.xlu0 0
        %509 = vperm.xlu0 %508, %v455
        %v510 = vpop.permute.xlu0 %509
        %513 = vset.pattern.permute.xlu0 0
        %514 = vperm.xlu0 %513, %v456
        %v515 = vpop.permute.xlu0 %514
        %518 = vset.pattern.permute.xlu0 0
        %519 = vperm.xlu0 %518, %v457
        %v520 = vpop.permute.xlu0 %519
        %523 = vset.pattern.permute.xlu0 0
        %524 = vperm.xlu0 %523, %v458
        %v525 = vpop.permute.xlu0 %524
        %528 = vset.pattern.permute.xlu0 0
        %529 = vperm.xlu0 %528, %v459
        %v530 = vpop.permute.xlu0 %529
        %533 = vset.pattern.permute.xlu0 0
        %534 = vperm.xlu0 %533, %v460
        %v535 = vpop.permute.xlu0 %534
        %538 = vset.pattern.permute.xlu0 0
        %539 = vperm.xlu0 %538, %v461
        %v540 = vpop.permute.xlu0 %539
        %vm542 = vcmask 523264
        %v544 = vsel %vm542, %v430, 0
        %v547 = vsel %vm542, %v431, 0
        %v550 = vsel %vm542, %v432, 0
        %v553 = vsel %vm542, %v433, 0
        %v556 = vsel %vm542, %v434, 0
        %v559 = vsel %vm542, %v435, 0
        %v562 = vsel %vm542, %v436, 0
        %v565 = vsel %vm542, %v437, 0
        %v568 = vsel %vm542, %v438, 0
        %v571 = vsel %vm542, %v439, 0
        %v574 = vsel %vm542, %v440, 0
        %v577 = vsel %vm542, %v441, 0
        %v580 = vsel %vm542, %v442, 0
        %v583 = vsel %vm542, %v443, 0
        %v586 = vsel %vm542, %v444, 0
        %v589 = vsel %vm542, %v445, 0
        %591 = vmatprep.subr.mxu0 %v415
        %592 = vmatpush1.msra.mxu0 %v414
        %593 = vmatprep.subr.mxu0 %v417
        %594 = vmatpush1.msra.mxu0 %v416
        %595 = vmatprep.subr.mxu0 %v419
        %596 = vmatpush1.msra.mxu0 %v418
        %597 = vmatprep.subr.mxu0 %v421
        %598 = vmatpush1.msra.mxu0 %v420
        %599 = vmatprep.subr.mxu0 %v423
        %600 = vmatpush1.msra.mxu0 %v422
        %601 = vmatprep.subr.mxu0 %v425
        %602 = vmatpush1.msra.mxu0 %v424
        %603 = vmatprep.subr.mxu0 %v427
        %604 = vmatpush1.msra.mxu0 %v426
        %605 = vmatprep.subr.mxu0 %v429
        %606 = vmatpush1.msra.mxu0 %v428
        %607 = vmatprep.subr.mxu0 0.0
        %608 = vmatpush1.msra.mxu0 0.0
        %609 = vmatprep.subr.mxu0 0.0
        %610 = vmatpush1.msra.mxu0 0.0
        %611 = vmatprep.subr.mxu0 0.0
        %612 = vmatpush1.msra.mxu0 0.0
        %613 = vmatprep.subr.mxu0 0.0
        %614 = vmatpush1.msra.mxu0 0.0
        %615 = vmatprep.subr.mxu0 0.0
        %616 = vmatpush1.msra.mxu0 0.0
        %617 = vmatprep.subr.mxu0 0.0
        %618 = vmatpush1.msra.mxu0 0.0
        %619 = vmatprep.subr.mxu0 0.0
        %620 = vmatpush1.msra.mxu0 0.0
        %621 = vmatprep.subr.mxu0 0.0
        %622 = vmatpush1.msra.mxu0 0.0
        %623 = vmatprep.subr.mxu0 0.0
        %624 = vmatpush1.msra.mxu0 0.0
        %625 = vmatprep.subr.mxu0 0.0
        %626 = vmatpush1.msra.mxu0 0.0
        %627 = vmatprep.subr.mxu0 0.0
        %628 = vmatpush1.msra.mxu0 0.0
        %629 = vmatprep.subr.mxu0 0.0
        %630 = vmatpush1.msra.mxu0 0.0
        %631 = vmatprep.subr.mxu0 0.0
        %632 = vmatpush1.msra.mxu0 0.0
        %633 = vmatprep.subr.mxu0 0.0
        %634 = vmatpush1.msra.mxu0 0.0
        %635 = vmatprep.subr.mxu0 0.0
        %636 = vmatpush1.msra.mxu0 0.0
        %637 = vmatprep.subr.mxu0 0.0
        %638 = vmatpush1.msra.mxu0 0.0
        %639 = vmatprep.subr.mxu0 0.0
        %640 = vmatpush1.msra.mxu0 0.0
        %641 = vmatprep.subr.mxu0 0.0
        %642 = vmatpush1.msra.mxu0 0.0
        %643 = vmatprep.subr.mxu0 0.0
        %644 = vmatpush1.msra.mxu0 0.0
        %645 = vmatprep.subr.mxu0 0.0
        %646 = vmatpush1.msra.mxu0 0.0
        %647 = vmatprep.subr.mxu0 0.0
        %648 = vmatpush1.msra.mxu0 0.0
        %649 = vmatprep.subr.mxu0 0.0
        %650 = vmatpush1.msra.mxu0 0.0
        %651 = vmatprep.subr.mxu0 0.0
        %652 = vmatpush1.msra.mxu0 0.0
        %653 = vmatprep.subr.mxu0 0.0
        %654 = vmatpush1.msra.mxu0 0.0
        %655 = vmatprep.mubr.f32.mxu0 0.0
        %656 = vmatmul.mubr.f32.gmra.mrb[0].mxu0 %v544
        %v657 = vpop.f32.mrb[0].mxu0
        %v658 = vadd.f32 %v465, %v657
        %v659 = vpop.f32.mrb[0].mxu0
        %v660 = vadd.f32 %v465, %v659
        %661 = vmatprep.mubr.f32.mxu0 0.0
        %662 = vmatmul.mubr.f32.gmra.mrb[0].mxu0 %v547
        %v663 = vpop.f32.mrb[0].mxu0
        %v664 = vadd.f32 %v470, %v663
        %v665 = vpop.f32.mrb[0].mxu0
        %v666 = vadd.f32 %v470, %v665
        %667 = vmatprep.mubr.f32.mxu0 0.0
        %668 = vmatmul.mubr.f32.gmra.mrb[0].mxu0 %v550
        %v669 = vpop.f32.mrb[0].mxu0
        %v670 = vadd.f32 %v475, %v669
        %v671 = vpop.f32.mrb[0].mxu0
        %v672 = vadd.f32 %v475, %v671
        %673 = vmatprep.mubr.f32.mxu0 0.0
        %674 = vmatmul.mubr.f32.gmra.mrb[0].mxu0 %v553
        %v675 = vpop.f32.mrb[0].mxu0
        %v676 = vadd.f32 %v480, %v675
        %v677 = vpop.f32.mrb[0].mxu0
        %v678 = vadd.f32 %v480, %v677
        %679 = vmatprep.mubr.f32.mxu0 0.0
        %680 = vmatmul.mubr.f32.gmra.mrb[0].mxu0 %v556
        %v681 = vpop.f32.mrb[0].mxu0
        %v682 = vadd.f32 %v485, %v681
        %v683 = vpop.f32.mrb[0].mxu0
        %v684 = vadd.f32 %v485, %v683
        %685 = vmatprep.mubr.f32.mxu0 0.0
        %686 = vmatmul.mubr.f32.gmra.mrb[0].mxu0 %v559
        %v687 = vpop.f32.mrb[0].mxu0
        %v688 = vadd.f32 %v490, %v687
        %v689 = vpop.f32.mrb[0].mxu0
        %v690 = vadd.f32 %v490, %v689
        %691 = vmatprep.mubr.f32.mxu0 0.0
        %692 = vmatmul.mubr.f32.gmra.mrb[0].mxu0 %v562
        %v693 = vpop.f32.mrb[0].mxu0
        %v694 = vadd.f32 %v495, %v693
        %v695 = vpop.f32.mrb[0].mxu0
        %v696 = vadd.f32 %v495, %v695
        %697 = vmatprep.mubr.f32.mxu0 0.0
        %698 = vmatmul.mubr.f32.gmra.mrb[0].mxu0 %v565
        %v699 = vpop.f32.mrb[0].mxu0
        %v700 = vadd.f32 %v500, %v699
        %v701 = vpop.f32.mrb[0].mxu0
        %v702 = vadd.f32 %v500, %v701
        %703 = vmatprep.mubr.f32.mxu0 0.0
        %704 = vmatmul.mubr.f32.gmra.mrb[0].mxu0 %v568
        %v705 = vpop.f32.mrb[0].mxu0
        %v706 = vadd.f32 %v505, %v705
        %v707 = vpop.f32.mrb[0].mxu0
        %v708 = vadd.f32 %v505, %v707
        %709 = vmatprep.mubr.f32.mxu0 0.0
        %710 = vmatmul.mubr.f32.gmra.mrb[0].mxu0 %v571
        %v711 = vpop.f32.mrb[0].mxu0
        %v712 = vadd.f32 %v510, %v711
        %v713 = vpop.f32.mrb[0].mxu0
        %v714 = vadd.f32 %v510, %v713
        %715 = vmatprep.mubr.f32.mxu0 0.0
        %716 = vmatmul.mubr.f32.gmra.mrb[0].mxu0 %v574
        %v717 = vpop.f32.mrb[0].mxu0
        %v718 = vadd.f32 %v515, %v717
        %v719 = vpop.f32.mrb[0].mxu0
        %v720 = vadd.f32 %v515, %v719
        %721 = vmatprep.mubr.f32.mxu0 0.0
        %722 = vmatmul.mubr.f32.gmra.mrb[0].mxu0 %v577
        %v723 = vpop.f32.mrb[0].mxu0
        %v724 = vadd.f32 %v520, %v723
        %v725 = vpop.f32.mrb[0].mxu0
        %v726 = vadd.f32 %v520, %v725
        %727 = vmatprep.mubr.f32.mxu0 0.0
        %728 = vmatmul.mubr.f32.gmra.mrb[0].mxu0 %v580
        %v729 = vpop.f32.mrb[0].mxu0
        %v730 = vadd.f32 %v525, %v729
        %v731 = vpop.f32.mrb[0].mxu0
        %v732 = vadd.f32 %v525, %v731
        %733 = vmatprep.mubr.f32.mxu0 0.0
        %734 = vmatmul.mubr.f32.gmra.mrb[0].mxu0 %v583
        %v735 = vpop.f32.mrb[0].mxu0
        %v736 = vadd.f32 %v530, %v735
        %v737 = vpop.f32.mrb[0].mxu0
        %v738 = vadd.f32 %v530, %v737
        %739 = vmatprep.mubr.f32.mxu0 0.0
        %740 = vmatmul.mubr.f32.gmra.mrb[0].mxu0 %v586
        %v741 = vpop.f32.mrb[0].mxu0
        %v742 = vadd.f32 %v535, %v741
        %v743 = vpop.f32.mrb[0].mxu0
        %v744 = vadd.f32 %v535, %v743
        %745 = vmatprep.mubr.f32.mxu0 0.0
        %746 = vmatmul.mubr.f32.gmra.mrb[0].mxu0 %v589
        %v747 = vpop.f32.mrb[0].mxu0
        %v748 = vadd.f32 %v540, %v747
        %v749 = vpop.f32.mrb[0].mxu0
        %v750 = vadd.f32 %v540, %v749
        %751 = vdwg.mxu0
        %v752 = vmax.f32 %v658, 0.0
        %v753 = vmax.f32 %v660, 0.0
        %v754 = vmax.f32 %v664, 0.0
        %v755 = vmax.f32 %v666, 0.0
        %v756 = vmax.f32 %v670, 0.0
        %v757 = vmax.f32 %v672, 0.0
        %v758 = vmax.f32 %v676, 0.0
        %v759 = vmax.f32 %v678, 0.0
        %v760 = vmax.f32 %v682, 0.0
        %v761 = vmax.f32 %v684, 0.0
        %v762 = vmax.f32 %v688, 0.0
        %v763 = vmax.f32 %v690, 0.0
        %v764 = vmax.f32 %v694, 0.0
        %v765 = vmax.f32 %v696, 0.0
        %v766 = vmax.f32 %v700, 0.0
        %v767 = vmax.f32 %v702, 0.0
        %v768 = vmax.f32 %v706, 0.0
        %v769 = vmax.f32 %v708, 0.0
        %v770 = vmax.f32 %v712, 0.0
        %v771 = vmax.f32 %v714, 0.0
        %v772 = vmax.f32 %v718, 0.0
        %v773 = vmax.f32 %v720, 0.0
        %v774 = vmax.f32 %v724, 0.0
        %v775 = vmax.f32 %v726, 0.0
        %v776 = vmax.f32 %v730, 0.0
        %v777 = vmax.f32 %v732, 0.0
        %v778 = vmax.f32 %v736, 0.0
        %v779 = vmax.f32 %v738, 0.0
        %v780 = vmax.f32 %v742, 0.0
        %v781 = vmax.f32 %v744, 0.0
        %v782 = vmax.f32 %v748, 0.0
        %v783 = vmax.f32 %v750, 0.0
        %vm784 = vcmask 138240
        %785 = vst.msk [vmem:[#allocation2] sm:$0xff] %vm784, 0.0
        %786 = vst.msk [vmem:[#allocation2 + $0x18] sm:$0xff] %vm784, 0.0
        %787 = vst.msk [vmem:[#allocation2 + $0x30] sm:$0xff] %vm784, 0.0
        %788 = vst.msk [vmem:[#allocation2 + $0x48] sm:$0xff] %vm784, 0.0
        %789 = vst.msk [vmem:[#allocation2 + $0x60] sm:$0xff] %vm784, 0.0
        %790 = vst.msk [vmem:[#allocation2 + $0x78] sm:$0xff] %vm784, 0.0
        %791 = vst.msk [vmem:[#allocation2 + $0x90] sm:$0xff] %vm784, 0.0
        %792 = vst.msk [vmem:[#allocation2 + $0xa8] sm:$0xff] %vm784, 0.0
        %793 = vst.msk [vmem:[#allocation2 + $0xc0] sm:$0xff] %vm784, 0.0
        %794 = vst.msk [vmem:[#allocation2 + $0xd8] sm:$0xff] %vm784, 0.0
        %795 = vst.msk [vmem:[#allocation2 + $0xf0] sm:$0xff] %vm784, 0.0
        %796 = vst.msk [vmem:[#allocation2 + $0x108] sm:$0xff] %vm784, 0.0
        %797 = vst.msk [vmem:[#allocation2 + $0x120] sm:$0xff] %vm784, 0.0
        %798 = vst.msk [vmem:[#allocation2 + $0x138] sm:$0xff] %vm784, 0.0
        %799 = vst.msk [vmem:[#allocation2 + $0x150] sm:$0xff] %vm784, 0.0
        %800 = vst.msk [vmem:[#allocation2 + $0x168] sm:$0xff] %vm784, 0.0
        %vm801 = vcmask 277640
        %802 = vst.msk [vmem:[#allocation2 + $0x10] sm:$0xff] %vm801, 0.0
        %803 = vst.msk [vmem:[#allocation2 + $0x28] sm:$0xff] %vm801, 0.0
        %804 = vst.msk [vmem:[#allocation2 + $0x40] sm:$0xff] %vm801, 0.0
        %805 = vst.msk [vmem:[#allocation2 + $0x58] sm:$0xff] %vm801, 0.0
        %806 = vst.msk [vmem:[#allocation2 + $0x70] sm:$0xff] %vm801, 0.0
        %807 = vst.msk [vmem:[#allocation2 + $0x88] sm:$0xff] %vm801, 0.0
        %808 = vst.msk [vmem:[#allocation2 + $0xa0] sm:$0xff] %vm801, 0.0
        %809 = vst.msk [vmem:[#allocation2 + $0xb8] sm:$0xff] %vm801, 0.0
        %810 = vst.msk [vmem:[#allocation2 + $0xd0] sm:$0xff] %vm801, 0.0
        %811 = vst.msk [vmem:[#allocation2 + $0xe8] sm:$0xff] %vm801, 0.0
        %812 = vst.msk [vmem:[#allocation2 + $0x100] sm:$0xff] %vm801, 0.0
        %813 = vst.msk [vmem:[#allocation2 + $0x118] sm:$0xff] %vm801, 0.0
        %814 = vst.msk [vmem:[#allocation2 + $0x130] sm:$0xff] %vm801, 0.0
        %815 = vst.msk [vmem:[#allocation2 + $0x148] sm:$0xff] %vm801, 0.0
        %816 = vst.msk [vmem:[#allocation2 + $0x160] sm:$0xff] %vm801, 0.0
        %817 = vst.msk [vmem:[#allocation2 + $0x178] sm:$0xff] %vm801, 0.0
        %850 = vrot.lane.b32.xlu0 %v752, 17
        %v851 = vpop.permute.xlu0 %850
        %852 = vrot.lane.b32.xlu0 %v753, 17
        %v853 = vpop.permute.xlu0 %852
        %854 = vrot.lane.b32.xlu0 %v754, 17
        %v855 = vpop.permute.xlu0 %854
        %856 = vrot.lane.b32.xlu0 %v755, 17
        %v857 = vpop.permute.xlu0 %856
        %858 = vrot.lane.b32.xlu0 %v756, 17
        %v859 = vpop.permute.xlu0 %858
        %860 = vrot.lane.b32.xlu0 %v757, 17
        %v861 = vpop.permute.xlu0 %860
        %862 = vrot.lane.b32.xlu0 %v758, 17
        %v863 = vpop.permute.xlu0 %862
        %864 = vrot.lane.b32.xlu0 %v759, 17
        %v865 = vpop.permute.xlu0 %864
        %866 = vrot.lane.b32.xlu0 %v760, 17
        %v867 = vpop.permute.xlu0 %866
        %868 = vrot.lane.b32.xlu0 %v761, 17
        %v869 = vpop.permute.xlu0 %868
        %870 = vrot.lane.b32.xlu0 %v762, 17
        %v871 = vpop.permute.xlu0 %870
        %872 = vrot.lane.b32.xlu0 %v763, 17
        %v873 = vpop.permute.xlu0 %872
        %874 = vrot.lane.b32.xlu0 %v764, 17
        %v875 = vpop.permute.xlu0 %874
        %876 = vrot.lane.b32.xlu0 %v765, 17
        %v877 = vpop.permute.xlu0 %876
        %878 = vrot.lane.b32.xlu0 %v766, 17
        %v879 = vpop.permute.xlu0 %878
        %880 = vrot.lane.b32.xlu0 %v767, 17
        %v881 = vpop.permute.xlu0 %880
        %882 = vrot.lane.b32.xlu0 %v768, 17
        %v883 = vpop.permute.xlu0 %882
        %884 = vrot.lane.b32.xlu0 %v769, 17
        %v885 = vpop.permute.xlu0 %884
        %886 = vrot.lane.b32.xlu0 %v770, 17
        %v887 = vpop.permute.xlu0 %886
        %888 = vrot.lane.b32.xlu0 %v771, 17
        %v889 = vpop.permute.xlu0 %888
        %890 = vrot.lane.b32.xlu0 %v772, 17
        %v891 = vpop.permute.xlu0 %890
        %892 = vrot.lane.b32.xlu0 %v773, 17
        %v893 = vpop.permute.xlu0 %892
        %894 = vrot.lane.b32.xlu0 %v774, 17
        %v895 = vpop.permute.xlu0 %894
        %896 = vrot.lane.b32.xlu0 %v775, 17
        %v897 = vpop.permute.xlu0 %896
        %898 = vrot.lane.b32.xlu0 %v776, 17
        %v899 = vpop.permute.xlu0 %898
        %900 = vrot.lane.b32.xlu0 %v777, 17
        %v901 = vpop.permute.xlu0 %900
        %902 = vrot.lane.b32.xlu0 %v778, 17
        %v903 = vpop.permute.xlu0 %902
        %904 = vrot.lane.b32.xlu0 %v779, 17
        %v905 = vpop.permute.xlu0 %904
        %906 = vrot.lane.b32.xlu0 %v780, 17
        %v907 = vpop.permute.xlu0 %906
        %908 = vrot.lane.b32.xlu0 %v781, 17
        %v909 = vpop.permute.xlu0 %908
        %910 = vrot.lane.b32.xlu0 %v782, 17
        %v911 = vpop.permute.xlu0 %910
        %912 = vrot.lane.b32.xlu0 %v783, 17
        %v913 = vpop.permute.xlu0 %912
        %v914 = vsel %vm784, %v851, %v853
        %v915 = vsel %vm784, %v855, %v857
        %v916 = vsel %vm784, %v859, %v861
        %v917 = vsel %vm784, %v863, %v865
        %v918 = vsel %vm784, %v867, %v869
        %v919 = vsel %vm784, %v871, %v873
        %v920 = vsel %vm784, %v875, %v877
        %v921 = vsel %vm784, %v879, %v881
        %v922 = vsel %vm784, %v883, %v885
        %v923 = vsel %vm784, %v887, %v889
        %v924 = vsel %vm784, %v891, %v893
        %v925 = vsel %vm784, %v895, %v897
        %v926 = vsel %vm784, %v899, %v901
        %v927 = vsel %vm784, %v903, %v905
        %v928 = vsel %vm784, %v907, %v909
        %v929 = vsel %vm784, %v911, %v913
        %vm978 = vcmask 1047688
        %979 = vst.msk [vmem:[#allocation2] sm:$0xff] %vm978, %v851
        %980 = vst [vmem:[#allocation2 + $0x8] sm:$0xff] %v914
        %981 = vst.msk [vmem:[#allocation2 + $0x10] sm:$0xff] %vm784, %v853
        %982 = vst.msk [vmem:[#allocation2 + $0x18] sm:$0xff] %vm978, %v855
        %983 = vst [vmem:[#allocation2 + $0x20] sm:$0xff] %v915
        %984 = vst.msk [vmem:[#allocation2 + $0x28] sm:$0xff] %vm784, %v857
        %985 = vst.msk [vmem:[#allocation2 + $0x30] sm:$0xff] %vm978, %v859
        %986 = vst [vmem:[#allocation2 + $0x38] sm:$0xff] %v916
        %987 = vst.msk [vmem:[#allocation2 + $0x40] sm:$0xff] %vm784, %v861
        %988 = vst.msk [vmem:[#allocation2 + $0x48] sm:$0xff] %vm978, %v863
        %989 = vst [vmem:[#allocation2 + $0x50] sm:$0xff] %v917
        %990 = vst.msk [vmem:[#allocation2 + $0x58] sm:$0xff] %vm784, %v865
        %991 = vst.msk [vmem:[#allocation2 + $0x60] sm:$0xff] %vm978, %v867
        %992 = vst [vmem:[#allocation2 + $0x68] sm:$0xff] %v918
        %993 = vst.msk [vmem:[#allocation2 + $0x70] sm:$0xff] %vm784, %v869
        %994 = vst.msk [vmem:[#allocation2 + $0x78] sm:$0xff] %vm978, %v871
        %995 = vst [vmem:[#allocation2 + $0x80] sm:$0xff] %v919
        %996 = vst.msk [vmem:[#allocation2 + $0x88] sm:$0xff] %vm784, %v873
        %997 = vst.msk [vmem:[#allocation2 + $0x90] sm:$0xff] %vm978, %v875
        %998 = vst [vmem:[#allocation2 + $0x98] sm:$0xff] %v920
        %999 = vst.msk [vmem:[#allocation2 + $0xa0] sm:$0xff] %vm784, %v877
        %1000 = vst.msk [vmem:[#allocation2 + $0xa8] sm:$0xff] %vm978, %v879
        %1001 = vst [vmem:[#allocation2 + $0xb0] sm:$0xff] %v921
        %1002 = vst.msk [vmem:[#allocation2 + $0xb8] sm:$0xff] %vm784, %v881
        %1003 = vst.msk [vmem:[#allocation2 + $0xc0] sm:$0xff] %vm978, %v883
        %1004 = vst [vmem:[#allocation2 + $0xc8] sm:$0xff] %v922
        %1005 = vst.msk [vmem:[#allocation2 + $0xd0] sm:$0xff] %vm784, %v885
        %1006 = vst.msk [vmem:[#allocation2 + $0xd8] sm:$0xff] %vm978, %v887
        %1007 = vst [vmem:[#allocation2 + $0xe0] sm:$0xff] %v923
        %1008 = vst.msk [vmem:[#allocation2 + $0xe8] sm:$0xff] %vm784, %v889
        %1009 = vst.msk [vmem:[#allocation2 + $0xf0] sm:$0xff] %vm978, %v891
        %1010 = vst [vmem:[#allocation2 + $0xf8] sm:$0xff] %v924
        %1011 = vst.msk [vmem:[#allocation2 + $0x100] sm:$0xff] %vm784, %v893
        %1012 = vst.msk [vmem:[#allocation2 + $0x108] sm:$0xff] %vm978, %v895
        %1013 = vst [vmem:[#allocation2 + $0x110] sm:$0xff] %v925
        %1014 = vst.msk [vmem:[#allocation2 + $0x118] sm:$0xff] %vm784, %v897
        %1015 = vst.msk [vmem:[#allocation2 + $0x120] sm:$0xff] %vm978, %v899
        %1016 = vst [vmem:[#allocation2 + $0x128] sm:$0xff] %v926
        %1017 = vst.msk [vmem:[#allocation2 + $0x130] sm:$0xff] %vm784, %v901
        %1018 = vst.msk [vmem:[#allocation2 + $0x138] sm:$0xff] %vm978, %v903
        %1019 = vst [vmem:[#allocation2 + $0x140] sm:$0xff] %v927
        %1020 = vst.msk [vmem:[#allocation2 + $0x148] sm:$0xff] %vm784, %v905
        %1021 = vst.msk [vmem:[#allocation2 + $0x150] sm:$0xff] %vm978, %v907
        %1022 = vst [vmem:[#allocation2 + $0x158] sm:$0xff] %v928
        %1023 = vst.msk [vmem:[#allocation2 + $0x160] sm:$0xff] %vm784, %v909
        %1024 = vst.msk [vmem:[#allocation2 + $0x168] sm:$0xff] %vm978, %v911
        %1025 = vst [vmem:[#allocation2 + $0x170] sm:$0xff] %v929
        %1026 = vst.msk [vmem:[#allocation2 + $0x178] sm:$0xff] %vm784, %v913
        %v1027 = vlaneseq
        %v1028 = vand.u32 %v1027, 127
        %v1029 = vadd.s32 %v1028, 128
        %vm1030 = vcmp.lt.s32.totalorder %v1028, 0
        %v1031 = vsub.s32 0, %v1028
        %v1032 = vsel %vm1030, %v1031, %v1028
        %v1033 = vshrl.u32 %v1032, 4
        %v1034 = vand.u32 %v1032, 15
        %v1035 = vsub.s32 0, %v1034
        %v1036 = vsel %vm1030, %v1035, %v1034
        %vm1037 = vcmp.lt.s32.totalorder %v1029, 0
        %v1038 = vsub.s32 0, %v1029
        %v1039 = vsel %vm1037, %v1038, %v1029
        %v1040 = vshrl.u32 %v1039, 4
        %v1041 = vand.u32 %v1039, 15
        %v1042 = vsub.s32 0, %v1041
        %v1043 = vsel %vm1037, %v1042, %v1041
        %vm1044 = vcmp.ne.s32.totalorder %v1036, 0
        %vm1045 = vcmp.ne.s32.totalorder %v1043, 0
        %vm1046 = vcmp.lt.s32.totalorder %v1036, 0
        %vm1047 = vcmp.lt.s32.totalorder %v1043, 0
        %vm1048 = vmand %vm1046, %vm1044
        %vm1049 = vmand %vm1047, %vm1045
        %v1050 = vadd.s32 %v1036, 16
        %v1051 = vadd.s32 %v1043, 16
        %v1052 = vsel %vm1048, %v1050, %v1036
        %v1053 = vsel %vm1049, %v1051, %v1043
        %vm1054 = vcmp.ne.s32.totalorder %v1052, 0
        %vm1055 = vcmp.ne.s32.totalorder %v1053, 0
        %vm1056 = vcmp.ne.s32.totalorder %v1052, 15
        %vm1057 = vcmp.ne.s32.totalorder %v1053, 15
        %v1058 = vld [vmem:[#allocation2] sm:$0xff]
        %v1059 = vld [vmem:[#allocation2 + $0x8] sm:$0xff]
        %v1060 = vld [vmem:[#allocation2 + $0x18] sm:$0xff]
        %v1061 = vld [vmem:[#allocation2 + $0x20] sm:$0xff]
        %v1062 = vld [vmem:[#allocation2 + $0x30] sm:$0xff]
        %v1063 = vld [vmem:[#allocation2 + $0x38] sm:$0xff]
        %v1064 = vld [vmem:[#allocation2 + $0x48] sm:$0xff]
        %v1065 = vld [vmem:[#allocation2 + $0x50] sm:$0xff]
        %v1066 = vld [vmem:[#allocation2 + $0x60] sm:$0xff]
        %v1067 = vld [vmem:[#allocation2 + $0x68] sm:$0xff]
        %v1068 = vld [vmem:[#allocation2 + $0x78] sm:$0xff]
        %v1069 = vld [vmem:[#allocation2 + $0x80] sm:$0xff]
        %v1070 = vld [vmem:[#allocation2 + $0x90] sm:$0xff]
        %v1071 = vld [vmem:[#allocation2 + $0x98] sm:$0xff]
        %v1072 = vld [vmem:[#allocation2 + $0xa8] sm:$0xff]
        %v1073 = vld [vmem:[#allocation2 + $0xb0] sm:$0xff]
        %v1074 = vld [vmem:[#allocation2 + $0xc0] sm:$0xff]
        %v1075 = vld [vmem:[#allocation2 + $0xc8] sm:$0xff]
        %v1076 = vld [vmem:[#allocation2 + $0xd8] sm:$0xff]
        %v1077 = vld [vmem:[#allocation2 + $0xe0] sm:$0xff]
        %v1078 = vld [vmem:[#allocation2 + $0xf0] sm:$0xff]
        %v1079 = vld [vmem:[#allocation2 + $0xf8] sm:$0xff]
        %v1080 = vld [vmem:[#allocation2 + $0x108] sm:$0xff]
        %v1081 = vld [vmem:[#allocation2 + $0x110] sm:$0xff]
        %v1082 = vld [vmem:[#allocation2 + $0x120] sm:$0xff]
        %v1083 = vld [vmem:[#allocation2 + $0x128] sm:$0xff]
        %v1084 = vld [vmem:[#allocation2 + $0x138] sm:$0xff]
        %v1085 = vld [vmem:[#allocation2 + $0x140] sm:$0xff]
        %v1086 = vld [vmem:[#allocation2 + $0x150] sm:$0xff]
        %v1087 = vld [vmem:[#allocation2 + $0x158] sm:$0xff]
        %v1088 = vld [vmem:[#allocation2 + $0x168] sm:$0xff]
        %v1089 = vld [vmem:[#allocation2 + $0x170] sm:$0xff]
        %v1090 = vsel %vm1054, 1, 0
        %v1091 = vsel %vm1055, 1, 0
        %vm1092 = vcmp.eq.s32.totalorder %v1090, 1
        %vm1093 = vcmp.eq.s32.totalorder %v1091, 1
        %v1094 = vsel %vm1092, %v1058, 0.0
        %v1095 = vsel %vm1093, %v1059, 0.0
        %v1096 = vsel %vm1092, %v1060, 0.0
        %v1097 = vsel %vm1093, %v1061, 0.0
        %v1098 = vsel %vm1092, %v1062, 0.0
        %v1099 = vsel %vm1093, %v1063, 0.0
        %v1100 = vsel %vm1092, %v1064, 0.0
        %v1101 = vsel %vm1093, %v1065, 0.0
        %v1102 = vsel %vm1092, %v1066, 0.0
        %v1103 = vsel %vm1093, %v1067, 0.0
        %v1104 = vsel %vm1092, %v1068, 0.0
        %v1105 = vsel %vm1093, %v1069, 0.0
        %v1106 = vsel %vm1092, %v1070, 0.0
        %v1107 = vsel %vm1093, %v1071, 0.0
        %v1108 = vsel %vm1092, %v1072, 0.0
        %v1109 = vsel %vm1093, %v1073, 0.0
        %v1110 = vsel %vm1092, %v1074, 0.0
        %v1111 = vsel %vm1093, %v1075, 0.0
        %v1112 = vsel %vm1092, %v1076, 0.0
        %v1113 = vsel %vm1093, %v1077, 0.0
        %v1114 = vsel %vm1092, %v1078, 0.0
        %v1115 = vsel %vm1093, %v1079, 0.0
        %v1116 = vsel %vm1092, %v1080, 0.0
        %v1117 = vsel %vm1093, %v1081, 0.0
        %v1118 = vsel %vm1092, %v1082, 0.0
        %v1119 = vsel %vm1093, %v1083, 0.0
        %v1120 = vsel %vm1092, %v1084, 0.0
        %v1121 = vsel %vm1093, %v1085, 0.0
        %v1122 = vsel %vm1092, %v1086, 0.0
        %v1123 = vsel %vm1093, %v1087, 0.0
        %v1124 = vsel %vm1092, %v1088, 0.0
        %v1125 = vsel %vm1093, %v1089, 0.0
        %v1126 = vld [vmem:[%s5] sm:$0xff]
        %v1127 = vld [vmem:[%s5 + $0x8] sm:$0xff]
        %v1128 = vld [vmem:[%s5 + $0x10] sm:$0xff]
        %v1129 = vld [vmem:[%s5 + $0x18] sm:$0xff]
        %v1130 = vld [vmem:[#allocation2 + $0x10] sm:$0xff]
        %v1131 = vld [vmem:[#allocation2 + $0x28] sm:$0xff]
        %v1132 = vld [vmem:[#allocation2 + $0x40] sm:$0xff]
        %v1133 = vld [vmem:[#allocation2 + $0x58] sm:$0xff]
        %v1134 = vld [vmem:[#allocation2 + $0x70] sm:$0xff]
        %v1135 = vld [vmem:[#allocation2 + $0x88] sm:$0xff]
        %v1136 = vld [vmem:[#allocation2 + $0xa0] sm:$0xff]
        %v1137 = vld [vmem:[#allocation2 + $0xb8] sm:$0xff]
        %v1138 = vld [vmem:[#allocation2 + $0xd0] sm:$0xff]
        %v1139 = vld [vmem:[#allocation2 + $0xe8] sm:$0xff]
        %v1140 = vld [vmem:[#allocation2 + $0x100] sm:$0xff]
        %v1141 = vld [vmem:[#allocation2 + $0x118] sm:$0xff]
        %v1142 = vld [vmem:[#allocation2 + $0x130] sm:$0xff]
        %v1143 = vld [vmem:[#allocation2 + $0x148] sm:$0xff]
        %v1144 = vld [vmem:[#allocation2 + $0x160] sm:$0xff]
        %v1145 = vld [vmem:[#allocation2 + $0x178] sm:$0xff]
        %s1146 = scalar_lea.vmem %s5, 32
        %v1147 = vld [vmem:[%s1146] sm:$0xff]
        %v1148 = vld [vmem:[%s1146 + $0x8] sm:$0xff]
        %v1149 = vld [vmem:[%s1146 + $0x10] sm:$0xff]
        %v1150 = vld [vmem:[%s1146 + $0x18] sm:$0xff]
        %1199 = vrot.lane.b32.xlu0 %v1058, 127
        %v1200 = vpop.permute.xlu0 %1199
        %1201 = vrot.lane.b32.xlu0 %v1059, 127
        %v1202 = vpop.permute.xlu0 %1201
        %1203 = vrot.lane.b32.xlu0 %v1130, 127
        %v1204 = vpop.permute.xlu0 %1203
        %1205 = vrot.lane.b32.xlu0 %v1060, 127
        %v1206 = vpop.permute.xlu0 %1205
        %1207 = vrot.lane.b32.xlu0 %v1061, 127
        %v1208 = vpop.permute.xlu0 %1207
        %1209 = vrot.lane.b32.xlu0 %v1131, 127
        %v1210 = vpop.permute.xlu0 %1209
        %1211 = vrot.lane.b32.xlu0 %v1062, 127
        %v1212 = vpop.permute.xlu0 %1211
        %1213 = vrot.lane.b32.xlu0 %v1063, 127
        %v1214 = vpop.permute.xlu0 %1213
        %1215 = vrot.lane.b32.xlu0 %v1132, 127
        %v1216 = vpop.permute.xlu0 %1215
        %1217 = vrot.lane.b32.xlu0 %v1064, 127
        %v1218 = vpop.permute.xlu0 %1217
        %1219 = vrot.lane.b32.xlu0 %v1065, 127
        %v1220 = vpop.permute.xlu0 %1219
        %1221 = vrot.lane.b32.xlu0 %v1133, 127
        %v1222 = vpop.permute.xlu0 %1221
        %1223 = vrot.lane.b32.xlu0 %v1066, 127
        %v1224 = vpop.permute.xlu0 %1223
        %1225 = vrot.lane.b32.xlu0 %v1067, 127
        %v1226 = vpop.permute.xlu0 %1225
        %1227 = vrot.lane.b32.xlu0 %v1134, 127
        %v1228 = vpop.permute.xlu0 %1227
        %1229 = vrot.lane.b32.xlu0 %v1068, 127
        %v1230 = vpop.permute.xlu0 %1229
        %1231 = vrot.lane.b32.xlu0 %v1069, 127
        %v1232 = vpop.permute.xlu0 %1231
        %1233 = vrot.lane.b32.xlu0 %v1135, 127
        %v1234 = vpop.permute.xlu0 %1233
        %1235 = vrot.lane.b32.xlu0 %v1070, 127
        %v1236 = vpop.permute.xlu0 %1235
        %1237 = vrot.lane.b32.xlu0 %v1071, 127
        %v1238 = vpop.permute.xlu0 %1237
        %1239 = vrot.lane.b32.xlu0 %v1136, 127
        %v1240 = vpop.permute.xlu0 %1239
        %1241 = vrot.lane.b32.xlu0 %v1072, 127
        %v1242 = vpop.permute.xlu0 %1241
        %1243 = vrot.lane.b32.xlu0 %v1073, 127
        %v1244 = vpop.permute.xlu0 %1243
        %1245 = vrot.lane.b32.xlu0 %v1137, 127
        %v1246 = vpop.permute.xlu0 %1245
        %1247 = vrot.lane.b32.xlu0 %v1074, 127
        %v1248 = vpop.permute.xlu0 %1247
        %1249 = vrot.lane.b32.xlu0 %v1075, 127
        %v1250 = vpop.permute.xlu0 %1249
        %1251 = vrot.lane.b32.xlu0 %v1138, 127
        %v1252 = vpop.permute.xlu0 %1251
        %1253 = vrot.lane.b32.xlu0 %v1076, 127
        %v1254 = vpop.permute.xlu0 %1253
        %1255 = vrot.lane.b32.xlu0 %v1077, 127
        %v1256 = vpop.permute.xlu0 %1255
        %1257 = vrot.lane.b32.xlu0 %v1139, 127
        %v1258 = vpop.permute.xlu0 %1257
        %1259 = vrot.lane.b32.xlu0 %v1078, 127
        %v1260 = vpop.permute.xlu0 %1259
        %1261 = vrot.lane.b32.xlu0 %v1079, 127
        %v1262 = vpop.permute.xlu0 %1261
        %1263 = vrot.lane.b32.xlu0 %v1140, 127
        %v1264 = vpop.permute.xlu0 %1263
        %1265 = vrot.lane.b32.xlu0 %v1080, 127
        %v1266 = vpop.permute.xlu0 %1265
        %1267 = vrot.lane.b32.xlu0 %v1081, 127
        %v1268 = vpop.permute.xlu0 %1267
        %1269 = vrot.lane.b32.xlu0 %v1141, 127
        %v1270 = vpop.permute.xlu0 %1269
        %1271 = vrot.lane.b32.xlu0 %v1082, 127
        %v1272 = vpop.permute.xlu0 %1271
        %1273 = vrot.lane.b32.xlu0 %v1083, 127
        %v1274 = vpop.permute.xlu0 %1273
        %1275 = vrot.lane.b32.xlu0 %v1142, 127
        %v1276 = vpop.permute.xlu0 %1275
        %1277 = vrot.lane.b32.xlu0 %v1084, 127
        %v1278 = vpop.permute.xlu0 %1277
        %1279 = vrot.lane.b32.xlu0 %v1085, 127
        %v1280 = vpop.permute.xlu0 %1279
        %1281 = vrot.lane.b32.xlu0 %v1143, 127
        %v1282 = vpop.permute.xlu0 %1281
        %1283 = vrot.lane.b32.xlu0 %v1086, 127
        %v1284 = vpop.permute.xlu0 %1283
        %1285 = vrot.lane.b32.xlu0 %v1087, 127
        %v1286 = vpop.permute.xlu0 %1285
        %1287 = vrot.lane.b32.xlu0 %v1144, 127
        %v1288 = vpop.permute.xlu0 %1287
        %1289 = vrot.lane.b32.xlu0 %v1088, 127
        %v1290 = vpop.permute.xlu0 %1289
        %1291 = vrot.lane.b32.xlu0 %v1089, 127
        %v1292 = vpop.permute.xlu0 %1291
        %1293 = vrot.lane.b32.xlu0 %v1145, 127
        %v1294 = vpop.permute.xlu0 %1293
        %vm1295 = vcmask 1039360
        %v1296 = vsel %vm1295, %v1200, %v1202
        %v1297 = vsel %vm1295, %v1202, %v1204
        %v1298 = vsel %vm1295, %v1206, %v1208
        %v1299 = vsel %vm1295, %v1208, %v1210
        %v1300 = vsel %vm1295, %v1212, %v1214
        %v1301 = vsel %vm1295, %v1214, %v1216
        %v1302 = vsel %vm1295, %v1218, %v1220
        %v1303 = vsel %vm1295, %v1220, %v1222
        %v1304 = vsel %vm1295, %v1224, %v1226
        %v1305 = vsel %vm1295, %v1226, %v1228
        %v1306 = vsel %vm1295, %v1230, %v1232
        %v1307 = vsel %vm1295, %v1232, %v1234
        %v1308 = vsel %vm1295, %v1236, %v1238
        %v1309 = vsel %vm1295, %v1238, %v1240
        %v1310 = vsel %vm1295, %v1242, %v1244
        %v1311 = vsel %vm1295, %v1244, %v1246
        %v1312 = vsel %vm1295, %v1248, %v1250
        %v1313 = vsel %vm1295, %v1250, %v1252
        %v1314 = vsel %vm1295, %v1254, %v1256
        %v1315 = vsel %vm1295, %v1256, %v1258
        %v1316 = vsel %vm1295, %v1260, %v1262
        %v1317 = vsel %vm1295, %v1262, %v1264
        %v1318 = vsel %vm1295, %v1266, %v1268
        %v1319 = vsel %vm1295, %v1268, %v1270
        %v1320 = vsel %vm1295, %v1272, %v1274
        %v1321 = vsel %vm1295, %v1274, %v1276
        %v1322 = vsel %vm1295, %v1278, %v1280
        %v1323 = vsel %vm1295, %v1280, %v1282
        %v1324 = vsel %vm1295, %v1284, %v1286
        %v1325 = vsel %vm1295, %v1286, %v1288
        %v1326 = vsel %vm1295, %v1290, %v1292
        %v1327 = vsel %vm1295, %v1292, %v1294
        %1360 = vmatprep.subr.mxu0 %v1297
        %1361 = vmatpush1.msra.mxu0 %v1296
        %1362 = vmatprep.subr.mxu0 %v1299
        %1363 = vmatpush1.msra.mxu0 %v1298
        %1364 = vmatprep.subr.mxu0 %v1301
        %1365 = vmatpush1.msra.mxu0 %v1300
        %1366 = vmatprep.subr.mxu0 %v1303
        %1367 = vmatpush1.msra.mxu0 %v1302
        %1368 = vmatprep.subr.mxu0 %v1305
        %1369 = vmatpush1.msra.mxu0 %v1304
        %1370 = vmatprep.subr.mxu0 %v1307
        %1371 = vmatpush1.msra.mxu0 %v1306
        %1372 = vmatprep.subr.mxu0 %v1309
        %1373 = vmatpush1.msra.mxu0 %v1308
        %1374 = vmatprep.subr.mxu0 %v1311
        %1375 = vmatpush1.msra.mxu0 %v1310
        %1376 = vmatprep.subr.mxu0 %v1313
        %1377 = vmatpush1.msra.mxu0 %v1312
        %1378 = vmatprep.subr.mxu0 %v1315
        %1379 = vmatpush1.msra.mxu0 %v1314
        %1380 = vmatprep.subr.mxu0 %v1317
        %1381 = vmatpush1.msra.mxu0 %v1316
        %1382 = vmatprep.subr.mxu0 %v1319
        %1383 = vmatpush1.msra.mxu0 %v1318
        %1384 = vmatprep.subr.mxu0 %v1321
        %1385 = vmatpush1.msra.mxu0 %v1320
        %1386 = vmatprep.subr.mxu0 %v1323
        %1387 = vmatpush1.msra.mxu0 %v1322
        %1388 = vmatprep.subr.mxu0 %v1325
        %1389 = vmatpush1.msra.mxu0 %v1324
        %1390 = vmatprep.subr.mxu0 %v1327
        %1391 = vmatpush1.msra.mxu0 %v1326
        %1392 = vmatprep.subr.mxu0 0.0
        %1393 = vmatpush1.msra.mxu0 0.0
        %1394 = vmatprep.subr.mxu0 0.0
        %1395 = vmatpush1.msra.mxu0 0.0
        %1396 = vmatprep.subr.mxu0 0.0
        %1397 = vmatpush1.msra.mxu0 0.0
        %1398 = vmatprep.subr.mxu0 0.0
        %1399 = vmatpush1.msra.mxu0 0.0
        %1400 = vmatprep.subr.mxu0 0.0
        %1401 = vmatpush1.msra.mxu0 0.0
        %1402 = vmatprep.subr.mxu0 0.0
        %1403 = vmatpush1.msra.mxu0 0.0
        %1404 = vmatprep.subr.mxu0 0.0
        %1405 = vmatpush1.msra.mxu0 0.0
        %1406 = vmatprep.subr.mxu0 0.0
        %1407 = vmatpush1.msra.mxu0 0.0
        %1408 = vmatprep.subr.mxu0 0.0
        %1409 = vmatpush1.msra.mxu0 0.0
        %1410 = vmatprep.subr.mxu0 0.0
        %1411 = vmatpush1.msra.mxu0 0.0
        %1412 = vmatprep.subr.mxu0 0.0
        %1413 = vmatpush1.msra.mxu0 0.0
        %1414 = vmatprep.subr.mxu0 0.0
        %1415 = vmatpush1.msra.mxu0 0.0
        %1416 = vmatprep.subr.mxu0 0.0
        %1417 = vmatpush1.msra.mxu0 0.0
        %1418 = vmatprep.subr.mxu0 0.0
        %1419 = vmatpush1.msra.mxu0 0.0
        %1420 = vmatprep.subr.mxu0 0.0
        %1421 = vmatpush1.msra.mxu0 0.0
        %1422 = vmatprep.subr.mxu0 0.0
        %1423 = vmatpush1.msra.mxu0 0.0
        %1424 = vmatprep.mubr.f32.mxu0 0.0
        %1425 = vmatmul.mubr.f32.gmra.mrb[0].mxu0 %v1147
        %v1426 = vpop.f32.mrb[0].mxu0
        %v1427 = vadd.f32 0.0, %v1426
        %v1428 = vpop.f32.mrb[0].mxu0
        %v1429 = vadd.f32 0.0, %v1428
        %1430 = vmatprep.mubr.f32.mxu0 0.0
        %1431 = vmatmul.mubr.f32.gmra.mrb[0].mxu0 %v1148
        %v1432 = vpop.f32.mrb[0].mxu0
        %v1433 = vadd.f32 0.0, %v1432
        %v1434 = vpop.f32.mrb[0].mxu0
        %v1435 = vadd.f32 0.0, %v1434
        %1436 = vmatprep.mubr.f32.mxu0 0.0
        %1437 = vmatmul.mubr.f32.gmra.mrb[0].mxu0 %v1149
        %v1438 = vpop.f32.mrb[0].mxu0
        %v1439 = vadd.f32 0.0, %v1438
        %v1440 = vpop.f32.mrb[0].mxu0
        %v1441 = vadd.f32 0.0, %v1440
        %1442 = vmatprep.mubr.f32.mxu0 0.0
        %1443 = vmatmul.mubr.f32.gmra.mrb[0].mxu0 %v1150
        %v1444 = vpop.f32.mrb[0].mxu0
        %v1445 = vadd.f32 0.0, %v1444
        %v1446 = vpop.f32.mrb[0].mxu0
        %v1447 = vadd.f32 0.0, %v1446
        %1448 = vdwg.mxu0
        %1449 = vmatprep.subr.mxu0 %v1095
        %1450 = vmatpush1.msra.mxu0 %v1094
        %1451 = vmatprep.subr.mxu0 %v1097
        %1452 = vmatpush1.msra.mxu0 %v1096
        %1453 = vmatprep.subr.mxu0 %v1099
        %1454 = vmatpush1.msra.mxu0 %v1098
        %1455 = vmatprep.subr.mxu0 %v1101
        %1456 = vmatpush1.msra.mxu0 %v1100
        %1457 = vmatprep.subr.mxu0 %v1103
        %1458 = vmatpush1.msra.mxu0 %v1102
        %1459 = vmatprep.subr.mxu0 %v1105
        %1460 = vmatpush1.msra.mxu0 %v1104
        %1461 = vmatprep.subr.mxu0 %v1107
        %1462 = vmatpush1.msra.mxu0 %v1106
        %1463 = vmatprep.subr.mxu0 %v1109
        %1464 = vmatpush1.msra.mxu0 %v1108
        %1465 = vmatprep.subr.mxu0 %v1111
        %1466 = vmatpush1.msra.mxu0 %v1110
        %1467 = vmatprep.subr.mxu0 %v1113
        %1468 = vmatpush1.msra.mxu0 %v1112
        %1469 = vmatprep.subr.mxu0 %v1115
        %1470 = vmatpush1.msra.mxu0 %v1114
        %1471 = vmatprep.subr.mxu0 %v1117
        %1472 = vmatpush1.msra.mxu0 %v1116
        %1473 = vmatprep.subr.mxu0 %v1119
        %1474 = vmatpush1.msra.mxu0 %v1118
        %1475 = vmatprep.subr.mxu0 %v1121
        %1476 = vmatpush1.msra.mxu0 %v1120
        %1477 = vmatprep.subr.mxu0 %v1123
        %1478 = vmatpush1.msra.mxu0 %v1122
        %1479 = vmatprep.subr.mxu0 %v1125
        %1480 = vmatpush1.msra.mxu0 %v1124
        %1481 = vmatprep.subr.mxu0 0.0
        %1482 = vmatpush1.msra.mxu0 0.0
        %1483 = vmatprep.subr.mxu0 0.0
        %1484 = vmatpush1.msra.mxu0 0.0
        %1485 = vmatprep.subr.mxu0 0.0
        %1486 = vmatpush1.msra.mxu0 0.0
        %1487 = vmatprep.subr.mxu0 0.0
        %1488 = vmatpush1.msra.mxu0 0.0
        %1489 = vmatprep.subr.mxu0 0.0
        %1490 = vmatpush1.msra.mxu0 0.0
        %1491 = vmatprep.subr.mxu0 0.0
        %1492 = vmatpush1.msra.mxu0 0.0
        %1493 = vmatprep.subr.mxu0 0.0
        %1494 = vmatpush1.msra.mxu0 0.0
        %1495 = vmatprep.subr.mxu0 0.0
        %1496 = vmatpush1.msra.mxu0 0.0
        %1497 = vmatprep.subr.mxu0 0.0
        %1498 = vmatpush1.msra.mxu0 0.0
        %1499 = vmatprep.subr.mxu0 0.0
        %1500 = vmatpush1.msra.mxu0 0.0
        %1501 = vmatprep.subr.mxu0 0.0
        %1502 = vmatpush1.msra.mxu0 0.0
        %1503 = vmatprep.subr.mxu0 0.0
        %1504 = vmatpush1.msra.mxu0 0.0
        %1505 = vmatprep.subr.mxu0 0.0
        %1506 = vmatpush1.msra.mxu0 0.0
        %1507 = vmatprep.subr.mxu0 0.0
        %1508 = vmatpush1.msra.mxu0 0.0
        %1509 = vmatprep.subr.mxu0 0.0
        %1510 = vmatpush1.msra.mxu0 0.0
        %1511 = vmatprep.subr.mxu0 0.0
        %1512 = vmatpush1.msra.mxu0 0.0
        %1513 = vmatprep.mubr.f32.mxu0 0.0
        %1514 = vmatmul.mubr.f32.gmra.mrb[0].mxu0 %v1126
        %v1515 = vpop.f32.mrb[0].mxu0
        %v1516 = vadd.f32 %v1427, %v1515
        %v1517 = vpop.f32.mrb[0].mxu0
        %v1518 = vadd.f32 %v1429, %v1517
        %1519 = vmatprep.mubr.f32.mxu0 0.0
        %1520 = vmatmul.mubr.f32.gmra.mrb[0].mxu0 %v1127
        %v1521 = vpop.f32.mrb[0].mxu0
        %v1522 = vadd.f32 %v1433, %v1521
        %v1523 = vpop.f32.mrb[0].mxu0
        %v1524 = vadd.f32 %v1435, %v1523
        %1525 = vmatprep.mubr.f32.mxu0 0.0
        %1526 = vmatmul.mubr.f32.gmra.mrb[0].mxu0 %v1128
        %v1527 = vpop.f32.mrb[0].mxu0
        %v1528 = vadd.f32 %v1439, %v1527
        %v1529 = vpop.f32.mrb[0].mxu0
        %v1530 = vadd.f32 %v1441, %v1529
        %1531 = vmatprep.mubr.f32.mxu0 0.0
        %1532 = vmatmul.mubr.f32.gmra.mrb[0].mxu0 %v1129
        %v1533 = vpop.f32.mrb[0].mxu0
        %v1534 = vadd.f32 %v1445, %v1533
        %v1535 = vpop.f32.mrb[0].mxu0
        %v1536 = vadd.f32 %v1447, %v1535
        %1537 = vdwg.mxu0
        %v1538 = vsel %vm1056, 1, 0
        %v1539 = vsel %vm1057, 1, 0
        %vm1540 = vcmp.eq.s32.totalorder %v1538, 1
        %vm1541 = vcmp.eq.s32.totalorder %v1539, 1
        %1542 = vrot.lane.b32.xlu0 %v1058, 126
        %v1543 = vpop.permute.xlu0 %1542
        %1544 = vrot.lane.b32.xlu0 %v1059, 126
        %v1545 = vpop.permute.xlu0 %1544
        %1546 = vrot.lane.b32.xlu0 %v1130, 126
        %v1547 = vpop.permute.xlu0 %1546
        %1548 = vrot.lane.b32.xlu0 %v1060, 126
        %v1549 = vpop.permute.xlu0 %1548
        %1550 = vrot.lane.b32.xlu0 %v1061, 126
        %v1551 = vpop.permute.xlu0 %1550
        %1552 = vrot.lane.b32.xlu0 %v1131, 126
        %v1553 = vpop.permute.xlu0 %1552
        %1554 = vrot.lane.b32.xlu0 %v1062, 126
        %v1555 = vpop.permute.xlu0 %1554
        %1556 = vrot.lane.b32.xlu0 %v1063, 126
        %v1557 = vpop.permute.xlu0 %1556
        %1558 = vrot.lane.b32.xlu0 %v1132, 126
        %v1559 = vpop.permute.xlu0 %1558
        %1560 = vrot.lane.b32.xlu0 %v1064, 126
        %v1561 = vpop.permute.xlu0 %1560
        %1562 = vrot.lane.b32.xlu0 %v1065, 126
        %v1563 = vpop.permute.xlu0 %1562
        %1564 = vrot.lane.b32.xlu0 %v1133, 126
        %v1565 = vpop.permute.xlu0 %1564
        %1566 = vrot.lane.b32.xlu0 %v1066, 126
        %v1567 = vpop.permute.xlu0 %1566
        %1568 = vrot.lane.b32.xlu0 %v1067, 126
        %v1569 = vpop.permute.xlu0 %1568
        %1570 = vrot.lane.b32.xlu0 %v1134, 126
        %v1571 = vpop.permute.xlu0 %1570
        %1572 = vrot.lane.b32.xlu0 %v1068, 126
        %v1573 = vpop.permute.xlu0 %1572
        %1574 = vrot.lane.b32.xlu0 %v1069, 126
        %v1575 = vpop.permute.xlu0 %1574
        %1576 = vrot.lane.b32.xlu0 %v1135, 126
        %v1577 = vpop.permute.xlu0 %1576
        %1578 = vrot.lane.b32.xlu0 %v1070, 126
        %v1579 = vpop.permute.xlu0 %1578
        %1580 = vrot.lane.b32.xlu0 %v1071, 126
        %v1581 = vpop.permute.xlu0 %1580
        %1582 = vrot.lane.b32.xlu0 %v1136, 126
        %v1583 = vpop.permute.xlu0 %1582
        %1584 = vrot.lane.b32.xlu0 %v1072, 126
        %v1585 = vpop.permute.xlu0 %1584
        %1586 = vrot.lane.b32.xlu0 %v1073, 126
        %v1587 = vpop.permute.xlu0 %1586
        %1588 = vrot.lane.b32.xlu0 %v1137, 126
        %v1589 = vpop.permute.xlu0 %1588
        %1590 = vrot.lane.b32.xlu0 %v1074, 126
        %v1591 = vpop.permute.xlu0 %1590
        %1592 = vrot.lane.b32.xlu0 %v1075, 126
        %v1593 = vpop.permute.xlu0 %1592
        %1594 = vrot.lane.b32.xlu0 %v1138, 126
        %v1595 = vpop.permute.xlu0 %1594
        %1596 = vrot.lane.b32.xlu0 %v1076, 126
        %v1597 = vpop.permute.xlu0 %1596
        %1598 = vrot.lane.b32.xlu0 %v1077, 126
        %v1599 = vpop.permute.xlu0 %1598
        %1600 = vrot.lane.b32.xlu0 %v1139, 126
        %v1601 = vpop.permute.xlu0 %1600
        %1602 = vrot.lane.b32.xlu0 %v1078, 126
        %v1603 = vpop.permute.xlu0 %1602
        %1604 = vrot.lane.b32.xlu0 %v1079, 126
        %v1605 = vpop.permute.xlu0 %1604
        %1606 = vrot.lane.b32.xlu0 %v1140, 126
        %v1607 = vpop.permute.xlu0 %1606
        %1608 = vrot.lane.b32.xlu0 %v1080, 126
        %v1609 = vpop.permute.xlu0 %1608
        %1610 = vrot.lane.b32.xlu0 %v1081, 126
        %v1611 = vpop.permute.xlu0 %1610
        %1612 = vrot.lane.b32.xlu0 %v1141, 126
        %v1613 = vpop.permute.xlu0 %1612
        %1614 = vrot.lane.b32.xlu0 %v1082, 126
        %v1615 = vpop.permute.xlu0 %1614
        %1616 = vrot.lane.b32.xlu0 %v1083, 126
        %v1617 = vpop.permute.xlu0 %1616
        %1618 = vrot.lane.b32.xlu0 %v1142, 126
        %v1619 = vpop.permute.xlu0 %1618
        %1620 = vrot.lane.b32.xlu0 %v1084, 126
        %v1621 = vpop.permute.xlu0 %1620
        %1622 = vrot.lane.b32.xlu0 %v1085, 126
        %v1623 = vpop.permute.xlu0 %1622
        %1624 = vrot.lane.b32.xlu0 %v1143, 126
        %v1625 = vpop.permute.xlu0 %1624
        %1626 = vrot.lane.b32.xlu0 %v1086, 126
        %v1627 = vpop.permute.xlu0 %1626
        %1628 = vrot.lane.b32.xlu0 %v1087, 126
        %v1629 = vpop.permute.xlu0 %1628
        %1630 = vrot.lane.b32.xlu0 %v1144, 126
        %v1631 = vpop.permute.xlu0 %1630
        %1632 = vrot.lane.b32.xlu0 %v1088, 126
        %v1633 = vpop.permute.xlu0 %1632
        %1634 = vrot.lane.b32.xlu0 %v1089, 126
        %v1635 = vpop.permute.xlu0 %1634
        %1636 = vrot.lane.b32.xlu0 %v1145, 126
        %v1637 = vpop.permute.xlu0 %1636
        %vm1638 = vcmask 1031168
        %v1639 = vsel %vm1638, %v1543, %v1545
        %v1640 = vsel %vm1638, %v1545, %v1547
        %v1641 = vsel %vm1638, %v1549, %v1551
        %v1642 = vsel %vm1638, %v1551, %v1553
        %v1643 = vsel %vm1638, %v1555, %v1557
        %v1644 = vsel %vm1638, %v1557, %v1559
        %v1645 = vsel %vm1638, %v1561, %v1563
        %v1646 = vsel %vm1638, %v1563, %v1565
        %v1647 = vsel %vm1638, %v1567, %v1569
        %v1648 = vsel %vm1638, %v1569, %v1571
        %v1649 = vsel %vm1638, %v1573, %v1575
        %v1650 = vsel %vm1638, %v1575, %v1577
        %v1651 = vsel %vm1638, %v1579, %v1581
        %v1652 = vsel %vm1638, %v1581, %v1583
        %v1653 = vsel %vm1638, %v1585, %v1587
        %v1654 = vsel %vm1638, %v1587, %v1589
        %v1655 = vsel %vm1638, %v1591, %v1593
        %v1656 = vsel %vm1638, %v1593, %v1595
        %v1657 = vsel %vm1638, %v1597, %v1599
        %v1658 = vsel %vm1638, %v1599, %v1601
        %v1659 = vsel %vm1638, %v1603, %v1605
        %v1660 = vsel %vm1638, %v1605, %v1607
        %v1661 = vsel %vm1638, %v1609, %v1611
        %v1662 = vsel %vm1638, %v1611, %v1613
        %v1663 = vsel %vm1638, %v1615, %v1617
        %v1664 = vsel %vm1638, %v1617, %v1619
        %v1665 = vsel %vm1638, %v1621, %v1623
        %v1666 = vsel %vm1638, %v1623, %v1625
        %v1667 = vsel %vm1638, %v1627, %v1629
        %v1668 = vsel %vm1638, %v1629, %v1631
        %v1669 = vsel %vm1638, %v1633, %v1635
        %v1670 = vsel %vm1638, %v1635, %v1637
        %v1703 = vsel %vm1540, %v1639, 0.0
        %v1704 = vsel %vm1541, %v1640, 0.0
        %v1705 = vsel %vm1540, %v1641, 0.0
        %v1706 = vsel %vm1541, %v1642, 0.0
        %v1707 = vsel %vm1540, %v1643, 0.0
        %v1708 = vsel %vm1541, %v1644, 0.0
        %v1709 = vsel %vm1540, %v1645, 0.0
        %v1710 = vsel %vm1541, %v1646, 0.0
        %v1711 = vsel %vm1540, %v1647, 0.0
        %v1712 = vsel %vm1541, %v1648, 0.0
        %v1713 = vsel %vm1540, %v1649, 0.0
        %v1714 = vsel %vm1541, %v1650, 0.0
        %v1715 = vsel %vm1540, %v1651, 0.0
        %v1716 = vsel %vm1541, %v1652, 0.0
        %v1717 = vsel %vm1540, %v1653, 0.0
        %v1718 = vsel %vm1541, %v1654, 0.0
        %v1719 = vsel %vm1540, %v1655, 0.0
        %v1720 = vsel %vm1541, %v1656, 0.0
        %v1721 = vsel %vm1540, %v1657, 0.0
        %v1722 = vsel %vm1541, %v1658, 0.0
        %v1723 = vsel %vm1540, %v1659, 0.0
        %v1724 = vsel %vm1541, %v1660, 0.0
        %v1725 = vsel %vm1540, %v1661, 0.0
        %v1726 = vsel %vm1541, %v1662, 0.0
        %v1727 = vsel %vm1540, %v1663, 0.0
        %v1728 = vsel %vm1541, %v1664, 0.0
        %v1729 = vsel %vm1540, %v1665, 0.0
        %v1730 = vsel %vm1541, %v1666, 0.0
        %v1731 = vsel %vm1540, %v1667, 0.0
        %v1732 = vsel %vm1541, %v1668, 0.0
        %v1733 = vsel %vm1540, %v1669, 0.0
        %v1734 = vsel %vm1541, %v1670, 0.0
        %s1735 = scalar_lea.vmem %s5, 64
        %v1736 = vld [vmem:[%s1735] sm:$0xff]
        %v1737 = vld [vmem:[%s1735 + $0x8] sm:$0xff]
        %v1738 = vld [vmem:[%s1735 + $0x10] sm:$0xff]
        %v1739 = vld [vmem:[%s1735 + $0x18] sm:$0xff]
        %1740 = vmatprep.subr.mxu0 %v1704
        %1741 = vmatpush1.msra.mxu0 %v1703
        %1742 = vmatprep.subr.mxu0 %v1706
        %1743 = vmatpush1.msra.mxu0 %v1705
        %1744 = vmatprep.subr.mxu0 %v1708
        %1745 = vmatpush1.msra.mxu0 %v1707
        %1746 = vmatprep.subr.mxu0 %v1710
        %1747 = vmatpush1.msra.mxu0 %v1709
        %1748 = vmatprep.subr.mxu0 %v1712
        %1749 = vmatpush1.msra.mxu0 %v1711
        %1750 = vmatprep.subr.mxu0 %v1714
        %1751 = vmatpush1.msra.mxu0 %v1713
        %1752 = vmatprep.subr.mxu0 %v1716
        %1753 = vmatpush1.msra.mxu0 %v1715
        %1754 = vmatprep.subr.mxu0 %v1718
        %1755 = vmatpush1.msra.mxu0 %v1717
        %1756 = vmatprep.subr.mxu0 %v1720
        %1757 = vmatpush1.msra.mxu0 %v1719
        %1758 = vmatprep.subr.mxu0 %v1722
        %1759 = vmatpush1.msra.mxu0 %v1721
        %1760 = vmatprep.subr.mxu0 %v1724
        %1761 = vmatpush1.msra.mxu0 %v1723
        %1762 = vmatprep.subr.mxu0 %v1726
        %1763 = vmatpush1.msra.mxu0 %v1725
        %1764 = vmatprep.subr.mxu0 %v1728
        %1765 = vmatpush1.msra.mxu0 %v1727
        %1766 = vmatprep.subr.mxu0 %v1730
        %1767 = vmatpush1.msra.mxu0 %v1729
        %1768 = vmatprep.subr.mxu0 %v1732
        %1769 = vmatpush1.msra.mxu0 %v1731
        %1770 = vmatprep.subr.mxu0 %v1734
        %1771 = vmatpush1.msra.mxu0 %v1733
        %1772 = vmatprep.subr.mxu0 0.0
        %1773 = vmatpush1.msra.mxu0 0.0
        %1774 = vmatprep.subr.mxu0 0.0
        %1775 = vmatpush1.msra.mxu0 0.0
        %1776 = vmatprep.subr.mxu0 0.0
        %1777 = vmatpush1.msra.mxu0 0.0
        %1778 = vmatprep.subr.mxu0 0.0
        %1779 = vmatpush1.msra.mxu0 0.0
        %1780 = vmatprep.subr.mxu0 0.0
        %1781 = vmatpush1.msra.mxu0 0.0
        %1782 = vmatprep.subr.mxu0 0.0
        %1783 = vmatpush1.msra.mxu0 0.0
        %1784 = vmatprep.subr.mxu0 0.0
        %1785 = vmatpush1.msra.mxu0 0.0
        %1786 = vmatprep.subr.mxu0 0.0
        %1787 = vmatpush1.msra.mxu0 0.0
        %1788 = vmatprep.subr.mxu0 0.0
        %1789 = vmatpush1.msra.mxu0 0.0
        %1790 = vmatprep.subr.mxu0 0.0
        %1791 = vmatpush1.msra.mxu0 0.0
        %1792 = vmatprep.subr.mxu0 0.0
        %1793 = vmatpush1.msra.mxu0 0.0
        %1794 = vmatprep.subr.mxu0 0.0
        %1795 = vmatpush1.msra.mxu0 0.0
        %1796 = vmatprep.subr.mxu0 0.0
        %1797 = vmatpush1.msra.mxu0 0.0
        %1798 = vmatprep.subr.mxu0 0.0
        %1799 = vmatpush1.msra.mxu0 0.0
        %1800 = vmatprep.subr.mxu0 0.0
        %1801 = vmatpush1.msra.mxu0 0.0
        %1802 = vmatprep.subr.mxu0 0.0
        %1803 = vmatpush1.msra.mxu0 0.0
        %1804 = vmatprep.mubr.f32.mxu0 0.0
        %1805 = vmatmul.mubr.f32.gmra.mrb[0].mxu0 %v1736
        %v1806 = vpop.f32.mrb[0].mxu0
        %v1807 = vadd.f32 0.0, %v1806
        %v1808 = vpop.f32.mrb[0].mxu0
        %v1809 = vadd.f32 0.0, %v1808
        %1810 = vmatprep.mubr.f32.mxu0 0.0
        %1811 = vmatmul.mubr.f32.gmra.mrb[0].mxu0 %v1737
        %v1812 = vpop.f32.mrb[0].mxu0
        %v1813 = vadd.f32 0.0, %v1812
        %v1814 = vpop.f32.mrb[0].mxu0
        %v1815 = vadd.f32 0.0, %v1814
        %1816 = vmatprep.mubr.f32.mxu0 0.0
        %1817 = vmatmul.mubr.f32.gmra.mrb[0].mxu0 %v1738
        %v1818 = vpop.f32.mrb[0].mxu0
        %v1819 = vadd.f32 0.0, %v1818
        %v1820 = vpop.f32.mrb[0].mxu0
        %v1821 = vadd.f32 0.0, %v1820
        %1822 = vmatprep.mubr.f32.mxu0 0.0
        %1823 = vmatmul.mubr.f32.gmra.mrb[0].mxu0 %v1739
        %v1824 = vpop.f32.mrb[0].mxu0
        %v1825 = vadd.f32 0.0, %v1824
        %v1826 = vpop.f32.mrb[0].mxu0
        %v1827 = vadd.f32 0.0, %v1826
        %1828 = vdwg.mxu0
        %v1829 = vadd.f32 %v1516, %v1807
        %v1830 = vadd.f32 %v1518, %v1809
        %v1831 = vadd.f32 %v1522, %v1813
        %v1832 = vadd.f32 %v1524, %v1815
        %v1833 = vadd.f32 %v1528, %v1819
        %v1834 = vadd.f32 %v1530, %v1821
        %v1835 = vadd.f32 %v1534, %v1825
        %v1836 = vadd.f32 %v1536, %v1827
        %1837 = vrot.lane.b32.xlu0 %v1058, 112
        %v1838 = vpop.permute.xlu0 %1837
        %1839 = vrot.lane.b32.xlu0 %v1059, 112
        %v1840 = vpop.permute.xlu0 %1839
        %1841 = vrot.lane.b32.xlu0 %v1130, 112
        %v1842 = vpop.permute.xlu0 %1841
        %1843 = vrot.lane.b32.xlu0 %v1060, 112
        %v1844 = vpop.permute.xlu0 %1843
        %1845 = vrot.lane.b32.xlu0 %v1061, 112
        %v1846 = vpop.permute.xlu0 %1845
        %1847 = vrot.lane.b32.xlu0 %v1131, 112
        %v1848 = vpop.permute.xlu0 %1847
        %1849 = vrot.lane.b32.xlu0 %v1062, 112
        %v1850 = vpop.permute.xlu0 %1849
        %1851 = vrot.lane.b32.xlu0 %v1063, 112
        %v1852 = vpop.permute.xlu0 %1851
        %1853 = vrot.lane.b32.xlu0 %v1132, 112
        %v1854 = vpop.permute.xlu0 %1853
        %1855 = vrot.lane.b32.xlu0 %v1064, 112
        %v1856 = vpop.permute.xlu0 %1855
        %1857 = vrot.lane.b32.xlu0 %v1065, 112
        %v1858 = vpop.permute.xlu0 %1857
        %1859 = vrot.lane.b32.xlu0 %v1133, 112
        %v1860 = vpop.permute.xlu0 %1859
        %1861 = vrot.lane.b32.xlu0 %v1066, 112
        %v1862 = vpop.permute.xlu0 %1861
        %1863 = vrot.lane.b32.xlu0 %v1067, 112
        %v1864 = vpop.permute.xlu0 %1863
        %1865 = vrot.lane.b32.xlu0 %v1134, 112
        %v1866 = vpop.permute.xlu0 %1865
        %1867 = vrot.lane.b32.xlu0 %v1068, 112
        %v1868 = vpop.permute.xlu0 %1867
        %1869 = vrot.lane.b32.xlu0 %v1069, 112
        %v1870 = vpop.permute.xlu0 %1869
        %1871 = vrot.lane.b32.xlu0 %v1135, 112
        %v1872 = vpop.permute.xlu0 %1871
        %1873 = vrot.lane.b32.xlu0 %v1070, 112
        %v1874 = vpop.permute.xlu0 %1873
        %1875 = vrot.lane.b32.xlu0 %v1071, 112
        %v1876 = vpop.permute.xlu0 %1875
        %1877 = vrot.lane.b32.xlu0 %v1136, 112
        %v1878 = vpop.permute.xlu0 %1877
        %1879 = vrot.lane.b32.xlu0 %v1072, 112
        %v1880 = vpop.permute.xlu0 %1879
        %1881 = vrot.lane.b32.xlu0 %v1073, 112
        %v1882 = vpop.permute.xlu0 %1881
        %1883 = vrot.lane.b32.xlu0 %v1137, 112
        %v1884 = vpop.permute.xlu0 %1883
        %1885 = vrot.lane.b32.xlu0 %v1074, 112
        %v1886 = vpop.permute.xlu0 %1885
        %1887 = vrot.lane.b32.xlu0 %v1075, 112
        %v1888 = vpop.permute.xlu0 %1887
        %1889 = vrot.lane.b32.xlu0 %v1138, 112
        %v1890 = vpop.permute.xlu0 %1889
        %1891 = vrot.lane.b32.xlu0 %v1076, 112
        %v1892 = vpop.permute.xlu0 %1891
        %1893 = vrot.lane.b32.xlu0 %v1077, 112
        %v1894 = vpop.permute.xlu0 %1893
        %1895 = vrot.lane.b32.xlu0 %v1139, 112
        %v1896 = vpop.permute.xlu0 %1895
        %1897 = vrot.lane.b32.xlu0 %v1078, 112
        %v1898 = vpop.permute.xlu0 %1897
        %1899 = vrot.lane.b32.xlu0 %v1079, 112
        %v1900 = vpop.permute.xlu0 %1899
        %1901 = vrot.lane.b32.xlu0 %v1140, 112
        %v1902 = vpop.permute.xlu0 %1901
        %1903 = vrot.lane.b32.xlu0 %v1080, 112
        %v1904 = vpop.permute.xlu0 %1903
        %1905 = vrot.lane.b32.xlu0 %v1081, 112
        %v1906 = vpop.permute.xlu0 %1905
        %1907 = vrot.lane.b32.xlu0 %v1141, 112
        %v1908 = vpop.permute.xlu0 %1907
        %1909 = vrot.lane.b32.xlu0 %v1082, 112
        %v1910 = vpop.permute.xlu0 %1909
        %1911 = vrot.lane.b32.xlu0 %v1083, 112
        %v1912 = vpop.permute.xlu0 %1911
        %1913 = vrot.lane.b32.xlu0 %v1142, 112
        %v1914 = vpop.permute.xlu0 %1913
        %1915 = vrot.lane.b32.xlu0 %v1084, 112
        %v1916 = vpop.permute.xlu0 %1915
        %1917 = vrot.lane.b32.xlu0 %v1085, 112
        %v1918 = vpop.permute.xlu0 %1917
        %1919 = vrot.lane.b32.xlu0 %v1143, 112
        %v1920 = vpop.permute.xlu0 %1919
        %1921 = vrot.lane.b32.xlu0 %v1086, 112
        %v1922 = vpop.permute.xlu0 %1921
        %1923 = vrot.lane.b32.xlu0 %v1087, 112
        %v1924 = vpop.permute.xlu0 %1923
        %1925 = vrot.lane.b32.xlu0 %v1144, 112
        %v1926 = vpop.permute.xlu0 %1925
        %1927 = vrot.lane.b32.xlu0 %v1088, 112
        %v1928 = vpop.permute.xlu0 %1927
        %1929 = vrot.lane.b32.xlu0 %v1089, 112
        %v1930 = vpop.permute.xlu0 %1929
        %1931 = vrot.lane.b32.xlu0 %v1145, 112
        %v1932 = vpop.permute.xlu0 %1931
        %vm1933 = vcmask 916480
        %v1934 = vsel %vm1933, %v1838, %v1840
        %v1935 = vsel %vm1933, %v1840, %v1842
        %v1936 = vsel %vm1933, %v1844, %v1846
        %v1937 = vsel %vm1933, %v1846, %v1848
        %v1938 = vsel %vm1933, %v1850, %v1852
        %v1939 = vsel %vm1933, %v1852, %v1854
        %v1940 = vsel %vm1933, %v1856, %v1858
        %v1941 = vsel %vm1933, %v1858, %v1860
        %v1942 = vsel %vm1933, %v1862, %v1864
        %v1943 = vsel %vm1933, %v1864, %v1866
        %v1944 = vsel %vm1933, %v1868, %v1870
        %v1945 = vsel %vm1933, %v1870, %v1872
        %v1946 = vsel %vm1933, %v1874, %v1876
        %v1947 = vsel %vm1933, %v1876, %v1878
        %v1948 = vsel %vm1933, %v1880, %v1882
        %v1949 = vsel %vm1933, %v1882, %v1884
        %v1950 = vsel %vm1933, %v1886, %v1888
        %v1951 = vsel %vm1933, %v1888, %v1890
        %v1952 = vsel %vm1933, %v1892, %v1894
        %v1953 = vsel %vm1933, %v1894, %v1896
        %v1954 = vsel %vm1933, %v1898, %v1900
        %v1955 = vsel %vm1933, %v1900, %v1902
        %v1956 = vsel %vm1933, %v1904, %v1906
        %v1957 = vsel %vm1933, %v1906, %v1908
        %v1958 = vsel %vm1933, %v1910, %v1912
        %v1959 = vsel %vm1933, %v1912, %v1914
        %v1960 = vsel %vm1933, %v1916, %v1918
        %v1961 = vsel %vm1933, %v1918, %v1920
        %v1962 = vsel %vm1933, %v1922, %v1924
        %v1963 = vsel %vm1933, %v1924, %v1926
        %v1964 = vsel %vm1933, %v1928, %v1930
        %v1965 = vsel %vm1933, %v1930, %v1932
        %v1998 = vsel %vm1092, %v1934, 0.0
        %v1999 = vsel %vm1093, %v1935, 0.0
        %v2000 = vsel %vm1092, %v1936, 0.0
        %v2001 = vsel %vm1093, %v1937, 0.0
        %v2002 = vsel %vm1092, %v1938, 0.0
        %v2003 = vsel %vm1093, %v1939, 0.0
        %v2004 = vsel %vm1092, %v1940, 0.0
        %v2005 = vsel %vm1093, %v1941, 0.0
        %v2006 = vsel %vm1092, %v1942, 0.0
        %v2007 = vsel %vm1093, %v1943, 0.0
        %v2008 = vsel %vm1092, %v1944, 0.0
        %v2009 = vsel %vm1093, %v1945, 0.0
        %v2010 = vsel %vm1092, %v1946, 0.0
        %v2011 = vsel %vm1093, %v1947, 0.0
        %v2012 = vsel %vm1092, %v1948, 0.0
        %v2013 = vsel %vm1093, %v1949, 0.0
        %v2014 = vsel %vm1092, %v1950, 0.0
        %v2015 = vsel %vm1093, %v1951, 0.0
        %v2016 = vsel %vm1092, %v1952, 0.0
        %v2017 = vsel %vm1093, %v1953, 0.0
        %v2018 = vsel %vm1092, %v1954, 0.0
        %v2019 = vsel %vm1093, %v1955, 0.0
        %v2020 = vsel %vm1092, %v1956, 0.0
        %v2021 = vsel %vm1093, %v1957, 0.0
        %v2022 = vsel %vm1092, %v1958, 0.0
        %v2023 = vsel %vm1093, %v1959, 0.0
        %v2024 = vsel %vm1092, %v1960, 0.0
        %v2025 = vsel %vm1093, %v1961, 0.0
        %v2026 = vsel %vm1092, %v1962, 0.0
        %v2027 = vsel %vm1093, %v1963, 0.0
        %v2028 = vsel %vm1092, %v1964, 0.0
        %v2029 = vsel %vm1093, %v1965, 0.0
        %s2030 = scalar_lea.vmem %s5, 96
        %v2031 = vld [vmem:[%s2030] sm:$0xff]
        %v2032 = vld [vmem:[%s2030 + $0x8] sm:$0xff]
        %v2033 = vld [vmem:[%s2030 + $0x10] sm:$0xff]
        %v2034 = vld [vmem:[%s2030 + $0x18] sm:$0xff]
        %2035 = vmatprep.subr.mxu0 %v1999
        %2036 = vmatpush1.msra.mxu0 %v1998
        %2037 = vmatprep.subr.mxu0 %v2001
        %2038 = vmatpush1.msra.mxu0 %v2000
        %2039 = vmatprep.subr.mxu0 %v2003
        %2040 = vmatpush1.msra.mxu0 %v2002
        %2041 = vmatprep.subr.mxu0 %v2005
        %2042 = vmatpush1.msra.mxu0 %v2004
        %2043 = vmatprep.subr.mxu0 %v2007
        %2044 = vmatpush1.msra.mxu0 %v2006
        %2045 = vmatprep.subr.mxu0 %v2009
        %2046 = vmatpush1.msra.mxu0 %v2008
        %2047 = vmatprep.subr.mxu0 %v2011
        %2048 = vmatpush1.msra.mxu0 %v2010
        %2049 = vmatprep.subr.mxu0 %v2013
        %2050 = vmatpush1.msra.mxu0 %v2012
        %2051 = vmatprep.subr.mxu0 %v2015
        %2052 = vmatpush1.msra.mxu0 %v2014
        %2053 = vmatprep.subr.mxu0 %v2017
        %2054 = vmatpush1.msra.mxu0 %v2016
        %2055 = vmatprep.subr.mxu0 %v2019
        %2056 = vmatpush1.msra.mxu0 %v2018
        %2057 = vmatprep.subr.mxu0 %v2021
        %2058 = vmatpush1.msra.mxu0 %v2020
        %2059 = vmatprep.subr.mxu0 %v2023
        %2060 = vmatpush1.msra.mxu0 %v2022
        %2061 = vmatprep.subr.mxu0 %v2025
        %2062 = vmatpush1.msra.mxu0 %v2024
        %2063 = vmatprep.subr.mxu0 %v2027
        %2064 = vmatpush1.msra.mxu0 %v2026
        %2065 = vmatprep.subr.mxu0 %v2029
        %2066 = vmatpush1.msra.mxu0 %v2028
        %2067 = vmatprep.subr.mxu0 0.0
        %2068 = vmatpush1.msra.mxu0 0.0
        %2069 = vmatprep.subr.mxu0 0.0
        %2070 = vmatpush1.msra.mxu0 0.0
        %2071 = vmatprep.subr.mxu0 0.0
        %2072 = vmatpush1.msra.mxu0 0.0
        %2073 = vmatprep.subr.mxu0 0.0
        %2074 = vmatpush1.msra.mxu0 0.0
        %2075 = vmatprep.subr.mxu0 0.0
        %2076 = vmatpush1.msra.mxu0 0.0
        %2077 = vmatprep.subr.mxu0 0.0
        %2078 = vmatpush1.msra.mxu0 0.0
        %2079 = vmatprep.subr.mxu0 0.0
        %2080 = vmatpush1.msra.mxu0 0.0
        %2081 = vmatprep.subr.mxu0 0.0
        %2082 = vmatpush1.msra.mxu0 0.0
        %2083 = vmatprep.subr.mxu0 0.0
        %2084 = vmatpush1.msra.mxu0 0.0
        %2085 = vmatprep.subr.mxu0 0.0
        %2086 = vmatpush1.msra.mxu0 0.0
        %2087 = vmatprep.subr.mxu0 0.0
        %2088 = vmatpush1.msra.mxu0 0.0
        %2089 = vmatprep.subr.mxu0 0.0
        %2090 = vmatpush1.msra.mxu0 0.0
        %2091 = vmatprep.subr.mxu0 0.0
        %2092 = vmatpush1.msra.mxu0 0.0
        %2093 = vmatprep.subr.mxu0 0.0
        %2094 = vmatpush1.msra.mxu0 0.0
        %2095 = vmatprep.subr.mxu0 0.0
        %2096 = vmatpush1.msra.mxu0 0.0
        %2097 = vmatprep.subr.mxu0 0.0
        %2098 = vmatpush1.msra.mxu0 0.0
        %2099 = vmatprep.mubr.f32.mxu0 0.0
        %2100 = vmatmul.mubr.f32.gmra.mrb[0].mxu0 %v2031
        %v2101 = vpop.f32.mrb[0].mxu0
        %v2102 = vadd.f32 0.0, %v2101
        %v2103 = vpop.f32.mrb[0].mxu0
        %v2104 = vadd.f32 0.0, %v2103
        %2105 = vmatprep.mubr.f32.mxu0 0.0
        %2106 = vmatmul.mubr.f32.gmra.mrb[0].mxu0 %v2032
        %v2107 = vpop.f32.mrb[0].mxu0
        %v2108 = vadd.f32 0.0, %v2107
        %v2109 = vpop.f32.mrb[0].mxu0
        %v2110 = vadd.f32 0.0, %v2109
        %2111 = vmatprep.mubr.f32.mxu0 0.0
        %2112 = vmatmul.mubr.f32.gmra.mrb[0].mxu0 %v2033
        %v2113 = vpop.f32.mrb[0].mxu0
        %v2114 = vadd.f32 0.0, %v2113
        %v2115 = vpop.f32.mrb[0].mxu0
        %v2116 = vadd.f32 0.0, %v2115
        %2117 = vmatprep.mubr.f32.mxu0 0.0
        %2118 = vmatmul.mubr.f32.gmra.mrb[0].mxu0 %v2034
        %v2119 = vpop.f32.mrb[0].mxu0
        %v2120 = vadd.f32 0.0, %v2119
        %v2121 = vpop.f32.mrb[0].mxu0
        %v2122 = vadd.f32 0.0, %v2121
        %2123 = vdwg.mxu0
        %v2124 = vadd.f32 %v1829, %v2102
        %v2125 = vadd.f32 %v1830, %v2104
        %v2126 = vadd.f32 %v1831, %v2108
        %v2127 = vadd.f32 %v1832, %v2110
        %v2128 = vadd.f32 %v1833, %v2114
        %v2129 = vadd.f32 %v1834, %v2116
        %v2130 = vadd.f32 %v1835, %v2120
        %v2131 = vadd.f32 %v1836, %v2122
        %s2132 = scalar_lea.vmem %s5, 128
        %v2133 = vld [vmem:[%s2132] sm:$0xff]
        %v2134 = vld [vmem:[%s2132 + $0x8] sm:$0xff]
        %v2135 = vld [vmem:[%s2132 + $0x10] sm:$0xff]
        %v2136 = vld [vmem:[%s2132 + $0x18] sm:$0xff]
        %2137 = vrot.lane.b32.xlu0 %v1058, 111
        %v2138 = vpop.permute.xlu0 %2137
        %2139 = vrot.lane.b32.xlu0 %v1059, 111
        %v2140 = vpop.permute.xlu0 %2139
        %2141 = vrot.lane.b32.xlu0 %v1130, 111
        %v2142 = vpop.permute.xlu0 %2141
        %2143 = vrot.lane.b32.xlu0 %v1060, 111
        %v2144 = vpop.permute.xlu0 %2143
        %2145 = vrot.lane.b32.xlu0 %v1061, 111
        %v2146 = vpop.permute.xlu0 %2145
        %2147 = vrot.lane.b32.xlu0 %v1131, 111
        %v2148 = vpop.permute.xlu0 %2147
        %2149 = vrot.lane.b32.xlu0 %v1062, 111
        %v2150 = vpop.permute.xlu0 %2149
        %2151 = vrot.lane.b32.xlu0 %v1063, 111
        %v2152 = vpop.permute.xlu0 %2151
        %2153 = vrot.lane.b32.xlu0 %v1132, 111
        %v2154 = vpop.permute.xlu0 %2153
        %2155 = vrot.lane.b32.xlu0 %v1064, 111
        %v2156 = vpop.permute.xlu0 %2155
        %2157 = vrot.lane.b32.xlu0 %v1065, 111
        %v2158 = vpop.permute.xlu0 %2157
        %2159 = vrot.lane.b32.xlu0 %v1133, 111
        %v2160 = vpop.permute.xlu0 %2159
        %2161 = vrot.lane.b32.xlu0 %v1066, 111
        %v2162 = vpop.permute.xlu0 %2161
        %2163 = vrot.lane.b32.xlu0 %v1067, 111
        %v2164 = vpop.permute.xlu0 %2163
        %2165 = vrot.lane.b32.xlu0 %v1134, 111
        %v2166 = vpop.permute.xlu0 %2165
        %2167 = vrot.lane.b32.xlu0 %v1068, 111
        %v2168 = vpop.permute.xlu0 %2167
        %2169 = vrot.lane.b32.xlu0 %v1069, 111
        %v2170 = vpop.permute.xlu0 %2169
        %2171 = vrot.lane.b32.xlu0 %v1135, 111
        %v2172 = vpop.permute.xlu0 %2171
        %2173 = vrot.lane.b32.xlu0 %v1070, 111
        %v2174 = vpop.permute.xlu0 %2173
        %2175 = vrot.lane.b32.xlu0 %v1071, 111
        %v2176 = vpop.permute.xlu0 %2175
        %2177 = vrot.lane.b32.xlu0 %v1136, 111
        %v2178 = vpop.permute.xlu0 %2177
        %2179 = vrot.lane.b32.xlu0 %v1072, 111
        %v2180 = vpop.permute.xlu0 %2179
        %2181 = vrot.lane.b32.xlu0 %v1073, 111
        %v2182 = vpop.permute.xlu0 %2181
        %2183 = vrot.lane.b32.xlu0 %v1137, 111
        %v2184 = vpop.permute.xlu0 %2183
        %2185 = vrot.lane.b32.xlu0 %v1074, 111
        %v2186 = vpop.permute.xlu0 %2185
        %2187 = vrot.lane.b32.xlu0 %v1075, 111
        %v2188 = vpop.permute.xlu0 %2187
        %2189 = vrot.lane.b32.xlu0 %v1138, 111
        %v2190 = vpop.permute.xlu0 %2189
        %2191 = vrot.lane.b32.xlu0 %v1076, 111
        %v2192 = vpop.permute.xlu0 %2191
        %2193 = vrot.lane.b32.xlu0 %v1077, 111
        %v2194 = vpop.permute.xlu0 %2193
        %2195 = vrot.lane.b32.xlu0 %v1139, 111
        %v2196 = vpop.permute.xlu0 %2195
        %2197 = vrot.lane.b32.xlu0 %v1078, 111
        %v2198 = vpop.permute.xlu0 %2197
        %2199 = vrot.lane.b32.xlu0 %v1079, 111
        %v2200 = vpop.permute.xlu0 %2199
        %2201 = vrot.lane.b32.xlu0 %v1140, 111
        %v2202 = vpop.permute.xlu0 %2201
        %2203 = vrot.lane.b32.xlu0 %v1080, 111
        %v2204 = vpop.permute.xlu0 %2203
        %2205 = vrot.lane.b32.xlu0 %v1081, 111
        %v2206 = vpop.permute.xlu0 %2205
        %2207 = vrot.lane.b32.xlu0 %v1141, 111
        %v2208 = vpop.permute.xlu0 %2207
        %2209 = vrot.lane.b32.xlu0 %v1082, 111
        %v2210 = vpop.permute.xlu0 %2209
        %2211 = vrot.lane.b32.xlu0 %v1083, 111
        %v2212 = vpop.permute.xlu0 %2211
        %2213 = vrot.lane.b32.xlu0 %v1142, 111
        %v2214 = vpop.permute.xlu0 %2213
        %2215 = vrot.lane.b32.xlu0 %v1084, 111
        %v2216 = vpop.permute.xlu0 %2215
        %2217 = vrot.lane.b32.xlu0 %v1085, 111
        %v2218 = vpop.permute.xlu0 %2217
        %2219 = vrot.lane.b32.xlu0 %v1143, 111
        %v2220 = vpop.permute.xlu0 %2219
        %2221 = vrot.lane.b32.xlu0 %v1086, 111
        %v2222 = vpop.permute.xlu0 %2221
        %2223 = vrot.lane.b32.xlu0 %v1087, 111
        %v2224 = vpop.permute.xlu0 %2223
        %2225 = vrot.lane.b32.xlu0 %v1144, 111
        %v2226 = vpop.permute.xlu0 %2225
        %2227 = vrot.lane.b32.xlu0 %v1088, 111
        %v2228 = vpop.permute.xlu0 %2227
        %2229 = vrot.lane.b32.xlu0 %v1089, 111
        %v2230 = vpop.permute.xlu0 %2229
        %2231 = vrot.lane.b32.xlu0 %v1145, 111
        %v2232 = vpop.permute.xlu0 %2231
        %vm2233 = vcmask 908288
        %v2234 = vsel %vm2233, %v2138, %v2140
        %v2235 = vsel %vm2233, %v2140, %v2142
        %v2236 = vsel %vm2233, %v2144, %v2146
        %v2237 = vsel %vm2233, %v2146, %v2148
        %v2238 = vsel %vm2233, %v2150, %v2152
        %v2239 = vsel %vm2233, %v2152, %v2154
        %v2240 = vsel %vm2233, %v2156, %v2158
        %v2241 = vsel %vm2233, %v2158, %v2160
        %v2242 = vsel %vm2233, %v2162, %v2164
        %v2243 = vsel %vm2233, %v2164, %v2166
        %v2244 = vsel %vm2233, %v2168, %v2170
        %v2245 = vsel %vm2233, %v2170, %v2172
        %v2246 = vsel %vm2233, %v2174, %v2176
        %v2247 = vsel %vm2233, %v2176, %v2178
        %v2248 = vsel %vm2233, %v2180, %v2182
        %v2249 = vsel %vm2233, %v2182, %v2184
        %v2250 = vsel %vm2233, %v2186, %v2188
        %v2251 = vsel %vm2233, %v2188, %v2190
        %v2252 = vsel %vm2233, %v2192, %v2194
        %v2253 = vsel %vm2233, %v2194, %v2196
        %v2254 = vsel %vm2233, %v2198, %v2200
        %v2255 = vsel %vm2233, %v2200, %v2202
        %v2256 = vsel %vm2233, %v2204, %v2206
        %v2257 = vsel %vm2233, %v2206, %v2208
        %v2258 = vsel %vm2233, %v2210, %v2212
        %v2259 = vsel %vm2233, %v2212, %v2214
        %v2260 = vsel %vm2233, %v2216, %v2218
        %v2261 = vsel %vm2233, %v2218, %v2220
        %v2262 = vsel %vm2233, %v2222, %v2224
        %v2263 = vsel %vm2233, %v2224, %v2226
        %v2264 = vsel %vm2233, %v2228, %v2230
        %v2265 = vsel %vm2233, %v2230, %v2232
        %2298 = vmatprep.subr.mxu0 %v2235
        %2299 = vmatpush1.msra.mxu0 %v2234
        %2300 = vmatprep.subr.mxu0 %v2237
        %2301 = vmatpush1.msra.mxu0 %v2236
        %2302 = vmatprep.subr.mxu0 %v2239
        %2303 = vmatpush1.msra.mxu0 %v2238
        %2304 = vmatprep.subr.mxu0 %v2241
        %2305 = vmatpush1.msra.mxu0 %v2240
        %2306 = vmatprep.subr.mxu0 %v2243
        %2307 = vmatpush1.msra.mxu0 %v2242
        %2308 = vmatprep.subr.mxu0 %v2245
        %2309 = vmatpush1.msra.mxu0 %v2244
        %2310 = vmatprep.subr.mxu0 %v2247
        %2311 = vmatpush1.msra.mxu0 %v2246
        %2312 = vmatprep.subr.mxu0 %v2249
        %2313 = vmatpush1.msra.mxu0 %v2248
        %2314 = vmatprep.subr.mxu0 %v2251
        %2315 = vmatpush1.msra.mxu0 %v2250
        %2316 = vmatprep.subr.mxu0 %v2253
        %2317 = vmatpush1.msra.mxu0 %v2252
        %2318 = vmatprep.subr.mxu0 %v2255
        %2319 = vmatpush1.msra.mxu0 %v2254
        %2320 = vmatprep.subr.mxu0 %v2257
        %2321 = vmatpush1.msra.mxu0 %v2256
        %2322 = vmatprep.subr.mxu0 %v2259
        %2323 = vmatpush1.msra.mxu0 %v2258
        %2324 = vmatprep.subr.mxu0 %v2261
        %2325 = vmatpush1.msra.mxu0 %v2260
        %2326 = vmatprep.subr.mxu0 %v2263
        %2327 = vmatpush1.msra.mxu0 %v2262
        %2328 = vmatprep.subr.mxu0 %v2265
        %2329 = vmatpush1.msra.mxu0 %v2264
        %2330 = vmatprep.subr.mxu0 0.0
        %2331 = vmatpush1.msra.mxu0 0.0
        %2332 = vmatprep.subr.mxu0 0.0
        %2333 = vmatpush1.msra.mxu0 0.0
        %2334 = vmatprep.subr.mxu0 0.0
        %2335 = vmatpush1.msra.mxu0 0.0
        %2336 = vmatprep.subr.mxu0 0.0
        %2337 = vmatpush1.msra.mxu0 0.0
        %2338 = vmatprep.subr.mxu0 0.0
        %2339 = vmatpush1.msra.mxu0 0.0
        %2340 = vmatprep.subr.mxu0 0.0
        %2341 = vmatpush1.msra.mxu0 0.0
        %2342 = vmatprep.subr.mxu0 0.0
        %2343 = vmatpush1.msra.mxu0 0.0
        %2344 = vmatprep.subr.mxu0 0.0
        %2345 = vmatpush1.msra.mxu0 0.0
        %2346 = vmatprep.subr.mxu0 0.0
        %2347 = vmatpush1.msra.mxu0 0.0
        %2348 = vmatprep.subr.mxu0 0.0
        %2349 = vmatpush1.msra.mxu0 0.0
        %2350 = vmatprep.subr.mxu0 0.0
        %2351 = vmatpush1.msra.mxu0 0.0
        %2352 = vmatprep.subr.mxu0 0.0
        %2353 = vmatpush1.msra.mxu0 0.0
        %2354 = vmatprep.subr.mxu0 0.0
        %2355 = vmatpush1.msra.mxu0 0.0
        %2356 = vmatprep.subr.mxu0 0.0
        %2357 = vmatpush1.msra.mxu0 0.0
        %2358 = vmatprep.subr.mxu0 0.0
        %2359 = vmatpush1.msra.mxu0 0.0
        %2360 = vmatprep.subr.mxu0 0.0
        %2361 = vmatpush1.msra.mxu0 0.0
        %2362 = vmatprep.mubr.f32.mxu0 0.0
        %2363 = vmatmul.mubr.f32.gmra.mrb[0].mxu0 %v2133
        %v2364 = vpop.f32.mrb[0].mxu0
        %v2365 = vadd.f32 0.0, %v2364
        %v2366 = vpop.f32.mrb[0].mxu0
        %v2367 = vadd.f32 0.0, %v2366
        %2368 = vmatprep.mubr.f32.mxu0 0.0
        %2369 = vmatmul.mubr.f32.gmra.mrb[0].mxu0 %v2134
        %v2370 = vpop.f32.mrb[0].mxu0
        %v2371 = vadd.f32 0.0, %v2370
        %v2372 = vpop.f32.mrb[0].mxu0
        %v2373 = vadd.f32 0.0, %v2372
        %2374 = vmatprep.mubr.f32.mxu0 0.0
        %2375 = vmatmul.mubr.f32.gmra.mrb[0].mxu0 %v2135
        %v2376 = vpop.f32.mrb[0].mxu0
        %v2377 = vadd.f32 0.0, %v2376
        %v2378 = vpop.f32.mrb[0].mxu0
        %v2379 = vadd.f32 0.0, %v2378
        %2380 = vmatprep.mubr.f32.mxu0 0.0
        %2381 = vmatmul.mubr.f32.gmra.mrb[0].mxu0 %v2136
        %v2382 = vpop.f32.mrb[0].mxu0
        %v2383 = vadd.f32 0.0, %v2382
        %v2384 = vpop.f32.mrb[0].mxu0
        %v2385 = vadd.f32 0.0, %v2384
        %2386 = vdwg.mxu0
        %v2387 = vadd.f32 %v2124, %v2365
        %v2388 = vadd.f32 %v2125, %v2367
        %v2389 = vadd.f32 %v2126, %v2371
        %v2390 = vadd.f32 %v2127, %v2373
        %v2391 = vadd.f32 %v2128, %v2377
        %v2392 = vadd.f32 %v2129, %v2379
        %v2393 = vadd.f32 %v2130, %v2383
        %v2394 = vadd.f32 %v2131, %v2385
        %2395 = vrot.lane.b32.xlu0 %v1058, 110
        %v2396 = vpop.permute.xlu0 %2395
        %2397 = vrot.lane.b32.xlu0 %v1059, 110
        %v2398 = vpop.permute.xlu0 %2397
        %2399 = vrot.lane.b32.xlu0 %v1130, 110
        %v2400 = vpop.permute.xlu0 %2399
        %2401 = vrot.lane.b32.xlu0 %v1060, 110
        %v2402 = vpop.permute.xlu0 %2401
        %2403 = vrot.lane.b32.xlu0 %v1061, 110
        %v2404 = vpop.permute.xlu0 %2403
        %2405 = vrot.lane.b32.xlu0 %v1131, 110
        %v2406 = vpop.permute.xlu0 %2405
        %2407 = vrot.lane.b32.xlu0 %v1062, 110
        %v2408 = vpop.permute.xlu0 %2407
        %2409 = vrot.lane.b32.xlu0 %v1063, 110
        %v2410 = vpop.permute.xlu0 %2409
        %2411 = vrot.lane.b32.xlu0 %v1132, 110
        %v2412 = vpop.permute.xlu0 %2411
        %2413 = vrot.lane.b32.xlu0 %v1064, 110
        %v2414 = vpop.permute.xlu0 %2413
        %2415 = vrot.lane.b32.xlu0 %v1065, 110
        %v2416 = vpop.permute.xlu0 %2415
        %2417 = vrot.lane.b32.xlu0 %v1133, 110
        %v2418 = vpop.permute.xlu0 %2417
        %2419 = vrot.lane.b32.xlu0 %v1066, 110
        %v2420 = vpop.permute.xlu0 %2419
        %2421 = vrot.lane.b32.xlu0 %v1067, 110
        %v2422 = vpop.permute.xlu0 %2421
        %2423 = vrot.lane.b32.xlu0 %v1134, 110
        %v2424 = vpop.permute.xlu0 %2423
        %2425 = vrot.lane.b32.xlu0 %v1068, 110
        %v2426 = vpop.permute.xlu0 %2425
        %2427 = vrot.lane.b32.xlu0 %v1069, 110
        %v2428 = vpop.permute.xlu0 %2427
        %2429 = vrot.lane.b32.xlu0 %v1135, 110
        %v2430 = vpop.permute.xlu0 %2429
        %2431 = vrot.lane.b32.xlu0 %v1070, 110
        %v2432 = vpop.permute.xlu0 %2431
        %2433 = vrot.lane.b32.xlu0 %v1071, 110
        %v2434 = vpop.permute.xlu0 %2433
        %2435 = vrot.lane.b32.xlu0 %v1136, 110
        %v2436 = vpop.permute.xlu0 %2435
        %2437 = vrot.lane.b32.xlu0 %v1072, 110
        %v2438 = vpop.permute.xlu0 %2437
        %2439 = vrot.lane.b32.xlu0 %v1073, 110
        %v2440 = vpop.permute.xlu0 %2439
        %2441 = vrot.lane.b32.xlu0 %v1137, 110
        %v2442 = vpop.permute.xlu0 %2441
        %2443 = vrot.lane.b32.xlu0 %v1074, 110
        %v2444 = vpop.permute.xlu0 %2443
        %2445 = vrot.lane.b32.xlu0 %v1075, 110
        %v2446 = vpop.permute.xlu0 %2445
        %2447 = vrot.lane.b32.xlu0 %v1138, 110
        %v2448 = vpop.permute.xlu0 %2447
        %2449 = vrot.lane.b32.xlu0 %v1076, 110
        %v2450 = vpop.permute.xlu0 %2449
        %2451 = vrot.lane.b32.xlu0 %v1077, 110
        %v2452 = vpop.permute.xlu0 %2451
        %2453 = vrot.lane.b32.xlu0 %v1139, 110
        %v2454 = vpop.permute.xlu0 %2453
        %2455 = vrot.lane.b32.xlu0 %v1078, 110
        %v2456 = vpop.permute.xlu0 %2455
        %2457 = vrot.lane.b32.xlu0 %v1079, 110
        %v2458 = vpop.permute.xlu0 %2457
        %2459 = vrot.lane.b32.xlu0 %v1140, 110
        %v2460 = vpop.permute.xlu0 %2459
        %2461 = vrot.lane.b32.xlu0 %v1080, 110
        %v2462 = vpop.permute.xlu0 %2461
        %2463 = vrot.lane.b32.xlu0 %v1081, 110
        %v2464 = vpop.permute.xlu0 %2463
        %2465 = vrot.lane.b32.xlu0 %v1141, 110
        %v2466 = vpop.permute.xlu0 %2465
        %2467 = vrot.lane.b32.xlu0 %v1082, 110
        %v2468 = vpop.permute.xlu0 %2467
        %2469 = vrot.lane.b32.xlu0 %v1083, 110
        %v2470 = vpop.permute.xlu0 %2469
        %2471 = vrot.lane.b32.xlu0 %v1142, 110
        %v2472 = vpop.permute.xlu0 %2471
        %2473 = vrot.lane.b32.xlu0 %v1084, 110
        %v2474 = vpop.permute.xlu0 %2473
        %2475 = vrot.lane.b32.xlu0 %v1085, 110
        %v2476 = vpop.permute.xlu0 %2475
        %2477 = vrot.lane.b32.xlu0 %v1143, 110
        %v2478 = vpop.permute.xlu0 %2477
        %2479 = vrot.lane.b32.xlu0 %v1086, 110
        %v2480 = vpop.permute.xlu0 %2479
        %2481 = vrot.lane.b32.xlu0 %v1087, 110
        %v2482 = vpop.permute.xlu0 %2481
        %2483 = vrot.lane.b32.xlu0 %v1144, 110
        %v2484 = vpop.permute.xlu0 %2483
        %2485 = vrot.lane.b32.xlu0 %v1088, 110
        %v2486 = vpop.permute.xlu0 %2485
        %2487 = vrot.lane.b32.xlu0 %v1089, 110
        %v2488 = vpop.permute.xlu0 %2487
        %2489 = vrot.lane.b32.xlu0 %v1145, 110
        %v2490 = vpop.permute.xlu0 %2489
        %vm2491 = vcmask 900096
        %v2492 = vsel %vm2491, %v2396, %v2398
        %v2493 = vsel %vm2491, %v2398, %v2400
        %v2494 = vsel %vm2491, %v2402, %v2404
        %v2495 = vsel %vm2491, %v2404, %v2406
        %v2496 = vsel %vm2491, %v2408, %v2410
        %v2497 = vsel %vm2491, %v2410, %v2412
        %v2498 = vsel %vm2491, %v2414, %v2416
        %v2499 = vsel %vm2491, %v2416, %v2418
        %v2500 = vsel %vm2491, %v2420, %v2422
        %v2501 = vsel %vm2491, %v2422, %v2424
        %v2502 = vsel %vm2491, %v2426, %v2428
        %v2503 = vsel %vm2491, %v2428, %v2430
        %v2504 = vsel %vm2491, %v2432, %v2434
        %v2505 = vsel %vm2491, %v2434, %v2436
        %v2506 = vsel %vm2491, %v2438, %v2440
        %v2507 = vsel %vm2491, %v2440, %v2442
        %v2508 = vsel %vm2491, %v2444, %v2446
        %v2509 = vsel %vm2491, %v2446, %v2448
        %v2510 = vsel %vm2491, %v2450, %v2452
        %v2511 = vsel %vm2491, %v2452, %v2454
        %v2512 = vsel %vm2491, %v2456, %v2458
        %v2513 = vsel %vm2491, %v2458, %v2460
        %v2514 = vsel %vm2491, %v2462, %v2464
        %v2515 = vsel %vm2491, %v2464, %v2466
        %v2516 = vsel %vm2491, %v2468, %v2470
        %v2517 = vsel %vm2491, %v2470, %v2472
        %v2518 = vsel %vm2491, %v2474, %v2476
        %v2519 = vsel %vm2491, %v2476, %v2478
        %v2520 = vsel %vm2491, %v2480, %v2482
        %v2521 = vsel %vm2491, %v2482, %v2484
        %v2522 = vsel %vm2491, %v2486, %v2488
        %v2523 = vsel %vm2491, %v2488, %v2490
        %v2556 = vsel %vm1540, %v2492, 0.0
        %v2557 = vsel %vm1541, %v2493, 0.0
        %v2558 = vsel %vm1540, %v2494, 0.0
        %v2559 = vsel %vm1541, %v2495, 0.0
        %v2560 = vsel %vm1540, %v2496, 0.0
        %v2561 = vsel %vm1541, %v2497, 0.0
        %v2562 = vsel %vm1540, %v2498, 0.0
        %v2563 = vsel %vm1541, %v2499, 0.0
        %v2564 = vsel %vm1540, %v2500, 0.0
        %v2565 = vsel %vm1541, %v2501, 0.0
        %v2566 = vsel %vm1540, %v2502, 0.0
        %v2567 = vsel %vm1541, %v2503, 0.0
        %v2568 = vsel %vm1540, %v2504, 0.0
        %v2569 = vsel %vm1541, %v2505, 0.0
        %v2570 = vsel %vm1540, %v2506, 0.0
        %v2571 = vsel %vm1541, %v2507, 0.0
        %v2572 = vsel %vm1540, %v2508, 0.0
        %v2573 = vsel %vm1541, %v2509, 0.0
        %v2574 = vsel %vm1540, %v2510, 0.0
        %v2575 = vsel %vm1541, %v2511, 0.0
        %v2576 = vsel %vm1540, %v2512, 0.0
        %v2577 = vsel %vm1541, %v2513, 0.0
        %v2578 = vsel %vm1540, %v2514, 0.0
        %v2579 = vsel %vm1541, %v2515, 0.0
        %v2580 = vsel %vm1540, %v2516, 0.0
        %v2581 = vsel %vm1541, %v2517, 0.0
        %v2582 = vsel %vm1540, %v2518, 0.0
        %v2583 = vsel %vm1541, %v2519, 0.0
        %v2584 = vsel %vm1540, %v2520, 0.0
        %v2585 = vsel %vm1541, %v2521, 0.0
        %v2586 = vsel %vm1540, %v2522, 0.0
        %v2587 = vsel %vm1541, %v2523, 0.0
        %s2588 = scalar_lea.vmem %s5, 160
        %v2589 = vld [vmem:[%s2588] sm:$0xff]
        %v2590 = vld [vmem:[%s2588 + $0x8] sm:$0xff]
        %v2591 = vld [vmem:[%s2588 + $0x10] sm:$0xff]
        %v2592 = vld [vmem:[%s2588 + $0x18] sm:$0xff]
        %2593 = vmatprep.subr.mxu0 %v2557
        %2594 = vmatpush1.msra.mxu0 %v2556
        %2595 = vmatprep.subr.mxu0 %v2559
        %2596 = vmatpush1.msra.mxu0 %v2558
        %2597 = vmatprep.subr.mxu0 %v2561
        %2598 = vmatpush1.msra.mxu0 %v2560
        %2599 = vmatprep.subr.mxu0 %v2563
        %2600 = vmatpush1.msra.mxu0 %v2562
        %2601 = vmatprep.subr.mxu0 %v2565
        %2602 = vmatpush1.msra.mxu0 %v2564
        %2603 = vmatprep.subr.mxu0 %v2567
        %2604 = vmatpush1.msra.mxu0 %v2566
        %2605 = vmatprep.subr.mxu0 %v2569
        %2606 = vmatpush1.msra.mxu0 %v2568
        %2607 = vmatprep.subr.mxu0 %v2571
        %2608 = vmatpush1.msra.mxu0 %v2570
        %2609 = vmatprep.subr.mxu0 %v2573
        %2610 = vmatpush1.msra.mxu0 %v2572
        %2611 = vmatprep.subr.mxu0 %v2575
        %2612 = vmatpush1.msra.mxu0 %v2574
        %2613 = vmatprep.subr.mxu0 %v2577
        %2614 = vmatpush1.msra.mxu0 %v2576
        %2615 = vmatprep.subr.mxu0 %v2579
        %2616 = vmatpush1.msra.mxu0 %v2578
        %2617 = vmatprep.subr.mxu0 %v2581
        %2618 = vmatpush1.msra.mxu0 %v2580
        %2619 = vmatprep.subr.mxu0 %v2583
        %2620 = vmatpush1.msra.mxu0 %v2582
        %2621 = vmatprep.subr.mxu0 %v2585
        %2622 = vmatpush1.msra.mxu0 %v2584
        %2623 = vmatprep.subr.mxu0 %v2587
        %2624 = vmatpush1.msra.mxu0 %v2586
        %2625 = vmatprep.subr.mxu0 0.0
        %2626 = vmatpush1.msra.mxu0 0.0
        %2627 = vmatprep.subr.mxu0 0.0
        %2628 = vmatpush1.msra.mxu0 0.0
        %2629 = vmatprep.subr.mxu0 0.0
        %2630 = vmatpush1.msra.mxu0 0.0
        %2631 = vmatprep.subr.mxu0 0.0
        %2632 = vmatpush1.msra.mxu0 0.0
        %2633 = vmatprep.subr.mxu0 0.0
        %2634 = vmatpush1.msra.mxu0 0.0
        %2635 = vmatprep.subr.mxu0 0.0
        %2636 = vmatpush1.msra.mxu0 0.0
        %2637 = vmatprep.subr.mxu0 0.0
        %2638 = vmatpush1.msra.mxu0 0.0
        %2639 = vmatprep.subr.mxu0 0.0
        %2640 = vmatpush1.msra.mxu0 0.0
        %2641 = vmatprep.subr.mxu0 0.0
        %2642 = vmatpush1.msra.mxu0 0.0
        %2643 = vmatprep.subr.mxu0 0.0
        %2644 = vmatpush1.msra.mxu0 0.0
        %2645 = vmatprep.subr.mxu0 0.0
        %2646 = vmatpush1.msra.mxu0 0.0
        %2647 = vmatprep.subr.mxu0 0.0
        %2648 = vmatpush1.msra.mxu0 0.0
        %2649 = vmatprep.subr.mxu0 0.0
        %2650 = vmatpush1.msra.mxu0 0.0
        %2651 = vmatprep.subr.mxu0 0.0
        %2652 = vmatpush1.msra.mxu0 0.0
        %2653 = vmatprep.subr.mxu0 0.0
        %2654 = vmatpush1.msra.mxu0 0.0
        %2655 = vmatprep.subr.mxu0 0.0
        %2656 = vmatpush1.msra.mxu0 0.0
        %2657 = vmatprep.mubr.f32.mxu0 0.0
        %2658 = vmatmul.mubr.f32.gmra.mrb[0].mxu0 %v2589
        %v2659 = vpop.f32.mrb[0].mxu0
        %v2660 = vadd.f32 0.0, %v2659
        %v2661 = vpop.f32.mrb[0].mxu0
        %v2662 = vadd.f32 0.0, %v2661
        %2663 = vmatprep.mubr.f32.mxu0 0.0
        %2664 = vmatmul.mubr.f32.gmra.mrb[0].mxu0 %v2590
        %v2665 = vpop.f32.mrb[0].mxu0
        %v2666 = vadd.f32 0.0, %v2665
        %v2667 = vpop.f32.mrb[0].mxu0
        %v2668 = vadd.f32 0.0, %v2667
        %2669 = vmatprep.mubr.f32.mxu0 0.0
        %2670 = vmatmul.mubr.f32.gmra.mrb[0].mxu0 %v2591
        %v2671 = vpop.f32.mrb[0].mxu0
        %v2672 = vadd.f32 0.0, %v2671
        %v2673 = vpop.f32.mrb[0].mxu0
        %v2674 = vadd.f32 0.0, %v2673
        %2675 = vmatprep.mubr.f32.mxu0 0.0
        %2676 = vmatmul.mubr.f32.gmra.mrb[0].mxu0 %v2592
        %v2677 = vpop.f32.mrb[0].mxu0
        %v2678 = vadd.f32 0.0, %v2677
        %v2679 = vpop.f32.mrb[0].mxu0
        %v2680 = vadd.f32 0.0, %v2679
        %2681 = vdwg.mxu0
        %v2682 = vadd.f32 %v2387, %v2660
        %v2683 = vadd.f32 %v2388, %v2662
        %v2684 = vadd.f32 %v2389, %v2666
        %v2685 = vadd.f32 %v2390, %v2668
        %v2686 = vadd.f32 %v2391, %v2672
        %v2687 = vadd.f32 %v2392, %v2674
        %v2688 = vadd.f32 %v2393, %v2678
        %v2689 = vadd.f32 %v2394, %v2680
        %2690 = vrot.lane.b32.xlu0 %v1058, 96
        %v2691 = vpop.permute.xlu0 %2690
        %2692 = vrot.lane.b32.xlu0 %v1059, 96
        %v2693 = vpop.permute.xlu0 %2692
        %2694 = vrot.lane.b32.xlu0 %v1130, 96
        %v2695 = vpop.permute.xlu0 %2694
        %2696 = vrot.lane.b32.xlu0 %v1060, 96
        %v2697 = vpop.permute.xlu0 %2696
        %2698 = vrot.lane.b32.xlu0 %v1061, 96
        %v2699 = vpop.permute.xlu0 %2698
        %2700 = vrot.lane.b32.xlu0 %v1131, 96
        %v2701 = vpop.permute.xlu0 %2700
        %2702 = vrot.lane.b32.xlu0 %v1062, 96
        %v2703 = vpop.permute.xlu0 %2702
        %2704 = vrot.lane.b32.xlu0 %v1063, 96
        %v2705 = vpop.permute.xlu0 %2704
        %2706 = vrot.lane.b32.xlu0 %v1132, 96
        %v2707 = vpop.permute.xlu0 %2706
        %2708 = vrot.lane.b32.xlu0 %v1064, 96
        %v2709 = vpop.permute.xlu0 %2708
        %2710 = vrot.lane.b32.xlu0 %v1065, 96
        %v2711 = vpop.permute.xlu0 %2710
        %2712 = vrot.lane.b32.xlu0 %v1133, 96
        %v2713 = vpop.permute.xlu0 %2712
        %2714 = vrot.lane.b32.xlu0 %v1066, 96
        %v2715 = vpop.permute.xlu0 %2714
        %2716 = vrot.lane.b32.xlu0 %v1067, 96
        %v2717 = vpop.permute.xlu0 %2716
        %2718 = vrot.lane.b32.xlu0 %v1134, 96
        %v2719 = vpop.permute.xlu0 %2718
        %2720 = vrot.lane.b32.xlu0 %v1068, 96
        %v2721 = vpop.permute.xlu0 %2720
        %2722 = vrot.lane.b32.xlu0 %v1069, 96
        %v2723 = vpop.permute.xlu0 %2722
        %2724 = vrot.lane.b32.xlu0 %v1135, 96
        %v2725 = vpop.permute.xlu0 %2724
        %2726 = vrot.lane.b32.xlu0 %v1070, 96
        %v2727 = vpop.permute.xlu0 %2726
        %2728 = vrot.lane.b32.xlu0 %v1071, 96
        %v2729 = vpop.permute.xlu0 %2728
        %2730 = vrot.lane.b32.xlu0 %v1136, 96
        %v2731 = vpop.permute.xlu0 %2730
        %2732 = vrot.lane.b32.xlu0 %v1072, 96
        %v2733 = vpop.permute.xlu0 %2732
        %2734 = vrot.lane.b32.xlu0 %v1073, 96
        %v2735 = vpop.permute.xlu0 %2734
        %2736 = vrot.lane.b32.xlu0 %v1137, 96
        %v2737 = vpop.permute.xlu0 %2736
        %2738 = vrot.lane.b32.xlu0 %v1074, 96
        %v2739 = vpop.permute.xlu0 %2738
        %2740 = vrot.lane.b32.xlu0 %v1075, 96
        %v2741 = vpop.permute.xlu0 %2740
        %2742 = vrot.lane.b32.xlu0 %v1138, 96
        %v2743 = vpop.permute.xlu0 %2742
        %2744 = vrot.lane.b32.xlu0 %v1076, 96
        %v2745 = vpop.permute.xlu0 %2744
        %2746 = vrot.lane.b32.xlu0 %v1077, 96
        %v2747 = vpop.permute.xlu0 %2746
        %2748 = vrot.lane.b32.xlu0 %v1139, 96
        %v2749 = vpop.permute.xlu0 %2748
        %2750 = vrot.lane.b32.xlu0 %v1078, 96
        %v2751 = vpop.permute.xlu0 %2750
        %2752 = vrot.lane.b32.xlu0 %v1079, 96
        %v2753 = vpop.permute.xlu0 %2752
        %2754 = vrot.lane.b32.xlu0 %v1140, 96
        %v2755 = vpop.permute.xlu0 %2754
        %2756 = vrot.lane.b32.xlu0 %v1080, 96
        %v2757 = vpop.permute.xlu0 %2756
        %2758 = vrot.lane.b32.xlu0 %v1081, 96
        %v2759 = vpop.permute.xlu0 %2758
        %2760 = vrot.lane.b32.xlu0 %v1141, 96
        %v2761 = vpop.permute.xlu0 %2760
        %2762 = vrot.lane.b32.xlu0 %v1082, 96
        %v2763 = vpop.permute.xlu0 %2762
        %2764 = vrot.lane.b32.xlu0 %v1083, 96
        %v2765 = vpop.permute.xlu0 %2764
        %2766 = vrot.lane.b32.xlu0 %v1142, 96
        %v2767 = vpop.permute.xlu0 %2766
        %2768 = vrot.lane.b32.xlu0 %v1084, 96
        %v2769 = vpop.permute.xlu0 %2768
        %2770 = vrot.lane.b32.xlu0 %v1085, 96
        %v2771 = vpop.permute.xlu0 %2770
        %2772 = vrot.lane.b32.xlu0 %v1143, 96
        %v2773 = vpop.permute.xlu0 %2772
        %2774 = vrot.lane.b32.xlu0 %v1086, 96
        %v2775 = vpop.permute.xlu0 %2774
        %2776 = vrot.lane.b32.xlu0 %v1087, 96
        %v2777 = vpop.permute.xlu0 %2776
        %2778 = vrot.lane.b32.xlu0 %v1144, 96
        %v2779 = vpop.permute.xlu0 %2778
        %2780 = vrot.lane.b32.xlu0 %v1088, 96
        %v2781 = vpop.permute.xlu0 %2780
        %2782 = vrot.lane.b32.xlu0 %v1089, 96
        %v2783 = vpop.permute.xlu0 %2782
        %2784 = vrot.lane.b32.xlu0 %v1145, 96
        %v2785 = vpop.permute.xlu0 %2784
        %vm2786 = vcmask 785408
        %v2787 = vsel %vm2786, %v2691, %v2693
        %v2788 = vsel %vm2786, %v2693, %v2695
        %v2789 = vsel %vm2786, %v2697, %v2699
        %v2790 = vsel %vm2786, %v2699, %v2701
        %v2791 = vsel %vm2786, %v2703, %v2705
        %v2792 = vsel %vm2786, %v2705, %v2707
        %v2793 = vsel %vm2786, %v2709, %v2711
        %v2794 = vsel %vm2786, %v2711, %v2713
        %v2795 = vsel %vm2786, %v2715, %v2717
        %v2796 = vsel %vm2786, %v2717, %v2719
        %v2797 = vsel %vm2786, %v2721, %v2723
        %v2798 = vsel %vm2786, %v2723, %v2725
        %v2799 = vsel %vm2786, %v2727, %v2729
        %v2800 = vsel %vm2786, %v2729, %v2731
        %v2801 = vsel %vm2786, %v2733, %v2735
        %v2802 = vsel %vm2786, %v2735, %v2737
        %v2803 = vsel %vm2786, %v2739, %v2741
        %v2804 = vsel %vm2786, %v2741, %v2743
        %v2805 = vsel %vm2786, %v2745, %v2747
        %v2806 = vsel %vm2786, %v2747, %v2749
        %v2807 = vsel %vm2786, %v2751, %v2753
        %v2808 = vsel %vm2786, %v2753, %v2755
        %v2809 = vsel %vm2786, %v2757, %v2759
        %v2810 = vsel %vm2786, %v2759, %v2761
        %v2811 = vsel %vm2786, %v2763, %v2765
        %v2812 = vsel %vm2786, %v2765, %v2767
        %v2813 = vsel %vm2786, %v2769, %v2771
        %v2814 = vsel %vm2786, %v2771, %v2773
        %v2815 = vsel %vm2786, %v2775, %v2777
        %v2816 = vsel %vm2786, %v2777, %v2779
        %v2817 = vsel %vm2786, %v2781, %v2783
        %v2818 = vsel %vm2786, %v2783, %v2785
        %v2851 = vsel %vm1092, %v2787, 0.0
        %v2852 = vsel %vm1093, %v2788, 0.0
        %v2853 = vsel %vm1092, %v2789, 0.0
        %v2854 = vsel %vm1093, %v2790, 0.0
        %v2855 = vsel %vm1092, %v2791, 0.0
        %v2856 = vsel %vm1093, %v2792, 0.0
        %v2857 = vsel %vm1092, %v2793, 0.0
        %v2858 = vsel %vm1093, %v2794, 0.0
        %v2859 = vsel %vm1092, %v2795, 0.0
        %v2860 = vsel %vm1093, %v2796, 0.0
        %v2861 = vsel %vm1092, %v2797, 0.0
        %v2862 = vsel %vm1093, %v2798, 0.0
        %v2863 = vsel %vm1092, %v2799, 0.0
        %v2864 = vsel %vm1093, %v2800, 0.0
        %v2865 = vsel %vm1092, %v2801, 0.0
        %v2866 = vsel %vm1093, %v2802, 0.0
        %v2867 = vsel %vm1092, %v2803, 0.0
        %v2868 = vsel %vm1093, %v2804, 0.0
        %v2869 = vsel %vm1092, %v2805, 0.0
        %v2870 = vsel %vm1093, %v2806, 0.0
        %v2871 = vsel %vm1092, %v2807, 0.0
        %v2872 = vsel %vm1093, %v2808, 0.0
        %v2873 = vsel %vm1092, %v2809, 0.0
        %v2874 = vsel %vm1093, %v2810, 0.0
        %v2875 = vsel %vm1092, %v2811, 0.0
        %v2876 = vsel %vm1093, %v2812, 0.0
        %v2877 = vsel %vm1092, %v2813, 0.0
        %v2878 = vsel %vm1093, %v2814, 0.0
        %v2879 = vsel %vm1092, %v2815, 0.0
        %v2880 = vsel %vm1093, %v2816, 0.0
        %v2881 = vsel %vm1092, %v2817, 0.0
        %v2882 = vsel %vm1093, %v2818, 0.0
        %s2883 = scalar_lea.vmem %s5, 192
        %v2884 = vld [vmem:[%s2883] sm:$0xff]
        %v2885 = vld [vmem:[%s2883 + $0x8] sm:$0xff]
        %v2886 = vld [vmem:[%s2883 + $0x10] sm:$0xff]
        %v2887 = vld [vmem:[%s2883 + $0x18] sm:$0xff]
        %2888 = vmatprep.subr.mxu0 %v2852
        %2889 = vmatpush1.msra.mxu0 %v2851
        %2890 = vmatprep.subr.mxu0 %v2854
        %2891 = vmatpush1.msra.mxu0 %v2853
        %2892 = vmatprep.subr.mxu0 %v2856
        %2893 = vmatpush1.msra.mxu0 %v2855
        %2894 = vmatprep.subr.mxu0 %v2858
        %2895 = vmatpush1.msra.mxu0 %v2857
        %2896 = vmatprep.subr.mxu0 %v2860
        %2897 = vmatpush1.msra.mxu0 %v2859
        %2898 = vmatprep.subr.mxu0 %v2862
        %2899 = vmatpush1.msra.mxu0 %v2861
        %2900 = vmatprep.subr.mxu0 %v2864
        %2901 = vmatpush1.msra.mxu0 %v2863
        %2902 = vmatprep.subr.mxu0 %v2866
        %2903 = vmatpush1.msra.mxu0 %v2865
        %2904 = vmatprep.subr.mxu0 %v2868
        %2905 = vmatpush1.msra.mxu0 %v2867
        %2906 = vmatprep.subr.mxu0 %v2870
        %2907 = vmatpush1.msra.mxu0 %v2869
        %2908 = vmatprep.subr.mxu0 %v2872
        %2909 = vmatpush1.msra.mxu0 %v2871
        %2910 = vmatprep.subr.mxu0 %v2874
        %2911 = vmatpush1.msra.mxu0 %v2873
        %2912 = vmatprep.subr.mxu0 %v2876
        %2913 = vmatpush1.msra.mxu0 %v2875
        %2914 = vmatprep.subr.mxu0 %v2878
        %2915 = vmatpush1.msra.mxu0 %v2877
        %2916 = vmatprep.subr.mxu0 %v2880
        %2917 = vmatpush1.msra.mxu0 %v2879
        %2918 = vmatprep.subr.mxu0 %v2882
        %2919 = vmatpush1.msra.mxu0 %v2881
        %2920 = vmatprep.subr.mxu0 0.0
        %2921 = vmatpush1.msra.mxu0 0.0
        %2922 = vmatprep.subr.mxu0 0.0
        %2923 = vmatpush1.msra.mxu0 0.0
        %2924 = vmatprep.subr.mxu0 0.0
        %2925 = vmatpush1.msra.mxu0 0.0
        %2926 = vmatprep.subr.mxu0 0.0
        %2927 = vmatpush1.msra.mxu0 0.0
        %2928 = vmatprep.subr.mxu0 0.0
        %2929 = vmatpush1.msra.mxu0 0.0
        %2930 = vmatprep.subr.mxu0 0.0
        %2931 = vmatpush1.msra.mxu0 0.0
        %2932 = vmatprep.subr.mxu0 0.0
        %2933 = vmatpush1.msra.mxu0 0.0
        %2934 = vmatprep.subr.mxu0 0.0
        %2935 = vmatpush1.msra.mxu0 0.0
        %2936 = vmatprep.subr.mxu0 0.0
        %2937 = vmatpush1.msra.mxu0 0.0
        %2938 = vmatprep.subr.mxu0 0.0
        %2939 = vmatpush1.msra.mxu0 0.0
        %2940 = vmatprep.subr.mxu0 0.0
        %2941 = vmatpush1.msra.mxu0 0.0
        %2942 = vmatprep.subr.mxu0 0.0
        %2943 = vmatpush1.msra.mxu0 0.0
        %2944 = vmatprep.subr.mxu0 0.0
        %2945 = vmatpush1.msra.mxu0 0.0
        %2946 = vmatprep.subr.mxu0 0.0
        %2947 = vmatpush1.msra.mxu0 0.0
        %2948 = vmatprep.subr.mxu0 0.0
        %2949 = vmatpush1.msra.mxu0 0.0
        %2950 = vmatprep.subr.mxu0 0.0
        %2951 = vmatpush1.msra.mxu0 0.0
        %2952 = vmatprep.mubr.f32.mxu0 0.0
        %2953 = vmatmul.mubr.f32.gmra.mrb[0].mxu0 %v2884
        %v2954 = vpop.f32.mrb[0].mxu0
        %v2955 = vadd.f32 0.0, %v2954
        %v2956 = vpop.f32.mrb[0].mxu0
        %v2957 = vadd.f32 0.0, %v2956
        %2958 = vmatprep.mubr.f32.mxu0 0.0
        %2959 = vmatmul.mubr.f32.gmra.mrb[0].mxu0 %v2885
        %v2960 = vpop.f32.mrb[0].mxu0
        %v2961 = vadd.f32 0.0, %v2960
        %v2962 = vpop.f32.mrb[0].mxu0
        %v2963 = vadd.f32 0.0, %v2962
        %2964 = vmatprep.mubr.f32.mxu0 0.0
        %2965 = vmatmul.mubr.f32.gmra.mrb[0].mxu0 %v2886
        %v2966 = vpop.f32.mrb[0].mxu0
        %v2967 = vadd.f32 0.0, %v2966
        %v2968 = vpop.f32.mrb[0].mxu0
        %v2969 = vadd.f32 0.0, %v2968
        %2970 = vmatprep.mubr.f32.mxu0 0.0
        %2971 = vmatmul.mubr.f32.gmra.mrb[0].mxu0 %v2887
        %v2972 = vpop.f32.mrb[0].mxu0
        %v2973 = vadd.f32 0.0, %v2972
        %v2974 = vpop.f32.mrb[0].mxu0
        %v2975 = vadd.f32 0.0, %v2974
        %2976 = vdwg.mxu0
        %v2977 = vadd.f32 %v2682, %v2955
        %v2978 = vadd.f32 %v2683, %v2957
        %v2979 = vadd.f32 %v2684, %v2961
        %v2980 = vadd.f32 %v2685, %v2963
        %v2981 = vadd.f32 %v2686, %v2967
        %v2982 = vadd.f32 %v2687, %v2969
        %v2983 = vadd.f32 %v2688, %v2973
        %v2984 = vadd.f32 %v2689, %v2975
        %s2985 = scalar_lea.vmem %s5, 224
        %v2986 = vld [vmem:[%s2985] sm:$0xff]
        %v2987 = vld [vmem:[%s2985 + $0x8] sm:$0xff]
        %v2988 = vld [vmem:[%s2985 + $0x10] sm:$0xff]
        %v2989 = vld [vmem:[%s2985 + $0x18] sm:$0xff]
        %2990 = vrot.lane.b32.xlu0 %v1058, 95
        %v2991 = vpop.permute.xlu0 %2990
        %2992 = vrot.lane.b32.xlu0 %v1059, 95
        %v2993 = vpop.permute.xlu0 %2992
        %2994 = vrot.lane.b32.xlu0 %v1130, 95
        %v2995 = vpop.permute.xlu0 %2994
        %2996 = vrot.lane.b32.xlu0 %v1060, 95
        %v2997 = vpop.permute.xlu0 %2996
        %2998 = vrot.lane.b32.xlu0 %v1061, 95
        %v2999 = vpop.permute.xlu0 %2998
        %3000 = vrot.lane.b32.xlu0 %v1131, 95
        %v3001 = vpop.permute.xlu0 %3000
        %3002 = vrot.lane.b32.xlu0 %v1062, 95
        %v3003 = vpop.permute.xlu0 %3002
        %3004 = vrot.lane.b32.xlu0 %v1063, 95
        %v3005 = vpop.permute.xlu0 %3004
        %3006 = vrot.lane.b32.xlu0 %v1132, 95
        %v3007 = vpop.permute.xlu0 %3006
        %3008 = vrot.lane.b32.xlu0 %v1064, 95
        %v3009 = vpop.permute.xlu0 %3008
        %3010 = vrot.lane.b32.xlu0 %v1065, 95
        %v3011 = vpop.permute.xlu0 %3010
        %3012 = vrot.lane.b32.xlu0 %v1133, 95
        %v3013 = vpop.permute.xlu0 %3012
        %3014 = vrot.lane.b32.xlu0 %v1066, 95
        %v3015 = vpop.permute.xlu0 %3014
        %3016 = vrot.lane.b32.xlu0 %v1067, 95
        %v3017 = vpop.permute.xlu0 %3016
        %3018 = vrot.lane.b32.xlu0 %v1134, 95
        %v3019 = vpop.permute.xlu0 %3018
        %3020 = vrot.lane.b32.xlu0 %v1068, 95
        %v3021 = vpop.permute.xlu0 %3020
        %3022 = vrot.lane.b32.xlu0 %v1069, 95
        %v3023 = vpop.permute.xlu0 %3022
        %3024 = vrot.lane.b32.xlu0 %v1135, 95
        %v3025 = vpop.permute.xlu0 %3024
        %3026 = vrot.lane.b32.xlu0 %v1070, 95
        %v3027 = vpop.permute.xlu0 %3026
        %3028 = vrot.lane.b32.xlu0 %v1071, 95
        %v3029 = vpop.permute.xlu0 %3028
        %3030 = vrot.lane.b32.xlu0 %v1136, 95
        %v3031 = vpop.permute.xlu0 %3030
        %3032 = vrot.lane.b32.xlu0 %v1072, 95
        %v3033 = vpop.permute.xlu0 %3032
        %3034 = vrot.lane.b32.xlu0 %v1073, 95
        %v3035 = vpop.permute.xlu0 %3034
        %3036 = vrot.lane.b32.xlu0 %v1137, 95
        %v3037 = vpop.permute.xlu0 %3036
        %3038 = vrot.lane.b32.xlu0 %v1074, 95
        %v3039 = vpop.permute.xlu0 %3038
        %3040 = vrot.lane.b32.xlu0 %v1075, 95
        %v3041 = vpop.permute.xlu0 %3040
        %3042 = vrot.lane.b32.xlu0 %v1138, 95
        %v3043 = vpop.permute.xlu0 %3042
        %3044 = vrot.lane.b32.xlu0 %v1076, 95
        %v3045 = vpop.permute.xlu0 %3044
        %3046 = vrot.lane.b32.xlu0 %v1077, 95
        %v3047 = vpop.permute.xlu0 %3046
        %3048 = vrot.lane.b32.xlu0 %v1139, 95
        %v3049 = vpop.permute.xlu0 %3048
        %3050 = vrot.lane.b32.xlu0 %v1078, 95
        %v3051 = vpop.permute.xlu0 %3050
        %3052 = vrot.lane.b32.xlu0 %v1079, 95
        %v3053 = vpop.permute.xlu0 %3052
        %3054 = vrot.lane.b32.xlu0 %v1140, 95
        %v3055 = vpop.permute.xlu0 %3054
        %3056 = vrot.lane.b32.xlu0 %v1080, 95
        %v3057 = vpop.permute.xlu0 %3056
        %3058 = vrot.lane.b32.xlu0 %v1081, 95
        %v3059 = vpop.permute.xlu0 %3058
        %3060 = vrot.lane.b32.xlu0 %v1141, 95
        %v3061 = vpop.permute.xlu0 %3060
        %3062 = vrot.lane.b32.xlu0 %v1082, 95
        %v3063 = vpop.permute.xlu0 %3062
        %3064 = vrot.lane.b32.xlu0 %v1083, 95
        %v3065 = vpop.permute.xlu0 %3064
        %3066 = vrot.lane.b32.xlu0 %v1142, 95
        %v3067 = vpop.permute.xlu0 %3066
        %3068 = vrot.lane.b32.xlu0 %v1084, 95
        %v3069 = vpop.permute.xlu0 %3068
        %3070 = vrot.lane.b32.xlu0 %v1085, 95
        %v3071 = vpop.permute.xlu0 %3070
        %3072 = vrot.lane.b32.xlu0 %v1143, 95
        %v3073 = vpop.permute.xlu0 %3072
        %3074 = vrot.lane.b32.xlu0 %v1086, 95
        %v3075 = vpop.permute.xlu0 %3074
        %3076 = vrot.lane.b32.xlu0 %v1087, 95
        %v3077 = vpop.permute.xlu0 %3076
        %3078 = vrot.lane.b32.xlu0 %v1144, 95
        %v3079 = vpop.permute.xlu0 %3078
        %3080 = vrot.lane.b32.xlu0 %v1088, 95
        %v3081 = vpop.permute.xlu0 %3080
        %3082 = vrot.lane.b32.xlu0 %v1089, 95
        %v3083 = vpop.permute.xlu0 %3082
        %3084 = vrot.lane.b32.xlu0 %v1145, 95
        %v3085 = vpop.permute.xlu0 %3084
        %vm3086 = vcmask 777216
        %v3087 = vsel %vm3086, %v2991, %v2993
        %v3088 = vsel %vm3086, %v2993, %v2995
        %v3089 = vsel %vm3086, %v2997, %v2999
        %v3090 = vsel %vm3086, %v2999, %v3001
        %v3091 = vsel %vm3086, %v3003, %v3005
        %v3092 = vsel %vm3086, %v3005, %v3007
        %v3093 = vsel %vm3086, %v3009, %v3011
        %v3094 = vsel %vm3086, %v3011, %v3013
        %v3095 = vsel %vm3086, %v3015, %v3017
        %v3096 = vsel %vm3086, %v3017, %v3019
        %v3097 = vsel %vm3086, %v3021, %v3023
        %v3098 = vsel %vm3086, %v3023, %v3025
        %v3099 = vsel %vm3086, %v3027, %v3029
        %v3100 = vsel %vm3086, %v3029, %v3031
        %v3101 = vsel %vm3086, %v3033, %v3035
        %v3102 = vsel %vm3086, %v3035, %v3037
        %v3103 = vsel %vm3086, %v3039, %v3041
        %v3104 = vsel %vm3086, %v3041, %v3043
        %v3105 = vsel %vm3086, %v3045, %v3047
        %v3106 = vsel %vm3086, %v3047, %v3049
        %v3107 = vsel %vm3086, %v3051, %v3053
        %v3108 = vsel %vm3086, %v3053, %v3055
        %v3109 = vsel %vm3086, %v3057, %v3059
        %v3110 = vsel %vm3086, %v3059, %v3061
        %v3111 = vsel %vm3086, %v3063, %v3065
        %v3112 = vsel %vm3086, %v3065, %v3067
        %v3113 = vsel %vm3086, %v3069, %v3071
        %v3114 = vsel %vm3086, %v3071, %v3073
        %v3115 = vsel %vm3086, %v3075, %v3077
        %v3116 = vsel %vm3086, %v3077, %v3079
        %v3117 = vsel %vm3086, %v3081, %v3083
        %v3118 = vsel %vm3086, %v3083, %v3085
        %3151 = vmatprep.subr.mxu0 %v3088
        %3152 = vmatpush1.msra.mxu0 %v3087
        %3153 = vmatprep.subr.mxu0 %v3090
        %3154 = vmatpush1.msra.mxu0 %v3089
        %3155 = vmatprep.subr.mxu0 %v3092
        %3156 = vmatpush1.msra.mxu0 %v3091
        %3157 = vmatprep.subr.mxu0 %v3094
        %3158 = vmatpush1.msra.mxu0 %v3093
        %3159 = vmatprep.subr.mxu0 %v3096
        %3160 = vmatpush1.msra.mxu0 %v3095
        %3161 = vmatprep.subr.mxu0 %v3098
        %3162 = vmatpush1.msra.mxu0 %v3097
        %3163 = vmatprep.subr.mxu0 %v3100
        %3164 = vmatpush1.msra.mxu0 %v3099
        %3165 = vmatprep.subr.mxu0 %v3102
        %3166 = vmatpush1.msra.mxu0 %v3101
        %3167 = vmatprep.subr.mxu0 %v3104
        %3168 = vmatpush1.msra.mxu0 %v3103
        %3169 = vmatprep.subr.mxu0 %v3106
        %3170 = vmatpush1.msra.mxu0 %v3105
        %3171 = vmatprep.subr.mxu0 %v3108
        %3172 = vmatpush1.msra.mxu0 %v3107
        %3173 = vmatprep.subr.mxu0 %v3110
        %3174 = vmatpush1.msra.mxu0 %v3109
        %3175 = vmatprep.subr.mxu0 %v3112
        %3176 = vmatpush1.msra.mxu0 %v3111
        %3177 = vmatprep.subr.mxu0 %v3114
        %3178 = vmatpush1.msra.mxu0 %v3113
        %3179 = vmatprep.subr.mxu0 %v3116
        %3180 = vmatpush1.msra.mxu0 %v3115
        %3181 = vmatprep.subr.mxu0 %v3118
        %3182 = vmatpush1.msra.mxu0 %v3117
        %3183 = vmatprep.subr.mxu0 0.0
        %3184 = vmatpush1.msra.mxu0 0.0
        %3185 = vmatprep.subr.mxu0 0.0
        %3186 = vmatpush1.msra.mxu0 0.0
        %3187 = vmatprep.subr.mxu0 0.0
        %3188 = vmatpush1.msra.mxu0 0.0
        %3189 = vmatprep.subr.mxu0 0.0
        %3190 = vmatpush1.msra.mxu0 0.0
        %3191 = vmatprep.subr.mxu0 0.0
        %3192 = vmatpush1.msra.mxu0 0.0
        %3193 = vmatprep.subr.mxu0 0.0
        %3194 = vmatpush1.msra.mxu0 0.0
        %3195 = vmatprep.subr.mxu0 0.0
        %3196 = vmatpush1.msra.mxu0 0.0
        %3197 = vmatprep.subr.mxu0 0.0
        %3198 = vmatpush1.msra.mxu0 0.0
        %3199 = vmatprep.subr.mxu0 0.0
        %3200 = vmatpush1.msra.mxu0 0.0
        %3201 = vmatprep.subr.mxu0 0.0
        %3202 = vmatpush1.msra.mxu0 0.0
        %3203 = vmatprep.subr.mxu0 0.0
        %3204 = vmatpush1.msra.mxu0 0.0
        %3205 = vmatprep.subr.mxu0 0.0
        %3206 = vmatpush1.msra.mxu0 0.0
        %3207 = vmatprep.subr.mxu0 0.0
        %3208 = vmatpush1.msra.mxu0 0.0
        %3209 = vmatprep.subr.mxu0 0.0
        %3210 = vmatpush1.msra.mxu0 0.0
        %3211 = vmatprep.subr.mxu0 0.0
        %3212 = vmatpush1.msra.mxu0 0.0
        %3213 = vmatprep.subr.mxu0 0.0
        %3214 = vmatpush1.msra.mxu0 0.0
        %3215 = vmatprep.mubr.f32.mxu0 0.0
        %3216 = vmatmul.mubr.f32.gmra.mrb[0].mxu0 %v2986
        %v3217 = vpop.f32.mrb[0].mxu0
        %v3218 = vadd.f32 0.0, %v3217
        %v3219 = vpop.f32.mrb[0].mxu0
        %v3220 = vadd.f32 0.0, %v3219
        %3221 = vmatprep.mubr.f32.mxu0 0.0
        %3222 = vmatmul.mubr.f32.gmra.mrb[0].mxu0 %v2987
        %v3223 = vpop.f32.mrb[0].mxu0
        %v3224 = vadd.f32 0.0, %v3223
        %v3225 = vpop.f32.mrb[0].mxu0
        %v3226 = vadd.f32 0.0, %v3225
        %3227 = vmatprep.mubr.f32.mxu0 0.0
        %3228 = vmatmul.mubr.f32.gmra.mrb[0].mxu0 %v2988
        %v3229 = vpop.f32.mrb[0].mxu0
        %v3230 = vadd.f32 0.0, %v3229
        %v3231 = vpop.f32.mrb[0].mxu0
        %v3232 = vadd.f32 0.0, %v3231
        %3233 = vmatprep.mubr.f32.mxu0 0.0
        %3234 = vmatmul.mubr.f32.gmra.mrb[0].mxu0 %v2989
        %v3235 = vpop.f32.mrb[0].mxu0
        %v3236 = vadd.f32 0.0, %v3235
        %v3237 = vpop.f32.mrb[0].mxu0
        %v3238 = vadd.f32 0.0, %v3237
        %3239 = vdwg.mxu0
        %v3240 = vadd.f32 %v2977, %v3218
        %v3241 = vadd.f32 %v2978, %v3220
        %v3242 = vadd.f32 %v2979, %v3224
        %v3243 = vadd.f32 %v2980, %v3226
        %v3244 = vadd.f32 %v2981, %v3230
        %v3245 = vadd.f32 %v2982, %v3232
        %v3246 = vadd.f32 %v2983, %v3236
        %v3247 = vadd.f32 %v2984, %v3238
        %3248 = vrot.lane.b32.xlu0 %v1058, 94
        %v3249 = vpop.permute.xlu0 %3248
        %3250 = vrot.lane.b32.xlu0 %v1059, 94
        %v3251 = vpop.permute.xlu0 %3250
        %3252 = vrot.lane.b32.xlu0 %v1130, 94
        %v3253 = vpop.permute.xlu0 %3252
        %3254 = vrot.lane.b32.xlu0 %v1060, 94
        %v3255 = vpop.permute.xlu0 %3254
        %3256 = vrot.lane.b32.xlu0 %v1061, 94
        %v3257 = vpop.permute.xlu0 %3256
        %3258 = vrot.lane.b32.xlu0 %v1131, 94
        %v3259 = vpop.permute.xlu0 %3258
        %3260 = vrot.lane.b32.xlu0 %v1062, 94
        %v3261 = vpop.permute.xlu0 %3260
        %3262 = vrot.lane.b32.xlu0 %v1063, 94
        %v3263 = vpop.permute.xlu0 %3262
        %3264 = vrot.lane.b32.xlu0 %v1132, 94
        %v3265 = vpop.permute.xlu0 %3264
        %3266 = vrot.lane.b32.xlu0 %v1064, 94
        %v3267 = vpop.permute.xlu0 %3266
        %3268 = vrot.lane.b32.xlu0 %v1065, 94
        %v3269 = vpop.permute.xlu0 %3268
        %3270 = vrot.lane.b32.xlu0 %v1133, 94
        %v3271 = vpop.permute.xlu0 %3270
        %3272 = vrot.lane.b32.xlu0 %v1066, 94
        %v3273 = vpop.permute.xlu0 %3272
        %3274 = vrot.lane.b32.xlu0 %v1067, 94
        %v3275 = vpop.permute.xlu0 %3274
        %3276 = vrot.lane.b32.xlu0 %v1134, 94
        %v3277 = vpop.permute.xlu0 %3276
        %3278 = vrot.lane.b32.xlu0 %v1068, 94
        %v3279 = vpop.permute.xlu0 %3278
        %3280 = vrot.lane.b32.xlu0 %v1069, 94
        %v3281 = vpop.permute.xlu0 %3280
        %3282 = vrot.lane.b32.xlu0 %v1135, 94
        %v3283 = vpop.permute.xlu0 %3282
        %3284 = vrot.lane.b32.xlu0 %v1070, 94
        %v3285 = vpop.permute.xlu0 %3284
        %3286 = vrot.lane.b32.xlu0 %v1071, 94
        %v3287 = vpop.permute.xlu0 %3286
        %3288 = vrot.lane.b32.xlu0 %v1136, 94
        %v3289 = vpop.permute.xlu0 %3288
        %3290 = vrot.lane.b32.xlu0 %v1072, 94
        %v3291 = vpop.permute.xlu0 %3290
        %3292 = vrot.lane.b32.xlu0 %v1073, 94
        %v3293 = vpop.permute.xlu0 %3292
        %3294 = vrot.lane.b32.xlu0 %v1137, 94
        %v3295 = vpop.permute.xlu0 %3294
        %3296 = vrot.lane.b32.xlu0 %v1074, 94
        %v3297 = vpop.permute.xlu0 %3296
        %3298 = vrot.lane.b32.xlu0 %v1075, 94
        %v3299 = vpop.permute.xlu0 %3298
        %3300 = vrot.lane.b32.xlu0 %v1138, 94
        %v3301 = vpop.permute.xlu0 %3300
        %3302 = vrot.lane.b32.xlu0 %v1076, 94
        %v3303 = vpop.permute.xlu0 %3302
        %3304 = vrot.lane.b32.xlu0 %v1077, 94
        %v3305 = vpop.permute.xlu0 %3304
        %3306 = vrot.lane.b32.xlu0 %v1139, 94
        %v3307 = vpop.permute.xlu0 %3306
        %3308 = vrot.lane.b32.xlu0 %v1078, 94
        %v3309 = vpop.permute.xlu0 %3308
        %3310 = vrot.lane.b32.xlu0 %v1079, 94
        %v3311 = vpop.permute.xlu0 %3310
        %3312 = vrot.lane.b32.xlu0 %v1140, 94
        %v3313 = vpop.permute.xlu0 %3312
        %3314 = vrot.lane.b32.xlu0 %v1080, 94
        %v3315 = vpop.permute.xlu0 %3314
        %3316 = vrot.lane.b32.xlu0 %v1081, 94
        %v3317 = vpop.permute.xlu0 %3316
        %3318 = vrot.lane.b32.xlu0 %v1141, 94
        %v3319 = vpop.permute.xlu0 %3318
        %3320 = vrot.lane.b32.xlu0 %v1082, 94
        %v3321 = vpop.permute.xlu0 %3320
        %3322 = vrot.lane.b32.xlu0 %v1083, 94
        %v3323 = vpop.permute.xlu0 %3322
        %3324 = vrot.lane.b32.xlu0 %v1142, 94
        %v3325 = vpop.permute.xlu0 %3324
        %3326 = vrot.lane.b32.xlu0 %v1084, 94
        %v3327 = vpop.permute.xlu0 %3326
        %3328 = vrot.lane.b32.xlu0 %v1085, 94
        %v3329 = vpop.permute.xlu0 %3328
        %3330 = vrot.lane.b32.xlu0 %v1143, 94
        %v3331 = vpop.permute.xlu0 %3330
        %3332 = vrot.lane.b32.xlu0 %v1086, 94
        %v3333 = vpop.permute.xlu0 %3332
        %3334 = vrot.lane.b32.xlu0 %v1087, 94
        %v3335 = vpop.permute.xlu0 %3334
        %3336 = vrot.lane.b32.xlu0 %v1144, 94
        %v3337 = vpop.permute.xlu0 %3336
        %3338 = vrot.lane.b32.xlu0 %v1088, 94
        %v3339 = vpop.permute.xlu0 %3338
        %3340 = vrot.lane.b32.xlu0 %v1089, 94
        %v3341 = vpop.permute.xlu0 %3340
        %3342 = vrot.lane.b32.xlu0 %v1145, 94
        %v3343 = vpop.permute.xlu0 %3342
        %vm3344 = vcmask 769024
        %v3345 = vsel %vm3344, %v3249, %v3251
        %v3346 = vsel %vm3344, %v3251, %v3253
        %v3347 = vsel %vm3344, %v3255, %v3257
        %v3348 = vsel %vm3344, %v3257, %v3259
        %v3349 = vsel %vm3344, %v3261, %v3263
        %v3350 = vsel %vm3344, %v3263, %v3265
        %v3351 = vsel %vm3344, %v3267, %v3269
        %v3352 = vsel %vm3344, %v3269, %v3271
        %v3353 = vsel %vm3344, %v3273, %v3275
        %v3354 = vsel %vm3344, %v3275, %v3277
        %v3355 = vsel %vm3344, %v3279, %v3281
        %v3356 = vsel %vm3344, %v3281, %v3283
        %v3357 = vsel %vm3344, %v3285, %v3287
        %v3358 = vsel %vm3344, %v3287, %v3289
        %v3359 = vsel %vm3344, %v3291, %v3293
        %v3360 = vsel %vm3344, %v3293, %v3295
        %v3361 = vsel %vm3344, %v3297, %v3299
        %v3362 = vsel %vm3344, %v3299, %v3301
        %v3363 = vsel %vm3344, %v3303, %v3305
        %v3364 = vsel %vm3344, %v3305, %v3307
        %v3365 = vsel %vm3344, %v3309, %v3311
        %v3366 = vsel %vm3344, %v3311, %v3313
        %v3367 = vsel %vm3344, %v3315, %v3317
        %v3368 = vsel %vm3344, %v3317, %v3319
        %v3369 = vsel %vm3344, %v3321, %v3323
        %v3370 = vsel %vm3344, %v3323, %v3325
        %v3371 = vsel %vm3344, %v3327, %v3329
        %v3372 = vsel %vm3344, %v3329, %v3331
        %v3373 = vsel %vm3344, %v3333, %v3335
        %v3374 = vsel %vm3344, %v3335, %v3337
        %v3375 = vsel %vm3344, %v3339, %v3341
        %v3376 = vsel %vm3344, %v3341, %v3343
        %v3409 = vsel %vm1540, %v3345, 0.0
        %v3410 = vsel %vm1541, %v3346, 0.0
        %v3411 = vsel %vm1540, %v3347, 0.0
        %v3412 = vsel %vm1541, %v3348, 0.0
        %v3413 = vsel %vm1540, %v3349, 0.0
        %v3414 = vsel %vm1541, %v3350, 0.0
        %v3415 = vsel %vm1540, %v3351, 0.0
        %v3416 = vsel %vm1541, %v3352, 0.0
        %v3417 = vsel %vm1540, %v3353, 0.0
        %v3418 = vsel %vm1541, %v3354, 0.0
        %v3419 = vsel %vm1540, %v3355, 0.0
        %v3420 = vsel %vm1541, %v3356, 0.0
        %v3421 = vsel %vm1540, %v3357, 0.0
        %v3422 = vsel %vm1541, %v3358, 0.0
        %v3423 = vsel %vm1540, %v3359, 0.0
        %v3424 = vsel %vm1541, %v3360, 0.0
        %v3425 = vsel %vm1540, %v3361, 0.0
        %v3426 = vsel %vm1541, %v3362, 0.0
        %v3427 = vsel %vm1540, %v3363, 0.0
        %v3428 = vsel %vm1541, %v3364, 0.0
        %v3429 = vsel %vm1540, %v3365, 0.0
        %v3430 = vsel %vm1541, %v3366, 0.0
        %v3431 = vsel %vm1540, %v3367, 0.0
        %v3432 = vsel %vm1541, %v3368, 0.0
        %v3433 = vsel %vm1540, %v3369, 0.0
        %v3434 = vsel %vm1541, %v3370, 0.0
        %v3435 = vsel %vm1540, %v3371, 0.0
        %v3436 = vsel %vm1541, %v3372, 0.0
        %v3437 = vsel %vm1540, %v3373, 0.0
        %v3438 = vsel %vm1541, %v3374, 0.0
        %v3439 = vsel %vm1540, %v3375, 0.0
        %v3440 = vsel %vm1541, %v3376, 0.0
        %s3441 = scalar_lea.vmem %s5, 256
        %v3442 = vld [vmem:[%s3441] sm:$0xff]
        %v3443 = vld [vmem:[%s3441 + $0x8] sm:$0xff]
        %v3444 = vld [vmem:[%s3441 + $0x10] sm:$0xff]
        %v3445 = vld [vmem:[%s3441 + $0x18] sm:$0xff]
        %3446 = vmatprep.subr.mxu0 %v3410
        %3447 = vmatpush1.msra.mxu0 %v3409
        %3448 = vmatprep.subr.mxu0 %v3412
        %3449 = vmatpush1.msra.mxu0 %v3411
        %3450 = vmatprep.subr.mxu0 %v3414
        %3451 = vmatpush1.msra.mxu0 %v3413
        %3452 = vmatprep.subr.mxu0 %v3416
        %3453 = vmatpush1.msra.mxu0 %v3415
        %3454 = vmatprep.subr.mxu0 %v3418
        %3455 = vmatpush1.msra.mxu0 %v3417
        %3456 = vmatprep.subr.mxu0 %v3420
        %3457 = vmatpush1.msra.mxu0 %v3419
        %3458 = vmatprep.subr.mxu0 %v3422
        %3459 = vmatpush1.msra.mxu0 %v3421
        %3460 = vmatprep.subr.mxu0 %v3424
        %3461 = vmatpush1.msra.mxu0 %v3423
        %3462 = vmatprep.subr.mxu0 %v3426
        %3463 = vmatpush1.msra.mxu0 %v3425
        %3464 = vmatprep.subr.mxu0 %v3428
        %3465 = vmatpush1.msra.mxu0 %v3427
        %3466 = vmatprep.subr.mxu0 %v3430
        %3467 = vmatpush1.msra.mxu0 %v3429
        %3468 = vmatprep.subr.mxu0 %v3432
        %3469 = vmatpush1.msra.mxu0 %v3431
        %3470 = vmatprep.subr.mxu0 %v3434
        %3471 = vmatpush1.msra.mxu0 %v3433
        %3472 = vmatprep.subr.mxu0 %v3436
        %3473 = vmatpush1.msra.mxu0 %v3435
        %3474 = vmatprep.subr.mxu0 %v3438
        %3475 = vmatpush1.msra.mxu0 %v3437
        %3476 = vmatprep.subr.mxu0 %v3440
        %3477 = vmatpush1.msra.mxu0 %v3439
        %3478 = vmatprep.subr.mxu0 0.0
        %3479 = vmatpush1.msra.mxu0 0.0
        %3480 = vmatprep.subr.mxu0 0.0
        %3481 = vmatpush1.msra.mxu0 0.0
        %3482 = vmatprep.subr.mxu0 0.0
        %3483 = vmatpush1.msra.mxu0 0.0
        %3484 = vmatprep.subr.mxu0 0.0
        %3485 = vmatpush1.msra.mxu0 0.0
        %3486 = vmatprep.subr.mxu0 0.0
        %3487 = vmatpush1.msra.mxu0 0.0
        %3488 = vmatprep.subr.mxu0 0.0
        %3489 = vmatpush1.msra.mxu0 0.0
        %3490 = vmatprep.subr.mxu0 0.0
        %3491 = vmatpush1.msra.mxu0 0.0
        %3492 = vmatprep.subr.mxu0 0.0
        %3493 = vmatpush1.msra.mxu0 0.0
        %3494 = vmatprep.subr.mxu0 0.0
        %3495 = vmatpush1.msra.mxu0 0.0
        %3496 = vmatprep.subr.mxu0 0.0
        %3497 = vmatpush1.msra.mxu0 0.0
        %3498 = vmatprep.subr.mxu0 0.0
        %3499 = vmatpush1.msra.mxu0 0.0
        %3500 = vmatprep.subr.mxu0 0.0
        %3501 = vmatpush1.msra.mxu0 0.0
        %3502 = vmatprep.subr.mxu0 0.0
        %3503 = vmatpush1.msra.mxu0 0.0
        %3504 = vmatprep.subr.mxu0 0.0
        %3505 = vmatpush1.msra.mxu0 0.0
        %3506 = vmatprep.subr.mxu0 0.0
        %3507 = vmatpush1.msra.mxu0 0.0
        %3508 = vmatprep.subr.mxu0 0.0
        %3509 = vmatpush1.msra.mxu0 0.0
        %3510 = vmatprep.mubr.f32.mxu0 0.0
        %3511 = vmatmul.mubr.f32.gmra.mrb[0].mxu0 %v3442
        %v3512 = vpop.f32.mrb[0].mxu0
        %v3513 = vadd.f32 0.0, %v3512
        %v3514 = vpop.f32.mrb[0].mxu0
        %v3515 = vadd.f32 0.0, %v3514
        %3516 = vmatprep.mubr.f32.mxu0 0.0
        %3517 = vmatmul.mubr.f32.gmra.mrb[0].mxu0 %v3443
        %v3518 = vpop.f32.mrb[0].mxu0
        %v3519 = vadd.f32 0.0, %v3518
        %v3520 = vpop.f32.mrb[0].mxu0
        %v3521 = vadd.f32 0.0, %v3520
        %3522 = vmatprep.mubr.f32.mxu0 0.0
        %3523 = vmatmul.mubr.f32.gmra.mrb[0].mxu0 %v3444
        %v3524 = vpop.f32.mrb[0].mxu0
        %v3525 = vadd.f32 0.0, %v3524
        %v3526 = vpop.f32.mrb[0].mxu0
        %v3527 = vadd.f32 0.0, %v3526
        %3528 = vmatprep.mubr.f32.mxu0 0.0
        %3529 = vmatmul.mubr.f32.gmra.mrb[0].mxu0 %v3445
        %v3530 = vpop.f32.mrb[0].mxu0
        %v3531 = vadd.f32 0.0, %v3530
        %v3532 = vpop.f32.mrb[0].mxu0
        %v3533 = vadd.f32 0.0, %v3532
        %3534 = vdwg.mxu0
        %v3535 = vadd.f32 %v3240, %v3513
        %v3536 = vadd.f32 %v3241, %v3515
        %v3537 = vadd.f32 %v3242, %v3519
        %v3538 = vadd.f32 %v3243, %v3521
        %v3539 = vadd.f32 %v3244, %v3525
        %v3540 = vadd.f32 %v3245, %v3527
        %v3541 = vadd.f32 %v3246, %v3531
        %v3542 = vadd.f32 %v3247, %v3533
        %3543 = vst [vmem:[%s269] sm:$0xff] %v3535
        %3544 = vst [vmem:[%s269 + $0x8] sm:$0xff] %v3536
        %3545 = vst [vmem:[%s269 + $0x10] sm:$0xff] %v3537
        %3546 = vst [vmem:[%s269 + $0x18] sm:$0xff] %v3538
        %3547 = vst [vmem:[%s269 + $0x20] sm:$0xff] %v3539
        %3548 = vst [vmem:[%s269 + $0x28] sm:$0xff] %v3540
        %3549 = vst [vmem:[%s269 + $0x30] sm:$0xff] %v3541
        %3550 = vst [vmem:[%s269 + $0x38] sm:$0xff] %v3542
        %s3551 = sand.u32 %s162, 1
        %s3552 = scalar_lea.sflag [#allocation5], %s3551
        %s3553 = sand.u32 %s162, 1
        %s3554 = smul.addr %s3553, 64
        %s3555 = scalar_lea.vmem [#allocation6], %s3554
        // Predicated region
        $region49: #{tpu_custom_call.1} parent=43 // pred_check
          %p3556 = pneg %p172
        $region50: #{tpu_custom_call.1} parent=43 // pred_check_branch
          %3558 = sbr.rel (%p3556) target = $region52
        $region51: #{tpu_custom_call.1} parent=43 // pred_region
          %s3560 = ssub.s32 1024, 1024
          %3561 = vsyncadd %s3552, %s3560
          %s3562 = smul.addr %s23, 8
          %s3563 = smul.addr %s3562, 128
          %s3564 = scalar_lea.hbm %s6, %s3563
          %s3565 = sshll.u32 %s3555, 4
          %s3566 = int_to_ptr.vmem [resolvable:$true] %s3565
          %3571 = dma.vmem_to_hbm [thread:$0]  %s3566, 1024, %s3564, %s3552, 256, 256, 16
        $region52: #{tpu_custom_call.1} parent=43 // pred_fallthru
          _
      $region44: #{tpu_custom_call.1} parent=5 // pred_fallthru
        _
      %p3572 = scmp.le.s32.totalorder 2, %s18
      // Predicated region
      $region53: #{tpu_custom_call.1} parent=5 // pred_check
        %p3573 = pneg %p3572
      $region54: #{tpu_custom_call.1} parent=5 // pred_check_branch
        %3575 = sbr.rel (%p3573) target = $region56
      $region55: #{tpu_custom_call.1} parent=5 // pred_region
        %s3576 = ssub.s32 %s18, 2
        // Predicated region
        $region57: #{tpu_custom_call.1} parent=55 // pred_check
          %p3577 = pneg %p178
        $region58: #{tpu_custom_call.1} parent=55 // pred_check_branch
          %3579 = sbr.rel (%p3577) target = $region60
        $region59: #{tpu_custom_call.1} parent=55 // pred_region
          %s3580 = sand.u32 %s163, 1
          %s3581 = scalar_lea.sflag [#allocation5], %s3580
          %s3582 = sand.u32 %s163, 1
          %s3583 = smul.addr %s3582, 64
          %s3584 = scalar_lea.vmem [#allocation6], %s3583
          %3585 = dma.done %s3581, 1024
        $region60: #{tpu_custom_call.1} parent=55 // pred_fallthru
          _
      $region56: #{tpu_custom_call.1} parent=5 // pred_fallthru
        _
    $region6: #{tpu_custom_call.1} parent=1 // loop_footer
      %s22 = sadd.s32 1, %s18
    $region7: #{tpu_custom_call.1} parent=1 // loop_footer_branch
      %17 = sbr.rel target = $region3
    $region8: #{tpu_custom_call.1} parent=1 // loop_exit
      _
    %3586 = vsyncpa [#allocation4], 1
    %s3587 = scalar_lea.sflag [#allocation4], 1
    %3588 = vsyncpa %s3587, 1
    %3589 = vsyncpa [#allocation5], 1
    %s3590 = scalar_lea.sflag [#allocation5], 1
    %3591 = vsyncpa %s3590, 1

</llo_original>
